<compile_context>
chip_gen: v7x
topology: tpu7x:2x2x1
jax: 0.10.0
libtpu: 0.0.40
codegen_flags: <defaults>
</compile_context>

<pallas_src>
import jax
import jax.numpy as jnp
from jax import lax
from jax.experimental import pallas as pl
from jax.experimental.pallas import tpu as pltpu


NUM_CLASSES = 5
FEAT_CH = 32
STRIDES = (2, 4)            # FPN-level strides for the two synthetic feature levels
LANE = 128
TILE_ROWS = 512             # fixed row tile (512-1024 per perf review)

# (name, width, activation) for each head output conv
FCOS2D_PARTS = (("cls", NUM_CLASSES, "none"),
                ("box2d", 4, "relu"),
                ("ctrness", 1, "none"))
FCOS3D_PARTS = (("quat", 4, "none"), ("ctr", 2, "none"), ("depth", 1, "exp"),
                ("size", 3, "none"), ("conf", 1, "none"), ("dense_depth", 1, "exp"))
BRANCH_WIDTH = sum(w for _, w, _ in FCOS2D_PARTS + FCOS3D_PARTS)   # 22
COUT_PAD = LANE                                                    # 128 >= 2*22


# ----------------------------------------------------------------------------
# helpers
# ----------------------------------------------------------------------------
def _round_up(x, m):
    return ((x + m - 1) // m) * m


def _row_tile(n):
    """Fixed tile (<= TILE_ROWS, multiple of 8); pl.cdiv grid handles remainders."""
    return min(TILE_ROWS, _round_up(n, 8))


def _compiler_params():
    return pltpu.CompilerParams(
        dimension_semantics=("parallel",),
        vmem_limit_bytes=32 * 1024 * 1024)


def _split_levels(x2d, shapes, cout):
    outs, off = [], 0
    for (b, h, w) in shapes:
        n = b * h * w
        outs.append(x2d[off:off + n].reshape(b, h, w, cout))
        off += n
    return outs


def _range_mask(col, ranges):
    m = (col >= ranges[0][0]) & (col < ranges[0][1])
    for s, e in ranges[1:]:
        m = m | ((col >= s) & (col < e))
    return m


def _act_ranges():
    relu, expo = [], []
    for branch in range(2):               # 0 = cur branch, 1 = pred branch
        col = branch * BRANCH_WIDTH
        for _, width, kind in FCOS2D_PARTS + FCOS3D_PARTS:
            if kind == "relu":
                relu.append((col, col + width))
            elif kind == "exp":
                expo.append((col, col + width))
            col += width
    return tuple(relu), tuple(expo)


# ----------------------------------------------------------------------------
# Pallas kernels
# ----------------------------------------------------------------------------
def _make_linear_kernel(activation):
    """1x1 conv: y = act(x @ W + b). bf16 MXU operands, f32 accumulate."""
    def kernel(x_ref, w_ref, b_ref, o_ref):
        x = x_ref[...].astype(jnp.bfloat16)
        y = jnp.dot(x, w_ref[...], preferred_element_type=jnp.float32)
        y = y + b_ref[...]
        if activation == "relu":
            y = jnp.maximum(y, 0.0)
        o_ref[...] = y.astype(o_ref.dtype)
    return kernel


def conv1x1(x2d, w, b, activation=None):
    """1x1 convolution == per-pixel linear layer: [N, Cin] @ [Cin, Cout] + b."""
    n, cin = x2d.shape
    cout = w.shape[1]
    tm = _row_tile(n)
    return pl.pallas_call(
        _make_linear_kernel(activation),
        out_shape=jax.ShapeDtypeStruct((n, cout), jnp.bfloat16),
        grid=(pl.cdiv(n, tm),),
        in_specs=[
            pl.BlockSpec((tm, cin), lambda i: (i, 0)),
            pl.BlockSpec((cin, cout), lambda i: (0, 0)),
            pl.BlockSpec((1, cout), lambda i: (0, 0)),
        ],
        out_specs=pl.BlockSpec((tm, cout), lambda i: (i, 0)),
        compiler_params=_compiler_params(),
    )(x2d.astype(jnp.bfloat16), w.astype(jnp.bfloat16),
      b.reshape(1, cout).astype(jnp.float32))


def _make_video_head_kernel(relu_ranges, exp_ranges):
    """Mega-fused kernel: temporal head + temporal gate + both branches' towers
    and output convs. One bf16 lane-dense [tm, 128] output."""
    def kernel(cur_ref, p0_ref, p1_ref,
               wth_ref, bth_ref, wc_ref, wp_ref, bg_ref,
               wt_cur_ref, bt_cur_ref, wt_prev_ref, bt_prev_ref,
               wh_cur_ref, wh_prev_ref, bh_ref, o_ref):
        cur = cur_ref[...]                                    # bf16 [tm, C]
        cur_f = cur.astype(jnp.float32)

        # temporal head: prev = relu(mean_t(prev) @ Wth + bth)
        avg = (0.5 * (p0_ref[...].astype(jnp.float32)
                      + p1_ref[...].astype(jnp.float32))).astype(jnp.bfloat16)
        prev_f = jnp.dot(avg, wth_ref[...], preferred_element_type=jnp.float32)
        prev_f = jnp.maximum(prev_f + bth_ref[...], 0.0)
        prev = prev_f.astype(jnp.bfloat16)

        # temporal gate: two small matmuls (no in-kernel concat)
        g = jnp.dot(cur, wc_ref[...], preferred_element_type=jnp.float32)
        g = g + jnp.dot(prev, wp_ref[...], preferred_element_type=jnp.float32)
        g = jax.nn.sigmoid(g + bg_ref[...])
        blend = (g * cur_f + (1.0 - g) * prev_f).astype(jnp.bfloat16)

        # towers: 2d|3d stacked along Cout ([C] -> [2C]) per branch
        t_cur = jnp.dot(blend, wt_cur_ref[...], preferred_element_type=jnp.float32)
        t_cur = jnp.maximum(t_cur + bt_cur_ref[...], 0.0).astype(jnp.bfloat16)
        t_prev = jnp.dot(prev, wt_prev_ref[...], preferred_element_type=jnp.float32)
        t_prev = jnp.maximum(t_prev + bt_prev_ref[...], 0.0).astype(jnp.bfloat16)

        # all head output convs: block-structured [2C, 128] weights, disjoint cols
        y = jnp.dot(t_cur, wh_cur_ref[...], preferred_element_type=jnp.float32)
        y = y + jnp.dot(t_prev, wh_prev_ref[...], preferred_element_type=jnp.float32)
        y = y + bh_ref[...]

        # per-column activations via one (1, 128) mask per kind
        col = lax.broadcasted_iota(jnp.int32, (1, COUT_PAD), 1)
        y = jnp.where(_range_mask(col, relu_ranges), jnp.maximum(y, 0.0), y)
        y = jnp.where(_range_mask(col, exp_ranges), jnp.exp(y), y)

        o_ref[...] = y.astype(o_ref.dtype)
    return kernel


# ----------------------------------------------------------------------------
# weight assembly for the fused head kernel
# ----------------------------------------------------------------------------
def _branch_weights(hp2d, hp3d):
    """Per-branch: tower block [C, 2C] and block-diag head weight [2C, 22]."""
    wt = jnp.concatenate([hp2d["tower"][0], hp3d["tower"][0]], axis=1)       # [C, 2C]
    bt = jnp.concatenate([hp2d["tower"][1], hp3d["tower"][1]], axis=0)       # [2C]
    w2 = jnp.concatenate([hp2d[n][0] for n, _, _ in FCOS2D_PARTS], axis=1)   # [C, 10]
    b2 = jnp.concatenate([hp2d[n][1] for n, _, _ in FCOS2D_PARTS], axis=0)
    w3 = jnp.concatenate([hp3d[n][0] for n, _, _ in FCOS3D_PARTS], axis=1)   # [C, 12]
    b3 = jnp.concatenate([hp3d[n][1] for n, _, _ in FCOS3D_PARTS], axis=0)
    z2 = jnp.zeros((FEAT_CH, w3.shape[1]), w2.dtype)
    z3 = jnp.zeros((FEAT_CH, w2.shape[1]), w3.dtype)
    wh = jnp.concatenate([jnp.concatenate([w2, z2], axis=1),
                          jnp.concatenate([z3, w3], axis=1)], axis=0)        # [2C, 22]
    bh = jnp.concatenate([b2, b3], axis=0)                                   # [22]
    return wt, bt, wh, bh


def fused_video_heads(params, cur2d, p0_2d, p1_2d):
    """One pallas_call: reads cur/prev feature slabs once, writes one bf16
    [N, 128] slab holding every head output of both branches."""
    n, c = cur2d.shape
    wth, bth = params["temporal_head"]
    tw = params["temporal_weight"]
    wt_cur, bt_cur, wh_cur, bh_cur = _branch_weights(params["fcos2d"],
                                                     params["fcos3d"])
    wt_prev, bt_prev, wh_prev, bh_prev = _branch_weights(params["fcos2d_pred"],
                                                         params["fcos3d_pred"])
    # place the two branches in disjoint column ranges of the 128-wide output
    wh_cur_full = jnp.pad(wh_cur, ((0, 0), (0, COUT_PAD - BRANCH_WIDTH)))
    wh_prev_full = jnp.pad(wh_prev,
                           ((0, 0), (BRANCH_WIDTH, COUT_PAD - 2 * BRANCH_WIDTH)))
    bh_full = jnp.pad(jnp.concatenate([bh_cur, bh_prev], axis=0),
                      (0, COUT_PAD - 2 * BRANCH_WIDTH))

    relu_ranges, exp_ranges = _act_ranges()
    tm = _row_tile(n)
    bf = lambda a: a.astype(jnp.bfloat16)
    frow = lambda a: a.reshape(1, -1).astype(jnp.float32)

    row_spec = pl.BlockSpec((tm, c), lambda i: (i, 0))
    full = lambda shape: pl.BlockSpec(shape, lambda i: (0, 0))

    return pl.pallas_call(
        _make_video_head_kernel(relu_ranges, exp_ranges),
        out_shape=jax.ShapeDtypeStruct((n, COUT_PAD), jnp.bfloat16),
        grid=(pl.cdiv(n, tm),),
        in_specs=[
            row_spec, row_spec, row_spec,                 # cur, prev_t1, prev_t2
            full((c, c)), full((1, c)),                   # temporal head W, b
            full((c, c)), full((c, c)), full((1, c)),     # gate Wc, Wp, b
            full((c, 2 * c)), full((1, 2 * c)),           # cur-branch tower
            full((c, 2 * c)), full((1, 2 * c)),           # pred-branch tower
            full((2 * c, COUT_PAD)), full((2 * c, COUT_PAD)),  # head weights
            full((1, COUT_PAD)),                          # head bias
        ],
        out_specs=pl.BlockSpec((tm, COUT_PAD), lambda i: (i, 0)),
        compiler_params=_compiler_params(),
    )(bf(cur2d), bf(p0_2d), bf(p1_2d),
      bf(wth), frow(bth),
      bf(tw["wc"]), bf(tw["wp"]), frow(tw["b"]),
      bf(wt_cur), frow(bt_cur), bf(wt_prev), frow(bt_prev),
      bf(wh_cur_full), bf(wh_prev_full), frow(bh_full))


# ----------------------------------------------------------------------------
# parameters, backbone, locations, forward
# ----------------------------------------------------------------------------
def init_params(key):
    def dense(key, cin, cout):
        kw, kb = jax.random.split(key)
        return (0.1 * jax.random.normal(kw, (cin, cout), jnp.float32),
                0.01 * jax.random.normal(kb, (cout,), jnp.float32))

    keys = iter(jax.random.split(key, 64))
    p = {
        "pixel_mean": jnp.array([0.485, 0.456, 0.406], jnp.float32) * 255.0,
        "pixel_std": jnp.array([0.229, 0.224, 0.225], jnp.float32) * 255.0,
        "backbone_stem": dense(next(keys), 3, FEAT_CH),
        "backbone_lateral": [dense(next(keys), FEAT_CH, FEAT_CH) for _ in STRIDES],
        "temporal_head": dense(next(keys), FEAT_CH, FEAT_CH),
        "temporal_weight": {
            "wc": 0.1 * jax.random.normal(next(keys), (FEAT_CH, FEAT_CH), jnp.float32),
            "wp": 0.1 * jax.random.normal(next(keys), (FEAT_CH, FEAT_CH), jnp.float32),
            "b": jnp.zeros((FEAT_CH,), jnp.float32),
        },
    }
    for name in ("fcos2d", "fcos2d_pred"):
        p[name] = {"tower": dense(next(keys), FEAT_CH, FEAT_CH)}
        for pname, width, _ in FCOS2D_PARTS:
            p[name][pname] = dense(next(keys), FEAT_CH, width)
    for name in ("fcos3d", "fcos3d_pred"):
        p[name] = {"tower": dense(next(keys), FEAT_CH, FEAT_CH)}
        for pname, width, _ in FCOS3D_PARTS:
            p[name][pname] = dense(next(keys), FEAT_CH, width)
    return p


def _avgpool2(x):
    b, h, w, c = x.shape
    return (x.reshape(b, h // 2, 2, w // 2, 2, c)
            .mean(axis=(2, 4), dtype=jnp.float32).astype(x.dtype))


def backbone(params, x_nhwc):
    """Synthetic feature extractor: 1x1-conv stem (pixel normalization folded into
    the weights) + avg-pool FPN levels, all in bf16."""
    # TODO(synk): real backbone (build_feature_extractor) not available; replaced
    # by a 1x1-conv stem + avg-pool pyramid.
    b, h, w, c = x_nhwc.shape
    stem_w, stem_b = params["backbone_stem"]
    mean, std = params["pixel_mean"], params["pixel_std"]
    # (x - mean)/std @ W + b  ==  x @ (W/std) + (b - (mean/std)@W)
    w_fold = stem_w / std[:, None]
    b_fold = stem_b - (mean / std) @ stem_w
    stem = conv1x1(x_nhwc.reshape(b * h * w, c), w_fold, b_fold,
                   activation="relu").reshape(b, h, w, FEAT_CH)

    feats, cur = [], stem
    for lvl in range(len(STRIDES)):
        cur = _avgpool2(cur)
        lw, lb = params["backbone_lateral"][lvl]
        bb, hh, ww, cc = cur.shape
        y = conv1x1(cur.reshape(bb * hh * ww, cc), lw, lb,
                    activation="relu").reshape(bb, hh, ww, FEAT_CH)
        feats.append(y)
        cur = y
    return feats


def compute_locations_per_level(h, w, stride, offset):
    # trivial iota work: plain JAX (a Pallas kernel would be launch-bound).
    ys = jnp.arange(h, dtype=jnp.float32) * stride + offset
    xs = jnp.arange(w, dtype=jnp.float32) * stride + offset
    yy, xx = jnp.meshgrid(ys, xs, indexing="ij")
    return jnp.stack([xx.reshape(-1), yy.reshape(-1)], axis=1)


def compute_locations(features):
    locs = []
    for lvl, f in enumerate(features):
        _, h, w, _ = f.shape
        stride = STRIDES[lvl]
        locs.append(compute_locations_per_level(h, w, stride, stride / 2.0))
    return locs


def forward(params, images, images_t1, images_t2):
    """images*: NCHW float32 [B, 3, H, W] (same as the PyTorch module)."""
    bsz = images.shape[0]
    to_nhwc = lambda x: jnp.transpose(x, (0, 2, 3, 1)).astype(jnp.bfloat16)

    # preprocess_image is folded into the stem conv weights (no separate pass).
    x = jnp.concatenate([to_nhwc(images), to_nhwc(images_t1), to_nhwc(images_t2)],
                        axis=0)  # (3B, H, W, 3) bf16

    feats_all = backbone(params, x)

    features_cur, cur_slabs, p0_slabs, p1_slabs, shapes = [], [], [], [], []
    for f in feats_all:
        _, hl, wl, c = f.shape
        f5 = f.reshape(3, bsz, hl, wl, c)
        features_cur.append(f5[0])
        shapes.append((bsz, hl, wl))
        cur_slabs.append(f5[0].reshape(bsz * hl * wl, c))
        p0_slabs.append(f5[1].reshape(bsz * hl * wl, c))
        p1_slabs.append(f5[2].reshape(bsz * hl * wl, c))
    cur2d = jnp.concatenate(cur_slabs, axis=0)
    p0_2d = jnp.concatenate(p0_slabs, axis=0)
    p1_2d = jnp.concatenate(p1_slabs, axis=0)

    locations = compute_locations(features_cur)

    # temporal head + temporal gate + all head convs of both branches in ONE kernel
    wide = fused_video_heads(params, cur2d, p0_2d, p1_2d)   # [N, 128] bf16

    def branch_outputs(offset):
        outs, col = {}, offset
        for name, width, _ in FCOS2D_PARTS + FCOS3D_PARTS:
            outs[name] = _split_levels(wide[:, col:col + width], shapes, width)
            col += width
        return outs

    cur_o = branch_outputs(0)
    prev_o = branch_outputs(BRANCH_WIDTH)

    # TODO(synk): target preparation, FCOS2D/3D losses, depth loss, pose loss,
    # NMS / BEV-NMS and Instances post-processing have no Pallas equivalent.
    return {
        "locations": locations,
        "logits": cur_o["cls"], "box2d_reg": cur_o["box2d"],
        "centerness": cur_o["ctrness"],
        "box3d_quat": cur_o["quat"], "box3d_ctr": cur_o["ctr"],
        "box3d_depth": cur_o["depth"], "box3d_size": cur_o["size"],
        "box3d_conf": cur_o["conf"], "dense_depth": cur_o["dense_depth"],
        "logits_prev": prev_o["cls"], "box2d_reg_prev": prev_o["box2d"],
        "centerness_prev": prev_o["ctrness"],
        "box3d_quat_prev": prev_o["quat"], "box3d_ctr_prev": prev_o["ctr"],
        "box3d_depth_prev": prev_o["depth"], "box3d_size_prev": prev_o["size"],
        "box3d_conf_prev": prev_o["conf"], "dense_depth_prev": prev_o["dense_depth"],
    }


# ----------------------------------------------------------------------------
if __name__ == "__main__":
    key = jax.random.PRNGKey(0)
    kp, k0, k1, k2 = jax.random.split(key, 4)
    params = init_params(kp)

    B, C, H, W = 2, 3, 16, 16
    images = 255.0 * jax.random.uniform(k0, (B, C, H, W), jnp.float32)
    images_t1 = 255.0 * jax.random.uniform(k1, (B, C, H, W), jnp.float32)
    images_t2 = 255.0 * jax.random.uniform(k2, (B, C, H, W), jnp.float32)

    fwd = jax.jit(forward)
    out = fwd(params, images, images_t1, images_t2)
    jax.block_until_ready(out)

    print("KERNEL_OK")
</pallas_src>

<mosaic_0001>
module attributes {stable_mosaic.version = 11 : i64} {
  func.func @kernel(%arg0: i32, %arg1: memref<512x3xbf16, #tpu.memory_space<vmem>>, %arg2: memref<3x32xbf16, #tpu.memory_space<vmem>>, %arg3: memref<1x32xf32, #tpu.memory_space<vmem>>, %arg4: memref<512x32xbf16, #tpu.memory_space<vmem>>) attributes {dimension_semantics = [#tpu.dimension_semantics<parallel>], iteration_bounds = array<i64: 3>, scalar_prefetch = 0 : i64, scratch_operands = 0 : i64, tpu.core_type = #tpu.core_type<tc>, window_params = [{transform_indices = @transform_0, window_bounds = array<i64: 512, 3>}, {pipeline_mode = #tpu.pipeline_mode<synchronous>, transform_indices = @transform_1, window_bounds = array<i64: 3, 32>}, {pipeline_mode = #tpu.pipeline_mode<synchronous>, transform_indices = @transform_2, window_bounds = array<i64: 1, 32>}, {transform_indices = @transform_3, window_bounds = array<i64: 512, 32>}]} {
    %c0 = arith.constant 0 : index
    %c0_0 = arith.constant 0 : index
    %0 = vector.load %arg1[%c0, %c0_0] : memref<512x3xbf16, #tpu.memory_space<vmem>>, vector<512x3xbf16>
    %c0_1 = arith.constant 0 : index
    %c0_2 = arith.constant 0 : index
    %1 = vector.load %arg2[%c0_1, %c0_2] : memref<3x32xbf16, #tpu.memory_space<vmem>>, vector<3x32xbf16>
    %cst = arith.constant dense<0.000000e+00> : vector<512x32xf32>
    %2 = tpu.matmul %0, %1, %cst {dimension_numbers = #tpu.dot_dimension_numbers<[1], [0], [0], [1], [0, 0, 1, 1], [], []>} : vector<512x3xbf16>, vector<3x32xbf16>, vector<512x32xf32> -> vector<512x32xf32>
    %c0_3 = arith.constant 0 : index
    %c0_4 = arith.constant 0 : index
    %3 = vector.load %arg3[%c0_3, %c0_4] : memref<1x32xf32, #tpu.memory_space<vmem>>, vector<1x32xf32>
    %4 = vector.broadcast %3 : vector<1x32xf32> to vector<512x32xf32>
    %5 = arith.addf %2, %4 : vector<512x32xf32>
    %cst_5 = arith.constant 0.000000e+00 : f32
    %6 = vector.broadcast %cst_5 : f32 to vector<512x32xf32>
    %7 = arith.maximumf %5, %6 : vector<512x32xf32>
    %8 = arith.truncf %7 : vector<512x32xf32> to vector<512x32xbf16>
    %c0_6 = arith.constant 0 : index
    %c0_7 = arith.constant 0 : index
    %9 = vector.load %arg4[%c0_6, %c0_7] : memref<512x32xbf16, #tpu.memory_space<vmem>>, vector<512x32xbf16>
    tpu.vector_store %arg4[%c0_6, %c0_7], %8 {strides = array<i32>} : memref<512x32xbf16, #tpu.memory_space<vmem>>, vector<512x32xbf16>,
    return
  }
  func.func @transform_0(%arg0: i32) -> (i32, i32) {
    %c0_i32 = arith.constant 0 : i32
    %c0_i32_0 = arith.constant 0 : i32
    return %arg0, %c0_i32 : i32, i32
  }
  func.func @transform_1(%arg0: i32) -> (i32, i32) {
    %c0_i32 = arith.constant 0 : i32
    %c0_i32_0 = arith.constant 0 : i32
    %c0_i32_1 = arith.constant 0 : i32
    return %c0_i32, %c0_i32_0 : i32, i32
  }
  func.func @transform_2(%arg0: i32) -> (i32, i32) {
    %c0_i32 = arith.constant 0 : i32
    %c0_i32_0 = arith.constant 0 : i32
    %c0_i32_1 = arith.constant 0 : i32
    return %c0_i32, %c0_i32_0 : i32, i32
  }
  func.func @transform_3(%arg0: i32) -> (i32, i32) {
    %c0_i32 = arith.constant 0 : i32
    %c0_i32_0 = arith.constant 0 : i32
    return %arg0, %c0_i32 : i32, i32
  }
}

module attributes {stable_mosaic.version = 11 : i64} {
  func.func @kernel(%arg0: i32, %arg1: memref<384x32xbf16, #tpu.memory_space<vmem>>, %arg2: memref<32x32xbf16, #tpu.memory_space<vmem>>, %arg3: memref<1x32xf32, #tpu.memory_space<vmem>>, %arg4: memref<384x32xbf16, #tpu.memory_space<vmem>>) attributes {dimension_semantics = [#tpu.dimension_semantics<parallel>], iteration_bounds = array<i64: 1>, scalar_prefetch = 0 : i64, scratch_operands = 0 : i64, tpu.core_type = #tpu.core_type<tc>, window_params = [{transform_indices = @transform_0, window_bounds = array<i64: 384, 32>}, {pipeline_mode = #tpu.pipeline_mode<synchronous>, transform_indices = @transform_1, window_bounds = array<i64: 32, 32>}, {pipeline_mode = #tpu.pipeline_mode<synchronous>, transform_indices = @transform_2, window_bounds = array<i64: 1, 32>}, {transform_indices = @transform_3, window_bounds = array<i64: 384, 32>}]} {
    %c0 = arith.constant 0 : index
    %c0_0 = arith.constant 0 : index
    %0 = vector.load %arg1[%c0, %c0_0] : memref<384x32xbf16, #tpu.memory_space<vmem>>, vector<384x32xbf16>
    %c0_1 = arith.constant 0 : index
    %c0_2 = arith.constant 0 : index
    %1 = vector.load %arg2[%c0_1, %c0_2] : memref<32x32xbf16, #tpu.memory_space<vmem>>, vector<32x32xbf16>
    %cst = arith.constant dense<0.000000e+00> : vector<384x32xf32>
    %2 = tpu.matmul %0, %1, %cst {dimension_numbers = #tpu.dot_dimension_numbers<[1], [0], [0], [1], [0, 0, 1, 1], [], []>} : vector<384x32xbf16>, vector<32x32xbf16>, vector<384x32xf32> -> vector<384x32xf32>
    %c0_3 = arith.constant 0 : index
    %c0_4 = arith.constant 0 : index
    %3 = vector.load %arg3[%c0_3, %c0_4] : memref<1x32xf32, #tpu.memory_space<vmem>>, vector<1x32xf32>
    %4 = vector.broadcast %3 : vector<1x32xf32> to vector<384x32xf32>
    %5 = arith.addf %2, %4 : vector<384x32xf32>
    %cst_5 = arith.constant 0.000000e+00 : f32
    %6 = vector.broadcast %cst_5 : f32 to vector<384x32xf32>
    %7 = arith.maximumf %5, %6 : vector<384x32xf32>
    %8 = arith.truncf %7 : vector<384x32xf32> to vector<384x32xbf16>
    %c0_6 = arith.constant 0 : index
    %c0_7 = arith.constant 0 : index
    %9 = vector.load %arg4[%c0_6, %c0_7] : memref<384x32xbf16, #tpu.memory_space<vmem>>, vector<384x32xbf16>
    tpu.vector_store %arg4[%c0_6, %c0_7], %8 {strides = array<i32>} : memref<384x32xbf16, #tpu.memory_space<vmem>>, vector<384x32xbf16>,
    return
  }
  func.func @transform_0(%arg0: i32) -> (i32, i32) {
    %c0_i32 = arith.constant 0 : i32
    %c0_i32_0 = arith.constant 0 : i32
    return %arg0, %c0_i32 : i32, i32
  }
  func.func @transform_1(%arg0: i32) -> (i32, i32) {
    %c0_i32 = arith.constant 0 : i32
    %c0_i32_0 = arith.constant 0 : i32
    %c0_i32_1 = arith.constant 0 : i32
    return %c0_i32, %c0_i32_0 : i32, i32
  }
  func.func @transform_2(%arg0: i32) -> (i32, i32) {
    %c0_i32 = arith.constant 0 : i32
    %c0_i32_0 = arith.constant 0 : i32
    %c0_i32_1 = arith.constant 0 : i32
    return %c0_i32, %c0_i32_0 : i32, i32
  }
  func.func @transform_3(%arg0: i32) -> (i32, i32) {
    %c0_i32 = arith.constant 0 : i32
    %c0_i32_0 = arith.constant 0 : i32
    return %arg0, %c0_i32 : i32, i32
  }
}

module attributes {stable_mosaic.version = 11 : i64} {
  func.func @kernel(%arg0: i32, %arg1: memref<96x32xbf16, #tpu.memory_space<vmem>>, %arg2: memref<32x32xbf16, #tpu.memory_space<vmem>>, %arg3: memref<1x32xf32, #tpu.memory_space<vmem>>, %arg4: memref<96x32xbf16, #tpu.memory_space<vmem>>) attributes {dimension_semantics = [#tpu.dimension_semantics<parallel>], iteration_bounds = array<i64: 1>, scalar_prefetch = 0 : i64, scratch_operands = 0 : i64, tpu.core_type = #tpu.core_type<tc>, window_params = [{transform_indices = @transform_0, window_bounds = array<i64: 96, 32>}, {pipeline_mode = #tpu.pipeline_mode<synchronous>, transform_indices = @transform_1, window_bounds = array<i64: 32, 32>}, {pipeline_mode = #tpu.pipeline_mode<synchronous>, transform_indices = @transform_2, window_bounds = array<i64: 1, 32>}, {transform_indices = @transform_3, window_bounds = array<i64: 96, 32>}]} {
    %c0 = arith.constant 0 : index
    %c0_0 = arith.constant 0 : index
    %0 = vector.load %arg1[%c0, %c0_0] : memref<96x32xbf16, #tpu.memory_space<vmem>>, vector<96x32xbf16>
    %c0_1 = arith.constant 0 : index
    %c0_2 = arith.constant 0 : index
    %1 = vector.load %arg2[%c0_1, %c0_2] : memref<32x32xbf16, #tpu.memory_space<vmem>>, vector<32x32xbf16>
    %cst = arith.constant dense<0.000000e+00> : vector<96x32xf32>
    %2 = tpu.matmul %0, %1, %cst {dimension_numbers = #tpu.dot_dimension_numbers<[1], [0], [0], [1], [0, 0, 1, 1], [], []>} : vector<96x32xbf16>, vector<32x32xbf16>, vector<96x32xf32> -> vector<96x32xf32>
    %c0_3 = arith.constant 0 : index
    %c0_4 = arith.constant 0 : index
    %3 = vector.load %arg3[%c0_3, %c0_4] : memref<1x32xf32, #tpu.memory_space<vmem>>, vector<1x32xf32>
    %4 = vector.broadcast %3 : vector<1x32xf32> to vector<96x32xf32>
    %5 = arith.addf %2, %4 : vector<96x32xf32>
    %cst_5 = arith.constant 0.000000e+00 : f32
    %6 = vector.broadcast %cst_5 : f32 to vector<96x32xf32>
    %7 = arith.maximumf %5, %6 : vector<96x32xf32>
    %8 = arith.truncf %7 : vector<96x32xf32> to vector<96x32xbf16>
    %c0_6 = arith.constant 0 : index
    %c0_7 = arith.constant 0 : index
    %9 = vector.load %arg4[%c0_6, %c0_7] : memref<96x32xbf16, #tpu.memory_space<vmem>>, vector<96x32xbf16>
    tpu.vector_store %arg4[%c0_6, %c0_7], %8 {strides = array<i32>} : memref<96x32xbf16, #tpu.memory_space<vmem>>, vector<96x32xbf16>,
    return
  }
  func.func @transform_0(%arg0: i32) -> (i32, i32) {
    %c0_i32 = arith.constant 0 : i32
    %c0_i32_0 = arith.constant 0 : i32
    return %arg0, %c0_i32 : i32, i32
  }
  func.func @transform_1(%arg0: i32) -> (i32, i32) {
    %c0_i32 = arith.constant 0 : i32
    %c0_i32_0 = arith.constant 0 : i32
    %c0_i32_1 = arith.constant 0 : i32
    return %c0_i32, %c0_i32_0 : i32, i32
  }
  func.func @transform_2(%arg0: i32) -> (i32, i32) {
    %c0_i32 = arith.constant 0 : i32
    %c0_i32_0 = arith.constant 0 : i32
    %c0_i32_1 = arith.constant 0 : i32
    return %c0_i32, %c0_i32_0 : i32, i32
  }
  func.func @transform_3(%arg0: i32) -> (i32, i32) {
    %c0_i32 = arith.constant 0 : i32
    %c0_i32_0 = arith.constant 0 : i32
    return %arg0, %c0_i32 : i32, i32
  }
}

module attributes {stable_mosaic.version = 11 : i64} {
  func.func @kernel(%arg0: i32, %arg1: memref<160x32xbf16, #tpu.memory_space<vmem>>, %arg2: memref<160x32xbf16, #tpu.memory_space<vmem>>, %arg3: memref<160x32xbf16, #tpu.memory_space<vmem>>, %arg4: memref<32x32xbf16, #tpu.memory_space<vmem>>, %arg5: memref<1x32xf32, #tpu.memory_space<vmem>>, %arg6: memref<32x32xbf16, #tpu.memory_space<vmem>>, %arg7: memref<32x32xbf16, #tpu.memory_space<vmem>>, %arg8: memref<1x32xf32, #tpu.memory_space<vmem>>, %arg9: memref<32x64xbf16, #tpu.memory_space<vmem>>, %arg10: memref<1x64xf32, #tpu.memory_space<vmem>>, %arg11: memref<32x64xbf16, #tpu.memory_space<vmem>>, %arg12: memref<1x64xf32, #tpu.memory_space<vmem>>, %arg13: memref<64x128xbf16, #tpu.memory_space<vmem>>, %arg14: memref<64x128xbf16, #tpu.memory_space<vmem>>, %arg15: memref<1x128xf32, #tpu.memory_space<vmem>>, %arg16: memref<160x128xbf16, #tpu.memory_space<vmem>>) attributes {dimension_semantics = [#tpu.dimension_semantics<parallel>], iteration_bounds = array<i64: 1>, scalar_prefetch = 0 : i64, scratch_operands = 0 : i64, tpu.core_type = #tpu.core_type<tc>, window_params = [{transform_indices = @transform_0, window_bounds = array<i64: 160, 32>}, {transform_indices = @transform_1, window_bounds = array<i64: 160, 32>}, {transform_indices = @transform_2, window_bounds = array<i64: 160, 32>}, {pipeline_mode = #tpu.pipeline_mode<synchronous>, transform_indices = @transform_3, window_bounds = array<i64: 32, 32>}, {pipeline_mode = #tpu.pipeline_mode<synchronous>, transform_indices = @transform_4, window_bounds = array<i64: 1, 32>}, {pipeline_mode = #tpu.pipeline_mode<synchronous>, transform_indices = @transform_5, window_bounds = array<i64: 32, 32>}, {pipeline_mode = #tpu.pipeline_mode<synchronous>, transform_indices = @transform_6, window_bounds = array<i64: 32, 32>}, {pipeline_mode = #tpu.pipeline_mode<synchronous>, transform_indices = @transform_7, window_bounds = array<i64: 1, 32>}, {pipeline_mode = #tpu.pipeline_mode<synchronous>, transform_indices = @transform_8, window_bounds = array<i64: 32, 64>}, {pipeline_mode = #tpu.pipeline_mode<synchronous>, transform_indices = @transform_9, window_bounds = array<i64: 1, 64>}, {pipeline_mode = #tpu.pipeline_mode<synchronous>, transform_indices = @transform_10, window_bounds = array<i64: 32, 64>}, {pipeline_mode = #tpu.pipeline_mode<synchronous>, transform_indices = @transform_11, window_bounds = array<i64: 1, 64>}, {pipeline_mode = #tpu.pipeline_mode<synchronous>, transform_indices = @transform_12, window_bounds = array<i64: 64, 128>}, {pipeline_mode = #tpu.pipeline_mode<synchronous>, transform_indices = @transform_13, window_bounds = array<i64: 64, 128>}, {pipeline_mode = #tpu.pipeline_mode<synchronous>, transform_indices = @transform_14, window_bounds = array<i64: 1, 128>}, {transform_indices = @transform_15, window_bounds = array<i64: 160, 128>}]} {
    %c0 = arith.constant 0 : index
    %c0_0 = arith.constant 0 : index
    %0 = vector.load %arg1[%c0, %c0_0] : memref<160x32xbf16, #tpu.memory_space<vmem>>, vector<160x32xbf16>
    %1 = arith.extf %0 : vector<160x32xbf16> to vector<160x32xf32>
    %c0_1 = arith.constant 0 : index
    %c0_2 = arith.constant 0 : index
    %2 = vector.load %arg2[%c0_1, %c0_2] : memref<160x32xbf16, #tpu.memory_space<vmem>>, vector<160x32xbf16>
    %3 = arith.extf %2 : vector<160x32xbf16> to vector<160x32xf32>
    %c0_3 = arith.constant 0 : index
    %c0_4 = arith.constant 0 : index
    %4 = vector.load %arg3[%c0_3, %c0_4] : memref<160x32xbf16, #tpu.memory_space<vmem>>, vector<160x32xbf16>
    %5 = arith.extf %4 : vector<160x32xbf16> to vector<160x32xf32>
    %6 = arith.addf %3, %5 : vector<160x32xf32>
    %cst = arith.constant 5.000000e-01 : f32
    %7 = vector.broadcast %cst : f32 to vector<160x32xf32>
    %8 = arith.mulf %7, %6 : vector<160x32xf32>
    %9 = arith.truncf %8 : vector<160x32xf32> to vector<160x32xbf16>
    %c0_5 = arith.constant 0 : index
    %c0_6 = arith.constant 0 : index
    %10 = vector.load %arg4[%c0_5, %c0_6] : memref<32x32xbf16, #tpu.memory_space<vmem>>, vector<32x32xbf16>
    %cst_7 = arith.constant dense<0.000000e+00> : vector<160x32xf32>
    %11 = tpu.matmul %9, %10, %cst_7 {dimension_numbers = #tpu.dot_dimension_numbers<[1], [0], [0], [1], [0, 0, 1, 1], [], []>} : vector<160x32xbf16>, vector<32x32xbf16>, vector<160x32xf32> -> vector<160x32xf32>
    %c0_8 = arith.constant 0 : index
    %c0_9 = arith.constant 0 : index
    %12 = vector.load %arg5[%c0_8, %c0_9] : memref<1x32xf32, #tpu.memory_space<vmem>>, vector<1x32xf32>
    %13 = vector.broadcast %12 : vector<1x32xf32> to vector<160x32xf32>
    %14 = arith.addf %11, %13 : vector<160x32xf32>
    %cst_10 = arith.constant 0.000000e+00 : f32
    %15 = vector.broadcast %cst_10 : f32 to vector<160x32xf32>
    %16 = arith.maximumf %14, %15 : vector<160x32xf32>
    %17 = arith.truncf %16 : vector<160x32xf32> to vector<160x32xbf16>
    %c0_11 = arith.constant 0 : index
    %c0_12 = arith.constant 0 : index
    %18 = vector.load %arg6[%c0_11, %c0_12] : memref<32x32xbf16, #tpu.memory_space<vmem>>, vector<32x32xbf16>
    %cst_13 = arith.constant dense<0.000000e+00> : vector<160x32xf32>
    %19 = tpu.matmul %0, %18, %cst_13 {dimension_numbers = #tpu.dot_dimension_numbers<[1], [0], [0], [1], [0, 0, 1, 1], [], []>} : vector<160x32xbf16>, vector<32x32xbf16>, vector<160x32xf32> -> vector<160x32xf32>
    %c0_14 = arith.constant 0 : index
    %c0_15 = arith.constant 0 : index
    %20 = vector.load %arg7[%c0_14, %c0_15] : memref<32x32xbf16, #tpu.memory_space<vmem>>, vector<32x32xbf16>
    %cst_16 = arith.constant dense<0.000000e+00> : vector<160x32xf32>
    %21 = tpu.matmul %17, %20, %cst_16 {dimension_numbers = #tpu.dot_dimension_numbers<[1], [0], [0], [1], [0, 0, 1, 1], [], []>} : vector<160x32xbf16>, vector<32x32xbf16>, vector<160x32xf32> -> vector<160x32xf32>
    %22 = arith.addf %19, %21 : vector<160x32xf32>
    %c0_17 = arith.constant 0 : index
    %c0_18 = arith.constant 0 : index
    %23 = vector.load %arg8[%c0_17, %c0_18] : memref<1x32xf32, #tpu.memory_space<vmem>>, vector<1x32xf32>
    %24 = vector.broadcast %23 : vector<1x32xf32> to vector<160x32xf32>
    %25 = arith.addf %22, %24 : vector<160x32xf32>
    %26 = arith.negf %25 : vector<160x32xf32>
    %27 = math.exp %26 : vector<160x32xf32>
    %cst_19 = arith.constant 1.000000e+00 : f32
    %28 = vector.broadcast %cst_19 : f32 to vector<160x32xf32>
    %29 = arith.addf %28, %27 : vector<160x32xf32>
    %30 = arith.divf %28, %29 : vector<160x32xf32>
    %31 = arith.mulf %30, %1 : vector<160x32xf32>
    %cst_20 = arith.constant 1.000000e+00 : f32
    %32 = vector.broadcast %cst_20 : f32 to vector<160x32xf32>
    %33 = arith.subf %32, %30 : vector<160x32xf32>
    %34 = arith.mulf %33, %16 : vector<160x32xf32>
    %35 = arith.addf %31, %34 : vector<160x32xf32>
    %36 = arith.truncf %35 : vector<160x32xf32> to vector<160x32xbf16>
    %c0_21 = arith.constant 0 : index
    %c0_22 = arith.constant 0 : index
    %37 = vector.load %arg9[%c0_21, %c0_22] : memref<32x64xbf16, #tpu.memory_space<vmem>>, vector<32x64xbf16>
    %cst_23 = arith.constant dense<0.000000e+00> : vector<160x64xf32>
    %38 = tpu.matmul %36, %37, %cst_23 {dimension_numbers = #tpu.dot_dimension_numbers<[1], [0], [0], [1], [0, 0, 1, 1], [], []>} : vector<160x32xbf16>, vector<32x64xbf16>, vector<160x64xf32> -> vector<160x64xf32>
    %c0_24 = arith.constant 0 : index
    %c0_25 = arith.constant 0 : index
    %39 = vector.load %arg10[%c0_24, %c0_25] : memref<1x64xf32, #tpu.memory_space<vmem>>, vector<1x64xf32>
    %40 = vector.broadcast %39 : vector<1x64xf32> to vector<160x64xf32>
    %41 = arith.addf %38, %40 : vector<160x64xf32>
    %cst_26 = arith.constant 0.000000e+00 : f32
    %42 = vector.broadcast %cst_26 : f32 to vector<160x64xf32>
    %43 = arith.maximumf %41, %42 : vector<160x64xf32>
    %44 = arith.truncf %43 : vector<160x64xf32> to vector<160x64xbf16>
    %c0_27 = arith.constant 0 : index
    %c0_28 = arith.constant 0 : index
    %45 = vector.load %arg11[%c0_27, %c0_28] : memref<32x64xbf16, #tpu.memory_space<vmem>>, vector<32x64xbf16>
    %cst_29 = arith.constant dense<0.000000e+00> : vector<160x64xf32>
    %46 = tpu.matmul %17, %45, %cst_29 {dimension_numbers = #tpu.dot_dimension_numbers<[1], [0], [0], [1], [0, 0, 1, 1], [], []>} : vector<160x32xbf16>, vector<32x64xbf16>, vector<160x64xf32> -> vector<160x64xf32>
    %c0_30 = arith.constant 0 : index
    %c0_31 = arith.constant 0 : index
    %47 = vector.load %arg12[%c0_30, %c0_31] : memref<1x64xf32, #tpu.memory_space<vmem>>, vector<1x64xf32>
    %48 = vector.broadcast %47 : vector<1x64xf32> to vector<160x64xf32>
    %49 = arith.addf %46, %48 : vector<160x64xf32>
    %cst_32 = arith.constant 0.000000e+00 : f32
    %50 = vector.broadcast %cst_32 : f32 to vector<160x64xf32>
    %51 = arith.maximumf %49, %50 : vector<160x64xf32>
    %52 = arith.truncf %51 : vector<160x64xf32> to vector<160x64xbf16>
    %c0_33 = arith.constant 0 : index
    %c0_34 = arith.constant 0 : index
    %53 = vector.load %arg13[%c0_33, %c0_34] : memref<64x128xbf16, #tpu.memory_space<vmem>>, vector<64x128xbf16>
    %cst_35 = arith.constant dense<0.000000e+00> : vector<160x128xf32>
    %54 = tpu.matmul %44, %53, %cst_35 {dimension_numbers = #tpu.dot_dimension_numbers<[1], [0], [0], [1], [0, 0, 1, 1], [], []>} : vector<160x64xbf16>, vector<64x128xbf16>, vector<160x128xf32> -> vector<160x128xf32>
    %c0_36 = arith.constant 0 : index
    %c0_37 = arith.constant 0 : index
    %55 = vector.load %arg14[%c0_36, %c0_37] : memref<64x128xbf16, #tpu.memory_space<vmem>>, vector<64x128xbf16>
    %cst_38 = arith.constant dense<0.000000e+00> : vector<160x128xf32>
    %56 = tpu.matmul %52, %55, %cst_38 {dimension_numbers = #tpu.dot_dimension_numbers<[1], [0], [0], [1], [0, 0, 1, 1], [], []>} : vector<160x64xbf16>, vector<64x128xbf16>, vector<160x128xf32> -> vector<160x128xf32>
    %57 = arith.addf %54, %56 : vector<160x128xf32>
    %c0_39 = arith.constant 0 : index
    %c0_40 = arith.constant 0 : index
    %58 = vector.load %arg15[%c0_39, %c0_40] : memref<1x128xf32, #tpu.memory_space<vmem>>, vector<1x128xf32>
    %59 = vector.broadcast %58 : vector<1x128xf32> to vector<160x128xf32>
    %60 = arith.addf %57, %59 : vector<160x128xf32>
    %61 = tpu.iota {dimensions = array<i32: 1>} : vector<1x128xi32>
    %c5_i32 = arith.constant 5 : i32
    %62 = vector.broadcast %c5_i32 : i32 to vector<1x128xi32>
    %63 = arith.cmpi sge, %61, %62 : vector<1x128xi32>
    %c9_i32 = arith.constant 9 : i32
    %64 = vector.broadcast %c9_i32 : i32 to vector<1x128xi32>
    %65 = arith.cmpi slt, %61, %64 : vector<1x128xi32>
    %66 = arith.andi %63, %65 : vector<1x128xi1>
    %c27_i32 = arith.constant 27 : i32
    %67 = vector.broadcast %c27_i32 : i32 to vector<1x128xi32>
    %68 = arith.cmpi sge, %61, %67 : vector<1x128xi32>
    %c31_i32 = arith.constant 31 : i32
    %69 = vector.broadcast %c31_i32 : i32 to vector<1x128xi32>
    %70 = arith.cmpi slt, %61, %69 : vector<1x128xi32>
    %71 = arith.andi %68, %70 : vector<1x128xi1>
    %72 = arith.ori %66, %71 : vector<1x128xi1>
    %cst_41 = arith.constant 0.000000e+00 : f32
    %73 = vector.broadcast %cst_41 : f32 to vector<160x128xf32>
    %74 = arith.maximumf %60, %73 : vector<160x128xf32>
    %75 = vector.shape_cast %72 : vector<1x128xi1> to vector<1x128xi1>
    %76 = vector.broadcast %75 : vector<1x128xi1> to vector<160x128xi1>
    %77 = arith.select %76, %74, %60 : vector<160x128xi1>, vector<160x128xf32>
    %c16_i32 = arith.constant 16 : i32
    %78 = vector.broadcast %c16_i32 : i32 to vector<1x128xi32>
    %79 = arith.cmpi sge, %61, %78 : vector<1x128xi32>
    %c17_i32 = arith.constant 17 : i32
    %80 = vector.broadcast %c17_i32 : i32 to vector<1x128xi32>
    %81 = arith.cmpi slt, %61, %80 : vector<1x128xi32>
    %82 = arith.andi %79, %81 : vector<1x128xi1>
    %c21_i32 = arith.constant 21 : i32
    %83 = vector.broadcast %c21_i32 : i32 to vector<1x128xi32>
    %84 = arith.cmpi sge, %61, %83 : vector<1x128xi32>
    %c22_i32 = arith.constant 22 : i32
    %85 = vector.broadcast %c22_i32 : i32 to vector<1x128xi32>
    %86 = arith.cmpi slt, %61, %85 : vector<1x128xi32>
    %87 = arith.andi %84, %86 : vector<1x128xi1>
    %88 = arith.ori %82, %87 : vector<1x128xi1>
    %c38_i32 = arith.constant 38 : i32
    %89 = vector.broadcast %c38_i32 : i32 to vector<1x128xi32>
    %90 = arith.cmpi sge, %61, %89 : vector<1x128xi32>
    %c39_i32 = arith.constant 39 : i32
    %91 = vector.broadcast %c39_i32 : i32 to vector<1x128xi32>
    %92 = arith.cmpi slt, %61, %91 : vector<1x128xi32>
    %93 = arith.andi %90, %92 : vector<1x128xi1>
    %94 = arith.ori %88, %93 : vector<1x128xi1>
    %c43_i32 = arith.constant 43 : i32
    %95 = vector.broadcast %c43_i32 : i32 to vector<1x128xi32>
    %96 = arith.cmpi sge, %61, %95 : vector<1x128xi32>
    %c44_i32 = arith.constant 44 : i32
    %97 = vector.broadcast %c44_i32 : i32 to vector<1x128xi32>
    %98 = arith.cmpi slt, %61, %97 : vector<1x128xi32>
    %99 = arith.andi %96, %98 : vector<1x128xi1>
    %100 = arith.ori %94, %99 : vector<1x128xi1>
    %101 = math.exp %77 : vector<160x128xf32>
    %102 = vector.shape_cast %100 : vector<1x128xi1> to vector<1x128xi1>
    %103 = vector.broadcast %102 : vector<1x128xi1> to vector<160x128xi1>
    %104 = arith.select %103, %101, %77 : vector<160x128xi1>, vector<160x128xf32>
    %105 = arith.truncf %104 : vector<160x128xf32> to vector<160x128xbf16>
    %c0_42 = arith.constant 0 : index
    %c0_43 = arith.constant 0 : index
    %106 = vector.load %arg16[%c0_42, %c0_43] : memref<160x128xbf16, #tpu.memory_space<vmem>>, vector<160x128xbf16>
    tpu.vector_store %arg16[%c0_42, %c0_43], %105 {strides = array<i32>} : memref<160x128xbf16, #tpu.memory_space<vmem>>, vector<160x128xbf16>,
    return
  }
  func.func @transform_0(%arg0: i32) -> (i32, i32) {
    %c0_i32 = arith.constant 0 : i32
    %c0_i32_0 = arith.constant 0 : i32
    return %arg0, %c0_i32 : i32, i32
  }
  func.func @transform_1(%arg0: i32) -> (i32, i32) {
    %c0_i32 = arith.constant 0 : i32
    %c0_i32_0 = arith.constant 0 : i32
    return %arg0, %c0_i32 : i32, i32
  }
  func.func @transform_2(%arg0: i32) -> (i32, i32) {
    %c0_i32 = arith.constant 0 : i32
    %c0_i32_0 = arith.constant 0 : i32
    return %arg0, %c0_i32 : i32, i32
  }
  func.func @transform_3(%arg0: i32) -> (i32, i32) {
    %c0_i32 = arith.constant 0 : i32
    %c0_i32_0 = arith.constant 0 : i32
    %c0_i32_1 = arith.constant 0 : i32
    return %c0_i32, %c0_i32_0 : i32, i32
  }
  func.func @transform_4(%arg0: i32) -> (i32, i32) {
    %c0_i32 = arith.constant 0 : i32
    %c0_i32_0 = arith.constant 0 : i32
    %c0_i32_1 = arith.constant 0 : i32
    return %c0_i32, %c0_i32_0 : i32, i32
  }
  func.func @transform_5(%arg0: i32) -> (i32, i32) {
    %c0_i32 = arith.constant 0 : i32
    %c0_i32_0 = arith.constant 0 : i32
    %c0_i32_1 = arith.constant 0 : i32
    return %c0_i32, %c0_i32_0 : i32, i32
  }
  func.func @transform_6(%arg0: i32) -> (i32, i32) {
    %c0_i32 = arith.constant 0 : i32
    %c0_i32_0 = arith.constant 0 : i32
    %c0_i32_1 = arith.constant 0 : i32
    return %c0_i32, %c0_i32_0 : i32, i32
  }
  func.func @transform_7(%arg0: i32) -> (i32, i32) {
    %c0_i32 = arith.constant 0 : i32
    %c0_i32_0 = arith.constant 0 : i32
    %c0_i32_1 = arith.constant 0 : i32
    return %c0_i32, %c0_i32_0 : i32, i32
  }
  func.func @transform_8(%arg0: i32) -> (i32, i32) {
    %c0_i32 = arith.constant 0 : i32
    %c0_i32_0 = arith.constant 0 : i32
    %c0_i32_1 = arith.constant 0 : i32
    return %c0_i32, %c0_i32_0 : i32, i32
  }
  func.func @transform_9(%arg0: i32) -> (i32, i32) {
    %c0_i32 = arith.constant 0 : i32
    %c0_i32_0 = arith.constant 0 : i32
    %c0_i32_1 = arith.constant 0 : i32
    return %c0_i32, %c0_i32_0 : i32, i32
  }
  func.func @transform_10(%arg0: i32) -> (i32, i32) {
    %c0_i32 = arith.constant 0 : i32
    %c0_i32_0 = arith.constant 0 : i32
    %c0_i32_1 = arith.constant 0 : i32
    return %c0_i32, %c0_i32_0 : i32, i32
  }
  func.func @transform_11(%arg0: i32) -> (i32, i32) {
    %c0_i32 = arith.constant 0 : i32
    %c0_i32_0 = arith.constant 0 : i32
    %c0_i32_1 = arith.constant 0 : i32
    return %c0_i32, %c0_i32_0 : i32, i32
  }
  func.func @transform_12(%arg0: i32) -> (i32, i32) {
    %c0_i32 = arith.constant 0 : i32
    %c0_i32_0 = arith.constant 0 : i32
    %c0_i32_1 = arith.constant 0 : i32
    return %c0_i32, %c0_i32_0 : i32, i32
  }
  func.func @transform_13(%arg0: i32) -> (i32, i32) {
    %c0_i32 = arith.constant 0 : i32
    %c0_i32_0 = arith.constant 0 : i32
    %c0_i32_1 = arith.constant 0 : i32
    return %c0_i32, %c0_i32_0 : i32, i32
  }
  func.func @transform_14(%arg0: i32) -> (i32, i32) {
    %c0_i32 = arith.constant 0 : i32
    %c0_i32_0 = arith.constant 0 : i32
    %c0_i32_1 = arith.constant 0 : i32
    return %c0_i32, %c0_i32_0 : i32, i32
  }
  func.func @transform_15(%arg0: i32) -> (i32, i32) {
    %c0_i32 = arith.constant 0 : i32
    %c0_i32_0 = arith.constant 0 : i32
    return %arg0, %c0_i32 : i32, i32
  }
}

</mosaic_0001>

<llo_original>
// kernel: div.15
$region0: #{div.15}
  #allocation0 [shape = 's32[1]{0}', space=sflag, size = 0x4, scoped, tag = 'scoped memory for div.15']
  %s0 = inlined_call_operand.vmem [shape: f32[3], index: 0, kind: input, shape index: {}]
  %s1 = inlined_call_operand.vmem [shape: f32[3], index: 1, kind: input, shape index: {}]
  %s2 = inlined_call_operand.vmem [shape: f32[3], index: 2, kind: output, shape index: {}]
  %v3 = vld [vmem:[%s0] sm:$0x1]
  %v4 = vld [vmem:[%s1] sm:$0x1]
  %5 = xla_tuple %v3, %v4
  %6 = xla_tuple %5
  %v7 = vrcp.pop %v4
  %v8 = vmul.f32 %v3, %v7
  %9 = xla_tuple %v8
  %10 = vst [vmem:[%s2] sm:$0x1] %v8

// kernel: forward.4
$region0: #{forward.4}
  #allocation0 [shape = 'u32[]', space=smem, size = 0x4, offset = 0x4, fixed_abs, tag = 'smem constant byte address 0x4 - core index']
  #allocation1 [shape = 'u32[144,128]{1,0:T(1,128)}', space=vmem, size = 0x12000, scoped, tag = 'internal scratch']
  %s0 = inlined_call_operand.vmem [shape: bf16[1536,3], index: 0, kind: input, shape index: {}]
  %s1 = inlined_call_operand.vmem [shape: bf16[3,32], index: 1, kind: input, shape index: {}]
  %s2 = inlined_call_operand.vmem [shape: f32[1,32], index: 2, kind: input, shape index: {}]
  %s3 = inlined_call_operand.vmem [shape: bf16[1536,32], index: 3, kind: output, shape index: {}]
  %s4 = sld [smem:[#allocation0]]
  $region45: #{forward.4} parent=0
    _
  %s6 = ssub.s32 1, %s4
  %s7 = scalar_select 0, %s6, %s4
  loop: start=0, step=1, limit=5
  $region2: #{forward.4} parent=0 // loop_pre_header
    _
  $region3: #{forward.4} parent=0 // loop_header
    %s9 = sphi 0, %s13
    %p10 = scmp.ge.s32.totalorder %s9, 5
    %s19 = sphi 0, %s21
    %s22 = sphi 0, %s19
    %s23 = sphi 0, %s22
    %s39 = sphi 0, %s23
    %s43 = sphi 0, %s43
    %s45 = sphi 0, %s43
    %s46 = sphi 0, %s45
    %s60 = sphi 0, %s46
    %s64 = sphi 0, %s64
    %s66 = sphi 0, %s64
    %s67 = sphi 0, %s66
    %s81 = sphi 0, %s67
    %s87 = sphi 0, %s89
    %s90 = sphi 0, %s87
    %s91 = sphi 0, %s90
    %s107 = sphi 0, %s91
  $region4: #{forward.4} parent=0 // loop_header_branch
    %12 = sbr.rel (%p10) target = $region8
  $region5: #{forward.4} parent=0 // loop_body
    %s14 = ssub.s32 %s9, 1
    %s15 = ssub.s32 %s9, 2
    %s16 = sadd.s32 %s9, 1
    %s17 = ssub.s32 %s9, %s16
    %p18 = scmp.eq.s32.totalorder %s17, 0
    %s20 = sadd.s32 %s19, 1
    %s21 = scalar_select %p18, %s19, %s20
    %p24 = pneg %p18
    %p25 = scmp.eq.s32.totalorder %s9, 2
    %p26 = por %p24, %p25
    %p27 = scmp.ne.s32.totalorder %s19, %s22
    %p28 = scmp.eq.s32.totalorder %s9, 0
    %p29 = por %p27, %p28
    %p30 = scmp.ne.s32.totalorder %s19, %s22
    %p31 = scmp.eq.s32.totalorder %s14, 2
    %p32 = por %p30, %p31
    %p33 = scmp.ne.s32.totalorder %s22, %s23
    %p34 = scmp.eq.s32.totalorder %s14, 0
    %p35 = por %p33, %p34
    %p36 = scmp.ne.s32.totalorder %s22, %s23
    %p37 = scmp.eq.s32.totalorder %s15, 2
    %p38 = por %p36, %p37
    %p40 = scmp.ne.s32.totalorder %s23, %s39
    %p41 = scmp.eq.s32.totalorder %s15, 0
    %p42 = por %p40, %p41
    %s44 = sadd.s32 %s43, 1
    %p47 = scmp.eq.s32.totalorder %s9, 2
    %p48 = scmp.ne.s32.totalorder %s43, %s45
    %p49 = scmp.eq.s32.totalorder %s9, 0
    %p50 = por %p48, %p49
    %p51 = scmp.ne.s32.totalorder %s43, %s45
    %p52 = scmp.eq.s32.totalorder %s14, 2
    %p53 = por %p51, %p52
    %p54 = scmp.ne.s32.totalorder %s45, %s46
    %p55 = scmp.eq.s32.totalorder %s14, 0
    %p56 = por %p54, %p55
    %p57 = scmp.ne.s32.totalorder %s45, %s46
    %p58 = scmp.eq.s32.totalorder %s15, 2
    %p59 = por %p57, %p58
    %p61 = scmp.ne.s32.totalorder %s46, %s60
    %p62 = scmp.eq.s32.totalorder %s15, 0
    %p63 = por %p61, %p62
    %s65 = sadd.s32 %s64, 1
    %p68 = scmp.eq.s32.totalorder %s9, 2
    %p69 = scmp.ne.s32.totalorder %s64, %s66
    %p70 = scmp.eq.s32.totalorder %s9, 0
    %p71 = por %p69, %p70
    %p72 = scmp.ne.s32.totalorder %s64, %s66
    %p73 = scmp.eq.s32.totalorder %s14, 2
    %p74 = por %p72, %p73
    %p75 = scmp.ne.s32.totalorder %s66, %s67
    %p76 = scmp.eq.s32.totalorder %s14, 0
    %p77 = por %p75, %p76
    %p78 = scmp.ne.s32.totalorder %s66, %s67
    %p79 = scmp.eq.s32.totalorder %s15, 2
    %p80 = por %p78, %p79
    %p82 = scmp.ne.s32.totalorder %s67, %s81
    %p83 = scmp.eq.s32.totalorder %s15, 0
    %p84 = por %p82, %p83
    %s85 = ssub.s32 %s9, %s16
    %p86 = scmp.eq.s32.totalorder %s85, 0
    %s88 = sadd.s32 %s87, 1
    %s89 = scalar_select %p86, %s87, %s88
    %p92 = pneg %p86
    %p93 = scmp.eq.s32.totalorder %s9, 2
    %p94 = por %p92, %p93
    %p95 = scmp.ne.s32.totalorder %s87, %s90
    %p96 = scmp.eq.s32.totalorder %s9, 0
    %p97 = por %p95, %p96
    %p98 = scmp.ne.s32.totalorder %s87, %s90
    %p99 = scmp.eq.s32.totalorder %s14, 2
    %p100 = por %p98, %p99
    %p101 = scmp.ne.s32.totalorder %s90, %s91
    %p102 = scmp.eq.s32.totalorder %s14, 0
    %p103 = por %p101, %p102
    %p104 = scmp.ne.s32.totalorder %s90, %s91
    %p105 = scmp.eq.s32.totalorder %s15, 2
    %p106 = por %p104, %p105
    %p108 = scmp.ne.s32.totalorder %s91, %s107
    %p109 = scmp.eq.s32.totalorder %s15, 0
    %p110 = por %p108, %p109
    %p111 = scmp.le.s32.totalorder 1, %s9
    %p112 = scmp.lt.s32.totalorder %s9, 4
    %p113 = pnand %p111, %p112
    %p114 = pneg %p113
    // Predicated region
    $region9: #{forward.4} parent=5 // pred_check
      _
    $region10: #{forward.4} parent=5 // pred_check_branch
      %116 = sbr.rel (%p113) target = $region12
    $region11: #{forward.4} parent=5 // pred_region
      %s117 = ssub.s32 %s9, 1
      // Predicated region
      $region13: #{forward.4} parent=11 // pred_check
        %p118 = pneg %p56
      $region14: #{forward.4} parent=11 // pred_check_branch
        %120 = sbr.rel (%p118) target = $region16
      $region15: #{forward.4} parent=11 // pred_region
        _
      $region16: #{forward.4} parent=11 // pred_fallthru
        _
      // Predicated region
      $region17: #{forward.4} parent=11 // pred_check
        %p121 = pneg %p77
      $region18: #{forward.4} parent=11 // pred_check_branch
        %123 = sbr.rel (%p121) target = $region20
      $region19: #{forward.4} parent=11 // pred_region
        _
      $region20: #{forward.4} parent=11 // pred_fallthru
        _
    $region12: #{forward.4} parent=5 // pred_fallthru
      _
    %p124 = scmp.lt.s32.totalorder %s9, 3
    // Predicated region
    $region21: #{forward.4} parent=5 // pred_check
      %p125 = pneg %p124
    $region22: #{forward.4} parent=5 // pred_check_branch
      %127 = sbr.rel (%p125) target = $region24
    $region23: #{forward.4} parent=5 // pred_region
      // Predicated region
      $region25: #{forward.4} parent=23 // pred_check
        %p128 = pneg %p29
      $region26: #{forward.4} parent=23 // pred_check_branch
        %130 = sbr.rel (%p128) target = $region28
      $region27: #{forward.4} parent=23 // pred_region
        %s131 = smul.u32 64, %s9
        %p132 = scmp.lt.s32.totalorder %s131, 191
        %s133 = scalar_select %p132, %s131, 191
        %s134 = smul.addr %s133, 4
        %s135 = scalar_lea.vmem %s0, %s134
        %s136 = smul.u32 64, %s9
      $region28: #{forward.4} parent=23 // pred_fallthru
        _
    $region24: #{forward.4} parent=5 // pred_fallthru
      _
    %p137 = scmp.le.s32.totalorder 1, %s9
    %p138 = scmp.lt.s32.totalorder %s9, 4
    %p139 = pnand %p137, %p138
    %p140 = pneg %p139
    // Predicated region
    $region29: #{forward.4} parent=5 // pred_check
      _
    $region30: #{forward.4} parent=5 // pred_check_branch
      %142 = sbr.rel (%p139) target = $region32
    $region31: #{forward.4} parent=5 // pred_region
      %s143 = ssub.s32 %s9, 1
      %s144 = smul.u32 64, %s14
      %p145 = scmp.lt.s32.totalorder %s144, 191
      %s146 = scalar_select %p145, %s144, 191
      %s147 = smul.addr %s146, 4
      %s148 = scalar_lea.vmem %s0, %s147
      %p149 = pneg %p35
      %p150 = pneg %p32
      %p151 = pneg %p56
      %p152 = pneg %p53
      %p153 = pneg %p77
      %p154 = pneg %p74
      %p155 = pneg %p103
      %p156 = pneg %p100
      %s157 = smul.u32 64, %s14
      %p158 = scmp.lt.s32.totalorder %s157, 191
      %s159 = scalar_select %p158, %s157, 191
      %s160 = smul.addr %s159, 4
      %s161 = scalar_lea.vmem %s3, %s160
      %s162 = smul.u32 64, %s14
      %p163 = scmp.lt.s32.totalorder %s162, 191
      %s164 = scalar_select %p163, %s162, 191
      %s165 = smul.addr %s164, 4
      %s166 = scalar_lea.vmem %s0, %s165
      %s167 = smul.u32 64, %s14
      %s168 = smul.u32 64, %s14
      %p169 = scmp.lt.s32.totalorder %s168, 191
      %s170 = scalar_select %p169, %s168, 191
      %s171 = smul.addr %s170, 4
      %s172 = scalar_lea.vmem %s3, %s171
      %s173 = smul.u32 64, %s14
      %v175 = vld [vmem:[%s166] sm:$0xf]
      %v176 = vld [vmem:[%s166 + $0x4] sm:$0xf]
      %v177 = vld [vmem:[%s166 + $0x8] sm:$0xf]
      %v178 = vld [vmem:[%s166 + $0xc] sm:$0xf]
      %v179 = vld [vmem:[%s166 + $0x10] sm:$0xf]
      %v180 = vld [vmem:[%s166 + $0x14] sm:$0xf]
      %v181 = vld [vmem:[%s166 + $0x18] sm:$0xf]
      %v182 = vld [vmem:[%s166 + $0x1c] sm:$0xf]
      %v183 = vld [vmem:[%s166 + $0x20] sm:$0xf]
      %v184 = vld [vmem:[%s166 + $0x24] sm:$0xf]
      %v185 = vld [vmem:[%s166 + $0x28] sm:$0xf]
      %v186 = vld [vmem:[%s166 + $0x2c] sm:$0xf]
      %v187 = vld [vmem:[%s166 + $0x30] sm:$0xf]
      %v188 = vld [vmem:[%s166 + $0x34] sm:$0xf]
      %v189 = vld [vmem:[%s166 + $0x38] sm:$0xf]
      %v190 = vld [vmem:[%s166 + $0x3c] sm:$0xf]
      %v191 = vld [vmem:[%s166 + $0x40] sm:$0xf]
      %v192 = vld [vmem:[%s166 + $0x44] sm:$0xf]
      %v193 = vld [vmem:[%s166 + $0x48] sm:$0xf]
      %v194 = vld [vmem:[%s166 + $0x4c] sm:$0xf]
      %v195 = vld [vmem:[%s166 + $0x50] sm:$0xf]
      %v196 = vld [vmem:[%s166 + $0x54] sm:$0xf]
      %v197 = vld [vmem:[%s166 + $0x58] sm:$0xf]
      %v198 = vld [vmem:[%s166 + $0x5c] sm:$0xf]
      %v199 = vld [vmem:[%s166 + $0x60] sm:$0xf]
      %v200 = vld [vmem:[%s166 + $0x64] sm:$0xf]
      %v201 = vld [vmem:[%s166 + $0x68] sm:$0xf]
      %v202 = vld [vmem:[%s166 + $0x6c] sm:$0xf]
      %v203 = vld [vmem:[%s166 + $0x70] sm:$0xf]
      %v204 = vld [vmem:[%s166 + $0x74] sm:$0xf]
      %v205 = vld [vmem:[%s166 + $0x78] sm:$0xf]
      %v206 = vld [vmem:[%s166 + $0x7c] sm:$0xf]
      %v207 = vld [vmem:[%s166 + $0x80] sm:$0xf]
      %v208 = vld [vmem:[%s166 + $0x84] sm:$0xf]
      %v209 = vld [vmem:[%s166 + $0x88] sm:$0xf]
      %v210 = vld [vmem:[%s166 + $0x8c] sm:$0xf]
      %v211 = vld [vmem:[%s166 + $0x90] sm:$0xf]
      %v212 = vld [vmem:[%s166 + $0x94] sm:$0xf]
      %v213 = vld [vmem:[%s166 + $0x98] sm:$0xf]
      %v214 = vld [vmem:[%s166 + $0x9c] sm:$0xf]
      %v215 = vld [vmem:[%s166 + $0xa0] sm:$0xf]
      %v216 = vld [vmem:[%s166 + $0xa4] sm:$0xf]
      %v217 = vld [vmem:[%s166 + $0xa8] sm:$0xf]
      %v218 = vld [vmem:[%s166 + $0xac] sm:$0xf]
      %v219 = vld [vmem:[%s166 + $0xb0] sm:$0xf]
      %v220 = vld [vmem:[%s166 + $0xb4] sm:$0xf]
      %v221 = vld [vmem:[%s166 + $0xb8] sm:$0xf]
      %v222 = vld [vmem:[%s166 + $0xbc] sm:$0xf]
      %v223 = vld [vmem:[%s166 + $0xc0] sm:$0xf]
      %v224 = vld [vmem:[%s166 + $0xc4] sm:$0xf]
      %v225 = vld [vmem:[%s166 + $0xc8] sm:$0xf]
      %v226 = vld [vmem:[%s166 + $0xcc] sm:$0xf]
      %v227 = vld [vmem:[%s166 + $0xd0] sm:$0xf]
      %v228 = vld [vmem:[%s166 + $0xd4] sm:$0xf]
      %v229 = vld [vmem:[%s166 + $0xd8] sm:$0xf]
      %v230 = vld [vmem:[%s166 + $0xdc] sm:$0xf]
      %v231 = vld [vmem:[%s166 + $0xe0] sm:$0xf]
      %v232 = vld [vmem:[%s166 + $0xe4] sm:$0xf]
      %v233 = vld [vmem:[%s166 + $0xe8] sm:$0xf]
      %v234 = vld [vmem:[%s166 + $0xec] sm:$0xf]
      %v235 = vld [vmem:[%s166 + $0xf0] sm:$0xf]
      %v236 = vld [vmem:[%s166 + $0xf4] sm:$0xf]
      %v237 = vld [vmem:[%s166 + $0xf8] sm:$0xf]
      %v238 = vld [vmem:[%s166 + $0xfc] sm:$0xf]
      %v239 = vld [vmem:[%s1] sm:$0x3]
      %v240 = vld [vmem:[%s2] sm:$0x1]
      %v242 = vlaneseq
      %v243 = vshrl.u32 %v242, 7
      %v244 = vsub.s32 0, %v243
      %v245 = vrot.slane %v240, %v244
      %v311 = vunpack.c.l.b16 %v175
      %v312 = vunpack.c.l.b16 %v176
      %v313 = vunpack.c.l.b16 %v177
      %v314 = vunpack.c.l.b16 %v178
      %v315 = vunpack.c.l.b16 %v179
      %v316 = vunpack.c.l.b16 %v180
      %v317 = vunpack.c.l.b16 %v181
      %v318 = vunpack.c.l.b16 %v182
      %v319 = vunpack.c.l.b16 %v183
      %v320 = vunpack.c.l.b16 %v184
      %v321 = vunpack.c.l.b16 %v185
      %v322 = vunpack.c.l.b16 %v186
      %v323 = vunpack.c.l.b16 %v187
      %v324 = vunpack.c.l.b16 %v188
      %v325 = vunpack.c.l.b16 %v189
      %v326 = vunpack.c.l.b16 %v190
      %v327 = vunpack.c.l.b16 %v191
      %v328 = vunpack.c.l.b16 %v192
      %v329 = vunpack.c.l.b16 %v193
      %v330 = vunpack.c.l.b16 %v194
      %v331 = vunpack.c.l.b16 %v195
      %v332 = vunpack.c.l.b16 %v196
      %v333 = vunpack.c.l.b16 %v197
      %v334 = vunpack.c.l.b16 %v198
      %v335 = vunpack.c.l.b16 %v199
      %v336 = vunpack.c.l.b16 %v200
      %v337 = vunpack.c.l.b16 %v201
      %v338 = vunpack.c.l.b16 %v202
      %v339 = vunpack.c.l.b16 %v203
      %v340 = vunpack.c.l.b16 %v204
      %v341 = vunpack.c.l.b16 %v205
      %v342 = vunpack.c.l.b16 %v206
      %v343 = vunpack.c.l.b16 %v207
      %v344 = vunpack.c.l.b16 %v208
      %v345 = vunpack.c.l.b16 %v209
      %v346 = vunpack.c.l.b16 %v210
      %v347 = vunpack.c.l.b16 %v211
      %v348 = vunpack.c.l.b16 %v212
      %v349 = vunpack.c.l.b16 %v213
      %v350 = vunpack.c.l.b16 %v214
      %v351 = vunpack.c.l.b16 %v215
      %v352 = vunpack.c.l.b16 %v216
      %v353 = vunpack.c.l.b16 %v217
      %v354 = vunpack.c.l.b16 %v218
      %v355 = vunpack.c.l.b16 %v219
      %v356 = vunpack.c.l.b16 %v220
      %v357 = vunpack.c.l.b16 %v221
      %v358 = vunpack.c.l.b16 %v222
      %v359 = vunpack.c.l.b16 %v223
      %v360 = vunpack.c.l.b16 %v224
      %v361 = vunpack.c.l.b16 %v225
      %v362 = vunpack.c.l.b16 %v226
      %v363 = vunpack.c.l.b16 %v227
      %v364 = vunpack.c.l.b16 %v228
      %v365 = vunpack.c.l.b16 %v229
      %v366 = vunpack.c.l.b16 %v230
      %v367 = vunpack.c.l.b16 %v231
      %v368 = vunpack.c.l.b16 %v232
      %v369 = vunpack.c.l.b16 %v233
      %v370 = vunpack.c.l.b16 %v234
      %v371 = vunpack.c.l.b16 %v235
      %v372 = vunpack.c.l.b16 %v236
      %v373 = vunpack.c.l.b16 %v237
      %v374 = vunpack.c.l.b16 %v238
      %v375 = vpack.c.b16 %v312, %v311
      %v376 = vpack.c.b16 %v314, %v313
      %v377 = vpack.c.b16 %v316, %v315
      %v378 = vpack.c.b16 %v318, %v317
      %v379 = vpack.c.b16 %v320, %v319
      %v380 = vpack.c.b16 %v322, %v321
      %v381 = vpack.c.b16 %v324, %v323
      %v382 = vpack.c.b16 %v326, %v325
      %v383 = vpack.c.b16 %v328, %v327
      %v384 = vpack.c.b16 %v330, %v329
      %v385 = vpack.c.b16 %v332, %v331
      %v386 = vpack.c.b16 %v334, %v333
      %v387 = vpack.c.b16 %v336, %v335
      %v388 = vpack.c.b16 %v338, %v337
      %v389 = vpack.c.b16 %v340, %v339
      %v390 = vpack.c.b16 %v342, %v341
      %v391 = vpack.c.b16 %v344, %v343
      %v392 = vpack.c.b16 %v346, %v345
      %v393 = vpack.c.b16 %v348, %v347
      %v394 = vpack.c.b16 %v350, %v349
      %v395 = vpack.c.b16 %v352, %v351
      %v396 = vpack.c.b16 %v354, %v353
      %v397 = vpack.c.b16 %v356, %v355
      %v398 = vpack.c.b16 %v358, %v357
      %v399 = vpack.c.b16 %v360, %v359
      %v400 = vpack.c.b16 %v362, %v361
      %v401 = vpack.c.b16 %v364, %v363
      %v402 = vpack.c.b16 %v366, %v365
      %v403 = vpack.c.b16 %v368, %v367
      %v404 = vpack.c.b16 %v370, %v369
      %v405 = vpack.c.b16 %v372, %v371
      %v406 = vpack.c.b16 %v374, %v373
      %vm407 = vcmask 23552
      %v409 = vsel %vm407, %v375, 0
      %v412 = vsel %vm407, %v376, 0
      %v415 = vsel %vm407, %v377, 0
      %v418 = vsel %vm407, %v378, 0
      %v421 = vsel %vm407, %v379, 0
      %v424 = vsel %vm407, %v380, 0
      %v427 = vsel %vm407, %v381, 0
      %v430 = vsel %vm407, %v382, 0
      %v433 = vsel %vm407, %v383, 0
      %v436 = vsel %vm407, %v384, 0
      %v439 = vsel %vm407, %v385, 0
      %v442 = vsel %vm407, %v386, 0
      %v445 = vsel %vm407, %v387, 0
      %v448 = vsel %vm407, %v388, 0
      %v451 = vsel %vm407, %v389, 0
      %v454 = vsel %vm407, %v390, 0
      %v457 = vsel %vm407, %v391, 0
      %v460 = vsel %vm407, %v392, 0
      %v463 = vsel %vm407, %v393, 0
      %v466 = vsel %vm407, %v394, 0
      %v469 = vsel %vm407, %v395, 0
      %v472 = vsel %vm407, %v396, 0
      %v475 = vsel %vm407, %v397, 0
      %v478 = vsel %vm407, %v398, 0
      %v481 = vsel %vm407, %v399, 0
      %v484 = vsel %vm407, %v400, 0
      %v487 = vsel %vm407, %v401, 0
      %v490 = vsel %vm407, %v402, 0
      %v493 = vsel %vm407, %v403, 0
      %v496 = vsel %vm407, %v404, 0
      %v499 = vsel %vm407, %v405, 0
      %v502 = vsel %vm407, %v406, 0
      %vm504 = vcmask 1040384
      %vm505 = vcmask 1041408
      %v506 = vsel %vm504, 4294967295, 65535
      %v507 = vsel %vm505, %v506, 0
      %v509 = vand.u32 %v239, %v507
      %511 = vmatprep.subr.bf16.mxu0 0
      %512 = vmatpush1.bf16.msra.mxu0 %v509
      %513 = vmatprep.subr.bf16.mxu0 0
      %514 = vmatpush1.bf16.msra.mxu0 0
      %515 = vmatprep.subr.bf16.mxu0 0
      %516 = vmatpush1.bf16.msra.mxu0 0
      %517 = vmatprep.subr.bf16.mxu0 0
      %518 = vmatpush1.bf16.msra.mxu0 0
      %519 = vmatprep.subr.bf16.mxu0 0
      %520 = vmatpush1.bf16.msra.mxu0 0
      %521 = vmatprep.subr.bf16.mxu0 0
      %522 = vmatpush1.bf16.msra.mxu0 0
      %523 = vmatprep.subr.bf16.mxu0 0
      %524 = vmatpush1.bf16.msra.mxu0 0
      %525 = vmatprep.subr.bf16.mxu0 0
      %526 = vmatpush1.bf16.msra.mxu0 0
      %527 = vmatprep.subr.bf16.mxu0 0
      %528 = vmatpush1.bf16.msra.mxu0 0
      %529 = vmatprep.subr.bf16.mxu0 0
      %530 = vmatpush1.bf16.msra.mxu0 0
      %531 = vmatprep.subr.bf16.mxu0 0
      %532 = vmatpush1.bf16.msra.mxu0 0
      %533 = vmatprep.subr.bf16.mxu0 0
      %534 = vmatpush1.bf16.msra.mxu0 0
      %535 = vmatprep.subr.bf16.mxu0 0
      %536 = vmatpush1.bf16.msra.mxu0 0
      %537 = vmatprep.subr.bf16.mxu0 0
      %538 = vmatpush1.bf16.msra.mxu0 0
      %539 = vmatprep.subr.bf16.mxu0 0
      %540 = vmatpush1.bf16.msra.mxu0 0
      %541 = vmatprep.subr.bf16.mxu0 0
      %542 = vmatpush1.bf16.msra.mxu0 0
      %543 = vmatprep.mubr.bf16.mxu0 0
      %544 = vmatmul.mubr.bf16.gmra.mrb[0].mxu0 %v409
      %v545 = vpop.f32.mrb[0].mxu0
      %v546 = vadd.f32 %v245, %v545
      %v547 = vpop.f32.mrb[0].mxu0
      %v548 = vpop.f32.mrb[0].mxu0
      %v549 = vadd.f32 %v245, %v548
      %v550 = vpop.f32.mrb[0].mxu0
      %551 = vmatprep.mubr.bf16.mxu0 0
      %552 = vmatmul.mubr.bf16.gmra.mrb[0].mxu0 %v412
      %v553 = vpop.f32.mrb[0].mxu0
      %v554 = vadd.f32 %v245, %v553
      %v555 = vpop.f32.mrb[0].mxu0
      %v556 = vpop.f32.mrb[0].mxu0
      %v557 = vadd.f32 %v245, %v556
      %v558 = vpop.f32.mrb[0].mxu0
      %559 = vmatprep.mubr.bf16.mxu0 0
      %560 = vmatmul.mubr.bf16.gmra.mrb[0].mxu0 %v415
      %v561 = vpop.f32.mrb[0].mxu0
      %v562 = vadd.f32 %v245, %v561
      %v563 = vpop.f32.mrb[0].mxu0
      %v564 = vpop.f32.mrb[0].mxu0
      %v565 = vadd.f32 %v245, %v564
      %v566 = vpop.f32.mrb[0].mxu0
      %567 = vmatprep.mubr.bf16.mxu0 0
      %568 = vmatmul.mubr.bf16.gmra.mrb[0].mxu0 %v418
      %v569 = vpop.f32.mrb[0].mxu0
      %v570 = vadd.f32 %v245, %v569
      %v571 = vpop.f32.mrb[0].mxu0
      %v572 = vpop.f32.mrb[0].mxu0
      %v573 = vadd.f32 %v245, %v572
      %v574 = vpop.f32.mrb[0].mxu0
      %575 = vmatprep.mubr.bf16.mxu0 0
      %576 = vmatmul.mubr.bf16.gmra.mrb[0].mxu0 %v421
      %v577 = vpop.f32.mrb[0].mxu0
      %v578 = vadd.f32 %v245, %v577
      %v579 = vpop.f32.mrb[0].mxu0
      %v580 = vpop.f32.mrb[0].mxu0
      %v581 = vadd.f32 %v245, %v580
      %v582 = vpop.f32.mrb[0].mxu0
      %583 = vmatprep.mubr.bf16.mxu0 0
      %584 = vmatmul.mubr.bf16.gmra.mrb[0].mxu0 %v424
      %v585 = vpop.f32.mrb[0].mxu0
      %v586 = vadd.f32 %v245, %v585
      %v587 = vpop.f32.mrb[0].mxu0
      %v588 = vpop.f32.mrb[0].mxu0
      %v589 = vadd.f32 %v245, %v588
      %v590 = vpop.f32.mrb[0].mxu0
      %591 = vmatprep.mubr.bf16.mxu0 0
      %592 = vmatmul.mubr.bf16.gmra.mrb[0].mxu0 %v427
      %v593 = vpop.f32.mrb[0].mxu0
      %v594 = vadd.f32 %v245, %v593
      %v595 = vpop.f32.mrb[0].mxu0
      %v596 = vpop.f32.mrb[0].mxu0
      %v597 = vadd.f32 %v245, %v596
      %v598 = vpop.f32.mrb[0].mxu0
      %599 = vmatprep.mubr.bf16.mxu0 0
      %600 = vmatmul.mubr.bf16.gmra.mrb[0].mxu0 %v430
      %v601 = vpop.f32.mrb[0].mxu0
      %v602 = vadd.f32 %v245, %v601
      %v603 = vpop.f32.mrb[0].mxu0
      %v604 = vpop.f32.mrb[0].mxu0
      %v605 = vadd.f32 %v245, %v604
      %v606 = vpop.f32.mrb[0].mxu0
      %607 = vmatprep.mubr.bf16.mxu0 0
      %608 = vmatmul.mubr.bf16.gmra.mrb[0].mxu0 %v433
      %v609 = vpop.f32.mrb[0].mxu0
      %v610 = vadd.f32 %v245, %v609
      %v611 = vpop.f32.mrb[0].mxu0
      %v612 = vpop.f32.mrb[0].mxu0
      %v613 = vadd.f32 %v245, %v612
      %v614 = vpop.f32.mrb[0].mxu0
      %615 = vmatprep.mubr.bf16.mxu0 0
      %616 = vmatmul.mubr.bf16.gmra.mrb[0].mxu0 %v436
      %v617 = vpop.f32.mrb[0].mxu0
      %v618 = vadd.f32 %v245, %v617
      %v619 = vpop.f32.mrb[0].mxu0
      %v620 = vpop.f32.mrb[0].mxu0
      %v621 = vadd.f32 %v245, %v620
      %v622 = vpop.f32.mrb[0].mxu0
      %623 = vmatprep.mubr.bf16.mxu0 0
      %624 = vmatmul.mubr.bf16.gmra.mrb[0].mxu0 %v439
      %v625 = vpop.f32.mrb[0].mxu0
      %v626 = vadd.f32 %v245, %v625
      %v627 = vpop.f32.mrb[0].mxu0
      %v628 = vpop.f32.mrb[0].mxu0
      %v629 = vadd.f32 %v245, %v628
      %v630 = vpop.f32.mrb[0].mxu0
      %631 = vmatprep.mubr.bf16.mxu0 0
      %632 = vmatmul.mubr.bf16.gmra.mrb[0].mxu0 %v442
      %v633 = vpop.f32.mrb[0].mxu0
      %v634 = vadd.f32 %v245, %v633
      %v635 = vpop.f32.mrb[0].mxu0
      %v636 = vpop.f32.mrb[0].mxu0
      %v637 = vadd.f32 %v245, %v636
      %v638 = vpop.f32.mrb[0].mxu0
      %639 = vmatprep.mubr.bf16.mxu0 0
      %640 = vmatmul.mubr.bf16.gmra.mrb[0].mxu0 %v445
      %v641 = vpop.f32.mrb[0].mxu0
      %v642 = vadd.f32 %v245, %v641
      %v643 = vpop.f32.mrb[0].mxu0
      %v644 = vpop.f32.mrb[0].mxu0
      %v645 = vadd.f32 %v245, %v644
      %v646 = vpop.f32.mrb[0].mxu0
      %647 = vmatprep.mubr.bf16.mxu0 0
      %648 = vmatmul.mubr.bf16.gmra.mrb[0].mxu0 %v448
      %v649 = vpop.f32.mrb[0].mxu0
      %v650 = vadd.f32 %v245, %v649
      %v651 = vpop.f32.mrb[0].mxu0
      %v652 = vpop.f32.mrb[0].mxu0
      %v653 = vadd.f32 %v245, %v652
      %v654 = vpop.f32.mrb[0].mxu0
      %655 = vmatprep.mubr.bf16.mxu0 0
      %656 = vmatmul.mubr.bf16.gmra.mrb[0].mxu0 %v451
      %v657 = vpop.f32.mrb[0].mxu0
      %v658 = vadd.f32 %v245, %v657
      %v659 = vpop.f32.mrb[0].mxu0
      %v660 = vpop.f32.mrb[0].mxu0
      %v661 = vadd.f32 %v245, %v660
      %v662 = vpop.f32.mrb[0].mxu0
      %663 = vmatprep.mubr.bf16.mxu0 0
      %664 = vmatmul.mubr.bf16.gmra.mrb[0].mxu0 %v454
      %v665 = vpop.f32.mrb[0].mxu0
      %v666 = vadd.f32 %v245, %v665
      %v667 = vpop.f32.mrb[0].mxu0
      %v668 = vpop.f32.mrb[0].mxu0
      %v669 = vadd.f32 %v245, %v668
      %v670 = vpop.f32.mrb[0].mxu0
      %671 = vmatprep.mubr.bf16.mxu0 0
      %672 = vmatmul.mubr.bf16.gmra.mrb[0].mxu0 %v457
      %v673 = vpop.f32.mrb[0].mxu0
      %v674 = vadd.f32 %v245, %v673
      %v675 = vpop.f32.mrb[0].mxu0
      %v676 = vpop.f32.mrb[0].mxu0
      %v677 = vadd.f32 %v245, %v676
      %v678 = vpop.f32.mrb[0].mxu0
      %679 = vmatprep.mubr.bf16.mxu0 0
      %680 = vmatmul.mubr.bf16.gmra.mrb[0].mxu0 %v460
      %v681 = vpop.f32.mrb[0].mxu0
      %v682 = vadd.f32 %v245, %v681
      %v683 = vpop.f32.mrb[0].mxu0
      %v684 = vpop.f32.mrb[0].mxu0
      %v685 = vadd.f32 %v245, %v684
      %v686 = vpop.f32.mrb[0].mxu0
      %687 = vmatprep.mubr.bf16.mxu0 0
      %688 = vmatmul.mubr.bf16.gmra.mrb[0].mxu0 %v463
      %v689 = vpop.f32.mrb[0].mxu0
      %v690 = vadd.f32 %v245, %v689
      %v691 = vpop.f32.mrb[0].mxu0
      %v692 = vpop.f32.mrb[0].mxu0
      %v693 = vadd.f32 %v245, %v692
      %v694 = vpop.f32.mrb[0].mxu0
      %695 = vmatprep.mubr.bf16.mxu0 0
      %696 = vmatmul.mubr.bf16.gmra.mrb[0].mxu0 %v466
      %v697 = vpop.f32.mrb[0].mxu0
      %v698 = vadd.f32 %v245, %v697
      %v699 = vpop.f32.mrb[0].mxu0
      %v700 = vpop.f32.mrb[0].mxu0
      %v701 = vadd.f32 %v245, %v700
      %v702 = vpop.f32.mrb[0].mxu0
      %703 = vmatprep.mubr.bf16.mxu0 0
      %704 = vmatmul.mubr.bf16.gmra.mrb[0].mxu0 %v469
      %v705 = vpop.f32.mrb[0].mxu0
      %v706 = vadd.f32 %v245, %v705
      %v707 = vpop.f32.mrb[0].mxu0
      %v708 = vpop.f32.mrb[0].mxu0
      %v709 = vadd.f32 %v245, %v708
      %v710 = vpop.f32.mrb[0].mxu0
      %711 = vmatprep.mubr.bf16.mxu0 0
      %712 = vmatmul.mubr.bf16.gmra.mrb[0].mxu0 %v472
      %v713 = vpop.f32.mrb[0].mxu0
      %v714 = vadd.f32 %v245, %v713
      %v715 = vpop.f32.mrb[0].mxu0
      %v716 = vpop.f32.mrb[0].mxu0
      %v717 = vadd.f32 %v245, %v716
      %v718 = vpop.f32.mrb[0].mxu0
      %719 = vmatprep.mubr.bf16.mxu0 0
      %720 = vmatmul.mubr.bf16.gmra.mrb[0].mxu0 %v475
      %v721 = vpop.f32.mrb[0].mxu0
      %v722 = vadd.f32 %v245, %v721
      %v723 = vpop.f32.mrb[0].mxu0
      %v724 = vpop.f32.mrb[0].mxu0
      %v725 = vadd.f32 %v245, %v724
      %v726 = vpop.f32.mrb[0].mxu0
      %727 = vmatprep.mubr.bf16.mxu0 0
      %728 = vmatmul.mubr.bf16.gmra.mrb[0].mxu0 %v478
      %v729 = vpop.f32.mrb[0].mxu0
      %v730 = vadd.f32 %v245, %v729
      %v731 = vpop.f32.mrb[0].mxu0
      %v732 = vpop.f32.mrb[0].mxu0
      %v733 = vadd.f32 %v245, %v732
      %v734 = vpop.f32.mrb[0].mxu0
      %735 = vmatprep.mubr.bf16.mxu0 0
      %736 = vmatmul.mubr.bf16.gmra.mrb[0].mxu0 %v481
      %v737 = vpop.f32.mrb[0].mxu0
      %v738 = vadd.f32 %v245, %v737
      %v739 = vpop.f32.mrb[0].mxu0
      %v740 = vpop.f32.mrb[0].mxu0
      %v741 = vadd.f32 %v245, %v740
      %v742 = vpop.f32.mrb[0].mxu0
      %743 = vmatprep.mubr.bf16.mxu0 0
      %744 = vmatmul.mubr.bf16.gmra.mrb[0].mxu0 %v484
      %v745 = vpop.f32.mrb[0].mxu0
      %v746 = vadd.f32 %v245, %v745
      %v747 = vpop.f32.mrb[0].mxu0
      %v748 = vpop.f32.mrb[0].mxu0
      %v749 = vadd.f32 %v245, %v748
      %v750 = vpop.f32.mrb[0].mxu0
      %751 = vmatprep.mubr.bf16.mxu0 0
      %752 = vmatmul.mubr.bf16.gmra.mrb[0].mxu0 %v487
      %v753 = vpop.f32.mrb[0].mxu0
      %v754 = vadd.f32 %v245, %v753
      %v755 = vpop.f32.mrb[0].mxu0
      %v756 = vpop.f32.mrb[0].mxu0
      %v757 = vadd.f32 %v245, %v756
      %v758 = vpop.f32.mrb[0].mxu0
      %759 = vmatprep.mubr.bf16.mxu0 0
      %760 = vmatmul.mubr.bf16.gmra.mrb[0].mxu0 %v490
      %v761 = vpop.f32.mrb[0].mxu0
      %v762 = vadd.f32 %v245, %v761
      %v763 = vpop.f32.mrb[0].mxu0
      %v764 = vpop.f32.mrb[0].mxu0
      %v765 = vadd.f32 %v245, %v764
      %v766 = vpop.f32.mrb[0].mxu0
      %767 = vmatprep.mubr.bf16.mxu0 0
      %768 = vmatmul.mubr.bf16.gmra.mrb[0].mxu0 %v493
      %v769 = vpop.f32.mrb[0].mxu0
      %v770 = vadd.f32 %v245, %v769
      %v771 = vpop.f32.mrb[0].mxu0
      %v772 = vpop.f32.mrb[0].mxu0
      %v773 = vadd.f32 %v245, %v772
      %v774 = vpop.f32.mrb[0].mxu0
      %775 = vmatprep.mubr.bf16.mxu0 0
      %776 = vmatmul.mubr.bf16.gmra.mrb[0].mxu0 %v496
      %v777 = vpop.f32.mrb[0].mxu0
      %v778 = vadd.f32 %v245, %v777
      %v779 = vpop.f32.mrb[0].mxu0
      %v780 = vpop.f32.mrb[0].mxu0
      %v781 = vadd.f32 %v245, %v780
      %v782 = vpop.f32.mrb[0].mxu0
      %783 = vmatprep.mubr.bf16.mxu0 0
      %784 = vmatmul.mubr.bf16.gmra.mrb[0].mxu0 %v499
      %v785 = vpop.f32.mrb[0].mxu0
      %v786 = vadd.f32 %v245, %v785
      %v787 = vpop.f32.mrb[0].mxu0
      %v788 = vpop.f32.mrb[0].mxu0
      %v789 = vadd.f32 %v245, %v788
      %v790 = vpop.f32.mrb[0].mxu0
      %791 = vmatprep.mubr.bf16.mxu0 0
      %792 = vmatmul.mubr.bf16.gmra.mrb[0].mxu0 %v502
      %v793 = vpop.f32.mrb[0].mxu0
      %v794 = vadd.f32 %v245, %v793
      %v795 = vpop.f32.mrb[0].mxu0
      %v796 = vpop.f32.mrb[0].mxu0
      %v797 = vadd.f32 %v245, %v796
      %v798 = vpop.f32.mrb[0].mxu0
      %799 = vdwg.mxu0
      %v800 = vmax.f32 %v546, 0.0
      %v801 = vmax.f32 %v549, 0.0
      %v802 = vmax.f32 %v554, 0.0
      %v803 = vmax.f32 %v557, 0.0
      %v804 = vmax.f32 %v562, 0.0
      %v805 = vmax.f32 %v565, 0.0
      %v806 = vmax.f32 %v570, 0.0
      %v807 = vmax.f32 %v573, 0.0
      %v808 = vmax.f32 %v578, 0.0
      %v809 = vmax.f32 %v581, 0.0
      %v810 = vmax.f32 %v586, 0.0
      %v811 = vmax.f32 %v589, 0.0
      %v812 = vmax.f32 %v594, 0.0
      %v813 = vmax.f32 %v597, 0.0
      %v814 = vmax.f32 %v602, 0.0
      %v815 = vmax.f32 %v605, 0.0
      %v816 = vmax.f32 %v610, 0.0
      %v817 = vmax.f32 %v613, 0.0
      %v818 = vmax.f32 %v618, 0.0
      %v819 = vmax.f32 %v621, 0.0
      %v820 = vmax.f32 %v626, 0.0
      %v821 = vmax.f32 %v629, 0.0
      %v822 = vmax.f32 %v634, 0.0
      %v823 = vmax.f32 %v637, 0.0
      %v824 = vmax.f32 %v642, 0.0
      %v825 = vmax.f32 %v645, 0.0
      %v826 = vmax.f32 %v650, 0.0
      %v827 = vmax.f32 %v653, 0.0
      %v828 = vmax.f32 %v658, 0.0
      %v829 = vmax.f32 %v661, 0.0
      %v830 = vmax.f32 %v666, 0.0
      %v831 = vmax.f32 %v669, 0.0
      %v832 = vmax.f32 %v674, 0.0
      %v833 = vmax.f32 %v677, 0.0
      %v834 = vmax.f32 %v682, 0.0
      %v835 = vmax.f32 %v685, 0.0
      %v836 = vmax.f32 %v690, 0.0
      %v837 = vmax.f32 %v693, 0.0
      %v838 = vmax.f32 %v698, 0.0
      %v839 = vmax.f32 %v701, 0.0
      %v840 = vmax.f32 %v706, 0.0
      %v841 = vmax.f32 %v709, 0.0
      %v842 = vmax.f32 %v714, 0.0
      %v843 = vmax.f32 %v717, 0.0
      %v844 = vmax.f32 %v722, 0.0
      %v845 = vmax.f32 %v725, 0.0
      %v846 = vmax.f32 %v730, 0.0
      %v847 = vmax.f32 %v733, 0.0
      %v848 = vmax.f32 %v738, 0.0
      %v849 = vmax.f32 %v741, 0.0
      %v850 = vmax.f32 %v746, 0.0
      %v851 = vmax.f32 %v749, 0.0
      %v852 = vmax.f32 %v754, 0.0
      %v853 = vmax.f32 %v757, 0.0
      %v854 = vmax.f32 %v762, 0.0
      %v855 = vmax.f32 %v765, 0.0
      %v856 = vmax.f32 %v770, 0.0
      %v857 = vmax.f32 %v773, 0.0
      %v858 = vmax.f32 %v778, 0.0
      %v859 = vmax.f32 %v781, 0.0
      %v860 = vmax.f32 %v786, 0.0
      %v861 = vmax.f32 %v789, 0.0
      %v862 = vmax.f32 %v794, 0.0
      %v863 = vmax.f32 %v797, 0.0
      %v864 = vpack.c.bf16 %v801, %v800
      %v865 = vpack.c.bf16 %v803, %v802
      %v866 = vpack.c.bf16 %v805, %v804
      %v867 = vpack.c.bf16 %v807, %v806
      %v868 = vpack.c.bf16 %v809, %v808
      %v869 = vpack.c.bf16 %v811, %v810
      %v870 = vpack.c.bf16 %v813, %v812
      %v871 = vpack.c.bf16 %v815, %v814
      %v872 = vpack.c.bf16 %v817, %v816
      %v873 = vpack.c.bf16 %v819, %v818
      %v874 = vpack.c.bf16 %v821, %v820
      %v875 = vpack.c.bf16 %v823, %v822
      %v876 = vpack.c.bf16 %v825, %v824
      %v877 = vpack.c.bf16 %v827, %v826
      %v878 = vpack.c.bf16 %v829, %v828
      %v879 = vpack.c.bf16 %v831, %v830
      %v880 = vpack.c.bf16 %v833, %v832
      %v881 = vpack.c.bf16 %v835, %v834
      %v882 = vpack.c.bf16 %v837, %v836
      %v883 = vpack.c.bf16 %v839, %v838
      %v884 = vpack.c.bf16 %v841, %v840
      %v885 = vpack.c.bf16 %v843, %v842
      %v886 = vpack.c.bf16 %v845, %v844
      %v887 = vpack.c.bf16 %v847, %v846
      %v888 = vpack.c.bf16 %v849, %v848
      %v889 = vpack.c.bf16 %v851, %v850
      %v890 = vpack.c.bf16 %v853, %v852
      %v891 = vpack.c.bf16 %v855, %v854
      %v892 = vpack.c.bf16 %v857, %v856
      %v893 = vpack.c.bf16 %v859, %v858
      %v894 = vpack.c.bf16 %v861, %v860
      %v895 = vpack.c.bf16 %v863, %v862
      %v928 = vunpack.c.l.b16 %v864
      %v929 = vunpack.c.h.b16 %v864
      %v930 = vunpack.c.l.b16 %v865
      %v931 = vunpack.c.h.b16 %v865
      %v932 = vunpack.c.l.b16 %v866
      %v933 = vunpack.c.h.b16 %v866
      %v934 = vunpack.c.l.b16 %v867
      %v935 = vunpack.c.h.b16 %v867
      %v936 = vunpack.c.l.b16 %v868
      %v937 = vunpack.c.h.b16 %v868
      %v938 = vunpack.c.l.b16 %v869
      %v939 = vunpack.c.h.b16 %v869
      %v940 = vunpack.c.l.b16 %v870
      %v941 = vunpack.c.h.b16 %v870
      %v942 = vunpack.c.l.b16 %v871
      %v943 = vunpack.c.h.b16 %v871
      %v944 = vunpack.c.l.b16 %v872
      %v945 = vunpack.c.h.b16 %v872
      %v946 = vunpack.c.l.b16 %v873
      %v947 = vunpack.c.h.b16 %v873
      %v948 = vunpack.c.l.b16 %v874
      %v949 = vunpack.c.h.b16 %v874
      %v950 = vunpack.c.l.b16 %v875
      %v951 = vunpack.c.h.b16 %v875
      %v952 = vunpack.c.l.b16 %v876
      %v953 = vunpack.c.h.b16 %v876
      %v954 = vunpack.c.l.b16 %v877
      %v955 = vunpack.c.h.b16 %v877
      %v956 = vunpack.c.l.b16 %v878
      %v957 = vunpack.c.h.b16 %v878
      %v958 = vunpack.c.l.b16 %v879
      %v959 = vunpack.c.h.b16 %v879
      %v960 = vunpack.c.l.b16 %v880
      %v961 = vunpack.c.h.b16 %v880
      %v962 = vunpack.c.l.b16 %v881
      %v963 = vunpack.c.h.b16 %v881
      %v964 = vunpack.c.l.b16 %v882
      %v965 = vunpack.c.h.b16 %v882
      %v966 = vunpack.c.l.b16 %v883
      %v967 = vunpack.c.h.b16 %v883
      %v968 = vunpack.c.l.b16 %v884
      %v969 = vunpack.c.h.b16 %v884
      %v970 = vunpack.c.l.b16 %v885
      %v971 = vunpack.c.h.b16 %v885
      %v972 = vunpack.c.l.b16 %v886
      %v973 = vunpack.c.h.b16 %v886
      %v974 = vunpack.c.l.b16 %v887
      %v975 = vunpack.c.h.b16 %v887
      %v976 = vunpack.c.l.b16 %v888
      %v977 = vunpack.c.h.b16 %v888
      %v978 = vunpack.c.l.b16 %v889
      %v979 = vunpack.c.h.b16 %v889
      %v980 = vunpack.c.l.b16 %v890
      %v981 = vunpack.c.h.b16 %v890
      %v982 = vunpack.c.l.b16 %v891
      %v983 = vunpack.c.h.b16 %v891
      %v984 = vunpack.c.l.b16 %v892
      %v985 = vunpack.c.h.b16 %v892
      %v986 = vunpack.c.l.b16 %v893
      %v987 = vunpack.c.h.b16 %v893
      %v988 = vunpack.c.l.b16 %v894
      %v989 = vunpack.c.h.b16 %v894
      %v990 = vunpack.c.l.b16 %v895
      %v991 = vunpack.c.h.b16 %v895
      %v992 = vpack.c.b16 %v928, %v928
      %v993 = vpack.c.b16 %v929, %v929
      %v994 = vpack.c.b16 %v930, %v930
      %v995 = vpack.c.b16 %v931, %v931
      %v996 = vpack.c.b16 %v932, %v932
      %v997 = vpack.c.b16 %v933, %v933
      %v998 = vpack.c.b16 %v934, %v934
      %v999 = vpack.c.b16 %v935, %v935
      %v1000 = vpack.c.b16 %v936, %v936
      %v1001 = vpack.c.b16 %v937, %v937
      %v1002 = vpack.c.b16 %v938, %v938
      %v1003 = vpack.c.b16 %v939, %v939
      %v1004 = vpack.c.b16 %v940, %v940
      %v1005 = vpack.c.b16 %v941, %v941
      %v1006 = vpack.c.b16 %v942, %v942
      %v1007 = vpack.c.b16 %v943, %v943
      %v1008 = vpack.c.b16 %v944, %v944
      %v1009 = vpack.c.b16 %v945, %v945
      %v1010 = vpack.c.b16 %v946, %v946
      %v1011 = vpack.c.b16 %v947, %v947
      %v1012 = vpack.c.b16 %v948, %v948
      %v1013 = vpack.c.b16 %v949, %v949
      %v1014 = vpack.c.b16 %v950, %v950
      %v1015 = vpack.c.b16 %v951, %v951
      %v1016 = vpack.c.b16 %v952, %v952
      %v1017 = vpack.c.b16 %v953, %v953
      %v1018 = vpack.c.b16 %v954, %v954
      %v1019 = vpack.c.b16 %v955, %v955
      %v1020 = vpack.c.b16 %v956, %v956
      %v1021 = vpack.c.b16 %v957, %v957
      %v1022 = vpack.c.b16 %v958, %v958
      %v1023 = vpack.c.b16 %v959, %v959
      %v1024 = vpack.c.b16 %v960, %v960
      %v1025 = vpack.c.b16 %v961, %v961
      %v1026 = vpack.c.b16 %v962, %v962
      %v1027 = vpack.c.b16 %v963, %v963
      %v1028 = vpack.c.b16 %v964, %v964
      %v1029 = vpack.c.b16 %v965, %v965
      %v1030 = vpack.c.b16 %v966, %v966
      %v1031 = vpack.c.b16 %v967, %v967
      %v1032 = vpack.c.b16 %v968, %v968
      %v1033 = vpack.c.b16 %v969, %v969
      %v1034 = vpack.c.b16 %v970, %v970
      %v1035 = vpack.c.b16 %v971, %v971
      %v1036 = vpack.c.b16 %v972, %v972
      %v1037 = vpack.c.b16 %v973, %v973
      %v1038 = vpack.c.b16 %v974, %v974
      %v1039 = vpack.c.b16 %v975, %v975
      %v1040 = vpack.c.b16 %v976, %v976
      %v1041 = vpack.c.b16 %v977, %v977
      %v1042 = vpack.c.b16 %v978, %v978
      %v1043 = vpack.c.b16 %v979, %v979
      %v1044 = vpack.c.b16 %v980, %v980
      %v1045 = vpack.c.b16 %v981, %v981
      %v1046 = vpack.c.b16 %v982, %v982
      %v1047 = vpack.c.b16 %v983, %v983
      %v1048 = vpack.c.b16 %v984, %v984
      %v1049 = vpack.c.b16 %v985, %v985
      %v1050 = vpack.c.b16 %v986, %v986
      %v1051 = vpack.c.b16 %v987, %v987
      %v1052 = vpack.c.b16 %v988, %v988
      %v1053 = vpack.c.b16 %v989, %v989
      %v1054 = vpack.c.b16 %v990, %v990
      %v1055 = vpack.c.b16 %v991, %v991
      %vm1120 = vcmask 257024
      %1121 = vst.msk [vmem:[%s172] sm:$0xf] %vm1120, %v992
      %1122 = vst.msk [vmem:[%s172 + $0x4] sm:$0xf] %vm1120, %v993
      %1123 = vst.msk [vmem:[%s172 + $0x8] sm:$0xf] %vm1120, %v994
      %1124 = vst.msk [vmem:[%s172 + $0xc] sm:$0xf] %vm1120, %v995
      %1125 = vst.msk [vmem:[%s172 + $0x10] sm:$0xf] %vm1120, %v996
      %1126 = vst.msk [vmem:[%s172 + $0x14] sm:$0xf] %vm1120, %v997
      %1127 = vst.msk [vmem:[%s172 + $0x18] sm:$0xf] %vm1120, %v998
      %1128 = vst.msk [vmem:[%s172 + $0x1c] sm:$0xf] %vm1120, %v999
      %1129 = vst.msk [vmem:[%s172 + $0x20] sm:$0xf] %vm1120, %v1000
      %1130 = vst.msk [vmem:[%s172 + $0x24] sm:$0xf] %vm1120, %v1001
      %1131 = vst.msk [vmem:[%s172 + $0x28] sm:$0xf] %vm1120, %v1002
      %1132 = vst.msk [vmem:[%s172 + $0x2c] sm:$0xf] %vm1120, %v1003
      %1133 = vst.msk [vmem:[%s172 + $0x30] sm:$0xf] %vm1120, %v1004
      %1134 = vst.msk [vmem:[%s172 + $0x34] sm:$0xf] %vm1120, %v1005
      %1135 = vst.msk [vmem:[%s172 + $0x38] sm:$0xf] %vm1120, %v1006
      %1136 = vst.msk [vmem:[%s172 + $0x3c] sm:$0xf] %vm1120, %v1007
      %1137 = vst.msk [vmem:[%s172 + $0x40] sm:$0xf] %vm1120, %v1008
      %1138 = vst.msk [vmem:[%s172 + $0x44] sm:$0xf] %vm1120, %v1009
      %1139 = vst.msk [vmem:[%s172 + $0x48] sm:$0xf] %vm1120, %v1010
      %1140 = vst.msk [vmem:[%s172 + $0x4c] sm:$0xf] %vm1120, %v1011
      %1141 = vst.msk [vmem:[%s172 + $0x50] sm:$0xf] %vm1120, %v1012
      %1142 = vst.msk [vmem:[%s172 + $0x54] sm:$0xf] %vm1120, %v1013
      %1143 = vst.msk [vmem:[%s172 + $0x58] sm:$0xf] %vm1120, %v1014
      %1144 = vst.msk [vmem:[%s172 + $0x5c] sm:$0xf] %vm1120, %v1015
      %1145 = vst.msk [vmem:[%s172 + $0x60] sm:$0xf] %vm1120, %v1016
      %1146 = vst.msk [vmem:[%s172 + $0x64] sm:$0xf] %vm1120, %v1017
      %1147 = vst.msk [vmem:[%s172 + $0x68] sm:$0xf] %vm1120, %v1018
      %1148 = vst.msk [vmem:[%s172 + $0x6c] sm:$0xf] %vm1120, %v1019
      %1149 = vst.msk [vmem:[%s172 + $0x70] sm:$0xf] %vm1120, %v1020
      %1150 = vst.msk [vmem:[%s172 + $0x74] sm:$0xf] %vm1120, %v1021
      %1151 = vst.msk [vmem:[%s172 + $0x78] sm:$0xf] %vm1120, %v1022
      %1152 = vst.msk [vmem:[%s172 + $0x7c] sm:$0xf] %vm1120, %v1023
      %1153 = vst.msk [vmem:[%s172 + $0x80] sm:$0xf] %vm1120, %v1024
      %1154 = vst.msk [vmem:[%s172 + $0x84] sm:$0xf] %vm1120, %v1025
      %1155 = vst.msk [vmem:[%s172 + $0x88] sm:$0xf] %vm1120, %v1026
      %1156 = vst.msk [vmem:[%s172 + $0x8c] sm:$0xf] %vm1120, %v1027
      %1157 = vst.msk [vmem:[%s172 + $0x90] sm:$0xf] %vm1120, %v1028
      %1158 = vst.msk [vmem:[%s172 + $0x94] sm:$0xf] %vm1120, %v1029
      %1159 = vst.msk [vmem:[%s172 + $0x98] sm:$0xf] %vm1120, %v1030
      %1160 = vst.msk [vmem:[%s172 + $0x9c] sm:$0xf] %vm1120, %v1031
      %1161 = vst.msk [vmem:[%s172 + $0xa0] sm:$0xf] %vm1120, %v1032
      %1162 = vst.msk [vmem:[%s172 + $0xa4] sm:$0xf] %vm1120, %v1033
      %1163 = vst.msk [vmem:[%s172 + $0xa8] sm:$0xf] %vm1120, %v1034
      %1164 = vst.msk [vmem:[%s172 + $0xac] sm:$0xf] %vm1120, %v1035
      %1165 = vst.msk [vmem:[%s172 + $0xb0] sm:$0xf] %vm1120, %v1036
      %1166 = vst.msk [vmem:[%s172 + $0xb4] sm:$0xf] %vm1120, %v1037
      %1167 = vst.msk [vmem:[%s172 + $0xb8] sm:$0xf] %vm1120, %v1038
      %1168 = vst.msk [vmem:[%s172 + $0xbc] sm:$0xf] %vm1120, %v1039
      %1169 = vst.msk [vmem:[%s172 + $0xc0] sm:$0xf] %vm1120, %v1040
      %1170 = vst.msk [vmem:[%s172 + $0xc4] sm:$0xf] %vm1120, %v1041
      %1171 = vst.msk [vmem:[%s172 + $0xc8] sm:$0xf] %vm1120, %v1042
      %1172 = vst.msk [vmem:[%s172 + $0xcc] sm:$0xf] %vm1120, %v1043
      %1173 = vst.msk [vmem:[%s172 + $0xd0] sm:$0xf] %vm1120, %v1044
      %1174 = vst.msk [vmem:[%s172 + $0xd4] sm:$0xf] %vm1120, %v1045
      %1175 = vst.msk [vmem:[%s172 + $0xd8] sm:$0xf] %vm1120, %v1046
      %1176 = vst.msk [vmem:[%s172 + $0xdc] sm:$0xf] %vm1120, %v1047
      %1177 = vst.msk [vmem:[%s172 + $0xe0] sm:$0xf] %vm1120, %v1048
      %1178 = vst.msk [vmem:[%s172 + $0xe4] sm:$0xf] %vm1120, %v1049
      %1179 = vst.msk [vmem:[%s172 + $0xe8] sm:$0xf] %vm1120, %v1050
      %1180 = vst.msk [vmem:[%s172 + $0xec] sm:$0xf] %vm1120, %v1051
      %1181 = vst.msk [vmem:[%s172 + $0xf0] sm:$0xf] %vm1120, %v1052
      %1182 = vst.msk [vmem:[%s172 + $0xf4] sm:$0xf] %vm1120, %v1053
      %1183 = vst.msk [vmem:[%s172 + $0xf8] sm:$0xf] %vm1120, %v1054
      %1184 = vst.msk [vmem:[%s172 + $0xfc] sm:$0xf] %vm1120, %v1055
      %s1185 = smul.u32 64, %s14
      %p1186 = scmp.lt.s32.totalorder %s1185, 191
      %s1187 = scalar_select %p1186, %s1185, 191
      %s1188 = smul.addr %s1187, 4
      %s1189 = scalar_lea.vmem %s3, %s1188
      // Predicated region
      $region33: #{forward.4} parent=31 // pred_check
        %p1190 = pneg %p100
      $region34: #{forward.4} parent=31 // pred_check_branch
        %1192 = sbr.rel (%p1190) target = $region36
      $region35: #{forward.4} parent=31 // pred_region
        %s1193 = smul.u32 64, %s14
      $region36: #{forward.4} parent=31 // pred_fallthru
        _
    $region32: #{forward.4} parent=5 // pred_fallthru
      _
    %p1194 = scmp.le.s32.totalorder 2, %s9
    // Predicated region
    $region37: #{forward.4} parent=5 // pred_check
      %p1195 = pneg %p1194
    $region38: #{forward.4} parent=5 // pred_check_branch
      %1197 = sbr.rel (%p1195) target = $region40
    $region39: #{forward.4} parent=5 // pred_region
      %s1198 = ssub.s32 %s9, 2
      // Predicated region
      $region41: #{forward.4} parent=39 // pred_check
        %p1199 = pneg %p106
      $region42: #{forward.4} parent=39 // pred_check_branch
        %1201 = sbr.rel (%p1199) target = $region44
      $region43: #{forward.4} parent=39 // pred_region
        %s1202 = smul.u32 64, %s15
        %p1203 = scmp.lt.s32.totalorder %s1202, 191
        %s1204 = scalar_select %p1203, %s1202, 191
        %s1205 = smul.addr %s1204, 4
        %s1206 = scalar_lea.vmem %s3, %s1205
      $region44: #{forward.4} parent=39 // pred_fallthru
        _
    $region40: #{forward.4} parent=5 // pred_fallthru
      _
  $region6: #{forward.4} parent=0 // loop_footer
    %s13 = sadd.s32 1, %s9
  $region7: #{forward.4} parent=0 // loop_footer_branch
    %8 = sbr.rel target = $region3
  $region8: #{forward.4} parent=0 // loop_exit
    _

// kernel: forward.5
$region0: #{forward.5}
  #allocation0 [shape = 'u32[]', space=smem, size = 0x4, offset = 0x4, fixed_abs, tag = 'smem constant byte address 0x4 - core index']
  #allocation1 [shape = 'u32[144,128]{1,0:T(1,128)}', space=vmem, size = 0x12000, scoped, tag = 'internal scratch']
  %s0 = inlined_call_operand.vmem [shape: bf16[384,32], index: 0, kind: input, shape index: {}]
  %s1 = inlined_call_operand.vmem [shape: bf16[32,32], index: 1, kind: input, shape index: {}]
  %s2 = inlined_call_operand.vmem [shape: f32[1,32], index: 2, kind: input, shape index: {}]
  %s3 = inlined_call_operand.vmem [shape: bf16[384,32], index: 3, kind: output, shape index: {}]
  %s4 = sld [smem:[#allocation0]]
  $region22: #{forward.5} parent=0
    _
  %s6 = ssub.s32 1, %s4
  %s7 = scalar_select 0, %s6, %s4
  // Predicated region
  $region2: #{forward.5} parent=0 // pred_check
    _
  $region3: #{forward.5} parent=0 // pred_check_branch
    %9 = sbr.rel (0) target = $region5
  $region4: #{forward.5} parent=0 // pred_region
    _
  $region5: #{forward.5} parent=0 // pred_fallthru
    _
  // Predicated region
  $region6: #{forward.5} parent=0 // pred_check
    _
  $region7: #{forward.5} parent=0 // pred_check_branch
    %11 = sbr.rel (0) target = $region9
  $region8: #{forward.5} parent=0 // pred_region
    _
  $region9: #{forward.5} parent=0 // pred_fallthru
    _
  // Predicated region
  $region10: #{forward.5} parent=0 // pred_check
    _
  $region11: #{forward.5} parent=0 // pred_check_branch
    %13 = sbr.rel (0) target = $region13
  $region12: #{forward.5} parent=0 // pred_region
    _
  $region13: #{forward.5} parent=0 // pred_fallthru
    _
  %v15 = vld [vmem:[%s0] sm:$0xf]
  %v16 = vld [vmem:[%s0 + $0x4] sm:$0xf]
  %v17 = vld [vmem:[%s0 + $0x8] sm:$0xf]
  %v18 = vld [vmem:[%s0 + $0xc] sm:$0xf]
  %v19 = vld [vmem:[%s0 + $0x10] sm:$0xf]
  %v20 = vld [vmem:[%s0 + $0x14] sm:$0xf]
  %v21 = vld [vmem:[%s0 + $0x18] sm:$0xf]
  %v22 = vld [vmem:[%s0 + $0x1c] sm:$0xf]
  %v23 = vld [vmem:[%s0 + $0x20] sm:$0xf]
  %v24 = vld [vmem:[%s0 + $0x24] sm:$0xf]
  %v25 = vld [vmem:[%s0 + $0x28] sm:$0xf]
  %v26 = vld [vmem:[%s0 + $0x2c] sm:$0xf]
  %v27 = vld [vmem:[%s0 + $0x30] sm:$0xf]
  %v28 = vld [vmem:[%s0 + $0x34] sm:$0xf]
  %v29 = vld [vmem:[%s0 + $0x38] sm:$0xf]
  %v30 = vld [vmem:[%s0 + $0x3c] sm:$0xf]
  %v31 = vld [vmem:[%s0 + $0x40] sm:$0xf]
  %v32 = vld [vmem:[%s0 + $0x44] sm:$0xf]
  %v33 = vld [vmem:[%s0 + $0x48] sm:$0xf]
  %v34 = vld [vmem:[%s0 + $0x4c] sm:$0xf]
  %v35 = vld [vmem:[%s0 + $0x50] sm:$0xf]
  %v36 = vld [vmem:[%s0 + $0x54] sm:$0xf]
  %v37 = vld [vmem:[%s0 + $0x58] sm:$0xf]
  %v38 = vld [vmem:[%s0 + $0x5c] sm:$0xf]
  %v39 = vld [vmem:[%s0 + $0x60] sm:$0xf]
  %v40 = vld [vmem:[%s0 + $0x64] sm:$0xf]
  %v41 = vld [vmem:[%s0 + $0x68] sm:$0xf]
  %v42 = vld [vmem:[%s0 + $0x6c] sm:$0xf]
  %v43 = vld [vmem:[%s0 + $0x70] sm:$0xf]
  %v44 = vld [vmem:[%s0 + $0x74] sm:$0xf]
  %v45 = vld [vmem:[%s0 + $0x78] sm:$0xf]
  %v46 = vld [vmem:[%s0 + $0x7c] sm:$0xf]
  %v47 = vld [vmem:[%s0 + $0x80] sm:$0xf]
  %v48 = vld [vmem:[%s0 + $0x84] sm:$0xf]
  %v49 = vld [vmem:[%s0 + $0x88] sm:$0xf]
  %v50 = vld [vmem:[%s0 + $0x8c] sm:$0xf]
  %v51 = vld [vmem:[%s0 + $0x90] sm:$0xf]
  %v52 = vld [vmem:[%s0 + $0x94] sm:$0xf]
  %v53 = vld [vmem:[%s0 + $0x98] sm:$0xf]
  %v54 = vld [vmem:[%s0 + $0x9c] sm:$0xf]
  %v55 = vld [vmem:[%s0 + $0xa0] sm:$0xf]
  %v56 = vld [vmem:[%s0 + $0xa4] sm:$0xf]
  %v57 = vld [vmem:[%s0 + $0xa8] sm:$0xf]
  %v58 = vld [vmem:[%s0 + $0xac] sm:$0xf]
  %v59 = vld [vmem:[%s0 + $0xb0] sm:$0xf]
  %v60 = vld [vmem:[%s0 + $0xb4] sm:$0xf]
  %v61 = vld [vmem:[%s0 + $0xb8] sm:$0xf]
  %v62 = vld [vmem:[%s0 + $0xbc] sm:$0xf]
  %v63 = vld [vmem:[%s1] sm:$0xf]
  %v64 = vld [vmem:[%s1 + $0x4] sm:$0xf]
  %v65 = vld [vmem:[%s1 + $0x8] sm:$0xf]
  %v66 = vld [vmem:[%s1 + $0xc] sm:$0xf]
  %v67 = vld [vmem:[%s2] sm:$0x1]
  %v69 = vlaneseq
  %v70 = vshrl.u32 %v69, 7
  %v71 = vsub.s32 0, %v70
  %v72 = vrot.slane %v67, %v71
  %v122 = vunpack.c.l.b16 %v15
  %v123 = vunpack.c.l.b16 %v16
  %v124 = vunpack.c.l.b16 %v17
  %v125 = vunpack.c.l.b16 %v18
  %v126 = vunpack.c.l.b16 %v19
  %v127 = vunpack.c.l.b16 %v20
  %v128 = vunpack.c.l.b16 %v21
  %v129 = vunpack.c.l.b16 %v22
  %v130 = vunpack.c.l.b16 %v23
  %v131 = vunpack.c.l.b16 %v24
  %v132 = vunpack.c.l.b16 %v25
  %v133 = vunpack.c.l.b16 %v26
  %v134 = vunpack.c.l.b16 %v27
  %v135 = vunpack.c.l.b16 %v28
  %v136 = vunpack.c.l.b16 %v29
  %v137 = vunpack.c.l.b16 %v30
  %v138 = vunpack.c.l.b16 %v31
  %v139 = vunpack.c.l.b16 %v32
  %v140 = vunpack.c.l.b16 %v33
  %v141 = vunpack.c.l.b16 %v34
  %v142 = vunpack.c.l.b16 %v35
  %v143 = vunpack.c.l.b16 %v36
  %v144 = vunpack.c.l.b16 %v37
  %v145 = vunpack.c.l.b16 %v38
  %v146 = vunpack.c.l.b16 %v39
  %v147 = vunpack.c.l.b16 %v40
  %v148 = vunpack.c.l.b16 %v41
  %v149 = vunpack.c.l.b16 %v42
  %v150 = vunpack.c.l.b16 %v43
  %v151 = vunpack.c.l.b16 %v44
  %v152 = vunpack.c.l.b16 %v45
  %v153 = vunpack.c.l.b16 %v46
  %v154 = vunpack.c.l.b16 %v47
  %v155 = vunpack.c.l.b16 %v48
  %v156 = vunpack.c.l.b16 %v49
  %v157 = vunpack.c.l.b16 %v50
  %v158 = vunpack.c.l.b16 %v51
  %v159 = vunpack.c.l.b16 %v52
  %v160 = vunpack.c.l.b16 %v53
  %v161 = vunpack.c.l.b16 %v54
  %v162 = vunpack.c.l.b16 %v55
  %v163 = vunpack.c.l.b16 %v56
  %v164 = vunpack.c.l.b16 %v57
  %v165 = vunpack.c.l.b16 %v58
  %v166 = vunpack.c.l.b16 %v59
  %v167 = vunpack.c.l.b16 %v60
  %v168 = vunpack.c.l.b16 %v61
  %v169 = vunpack.c.l.b16 %v62
  %v170 = vpack.c.b16 %v123, %v122
  %v171 = vpack.c.b16 %v125, %v124
  %v172 = vpack.c.b16 %v127, %v126
  %v173 = vpack.c.b16 %v129, %v128
  %v174 = vpack.c.b16 %v131, %v130
  %v175 = vpack.c.b16 %v133, %v132
  %v176 = vpack.c.b16 %v135, %v134
  %v177 = vpack.c.b16 %v137, %v136
  %v178 = vpack.c.b16 %v139, %v138
  %v179 = vpack.c.b16 %v141, %v140
  %v180 = vpack.c.b16 %v143, %v142
  %v181 = vpack.c.b16 %v145, %v144
  %v182 = vpack.c.b16 %v147, %v146
  %v183 = vpack.c.b16 %v149, %v148
  %v184 = vpack.c.b16 %v151, %v150
  %v185 = vpack.c.b16 %v153, %v152
  %v186 = vpack.c.b16 %v155, %v154
  %v187 = vpack.c.b16 %v157, %v156
  %v188 = vpack.c.b16 %v159, %v158
  %v189 = vpack.c.b16 %v161, %v160
  %v190 = vpack.c.b16 %v163, %v162
  %v191 = vpack.c.b16 %v165, %v164
  %v192 = vpack.c.b16 %v167, %v166
  %v193 = vpack.c.b16 %v169, %v168
  %v198 = vunpack.c.l.b16 %v63
  %v199 = vunpack.c.l.b16 %v64
  %v200 = vunpack.c.l.b16 %v65
  %v201 = vunpack.c.l.b16 %v66
  %v202 = vpack.c.b16 %v199, %v198
  %v203 = vpack.c.b16 %v201, %v200
  %vm206 = vcmask 261120
  %v208 = vsel %vm206, %v170, 0
  %v211 = vsel %vm206, %v171, 0
  %v214 = vsel %vm206, %v172, 0
  %v217 = vsel %vm206, %v173, 0
  %v220 = vsel %vm206, %v174, 0
  %v223 = vsel %vm206, %v175, 0
  %v226 = vsel %vm206, %v176, 0
  %v229 = vsel %vm206, %v177, 0
  %v232 = vsel %vm206, %v178, 0
  %v235 = vsel %vm206, %v179, 0
  %v238 = vsel %vm206, %v180, 0
  %v241 = vsel %vm206, %v181, 0
  %v244 = vsel %vm206, %v182, 0
  %v247 = vsel %vm206, %v183, 0
  %v250 = vsel %vm206, %v184, 0
  %v253 = vsel %vm206, %v185, 0
  %v256 = vsel %vm206, %v186, 0
  %v259 = vsel %vm206, %v187, 0
  %v262 = vsel %vm206, %v188, 0
  %v265 = vsel %vm206, %v189, 0
  %v268 = vsel %vm206, %v190, 0
  %v271 = vsel %vm206, %v191, 0
  %v274 = vsel %vm206, %v192, 0
  %v277 = vsel %vm206, %v193, 0
  %279 = vmatprep.subr.bf16.mxu0 0
  %280 = vmatpush1.bf16.msra.mxu0 %v202
  %281 = vmatprep.subr.bf16.mxu0 0
  %282 = vmatpush1.bf16.msra.mxu0 %v203
  %283 = vmatprep.subr.bf16.mxu0 0
  %284 = vmatpush1.bf16.msra.mxu0 0
  %285 = vmatprep.subr.bf16.mxu0 0
  %286 = vmatpush1.bf16.msra.mxu0 0
  %287 = vmatprep.subr.bf16.mxu0 0
  %288 = vmatpush1.bf16.msra.mxu0 0
  %289 = vmatprep.subr.bf16.mxu0 0
  %290 = vmatpush1.bf16.msra.mxu0 0
  %291 = vmatprep.subr.bf16.mxu0 0
  %292 = vmatpush1.bf16.msra.mxu0 0
  %293 = vmatprep.subr.bf16.mxu0 0
  %294 = vmatpush1.bf16.msra.mxu0 0
  %295 = vmatprep.subr.bf16.mxu0 0
  %296 = vmatpush1.bf16.msra.mxu0 0
  %297 = vmatprep.subr.bf16.mxu0 0
  %298 = vmatpush1.bf16.msra.mxu0 0
  %299 = vmatprep.subr.bf16.mxu0 0
  %300 = vmatpush1.bf16.msra.mxu0 0
  %301 = vmatprep.subr.bf16.mxu0 0
  %302 = vmatpush1.bf16.msra.mxu0 0
  %303 = vmatprep.subr.bf16.mxu0 0
  %304 = vmatpush1.bf16.msra.mxu0 0
  %305 = vmatprep.subr.bf16.mxu0 0
  %306 = vmatpush1.bf16.msra.mxu0 0
  %307 = vmatprep.subr.bf16.mxu0 0
  %308 = vmatpush1.bf16.msra.mxu0 0
  %309 = vmatprep.subr.bf16.mxu0 0
  %310 = vmatpush1.bf16.msra.mxu0 0
  %311 = vmatprep.mubr.bf16.mxu0 0
  %312 = vmatmul.mubr.bf16.gmra.mrb[0].mxu0 %v208
  %v313 = vpop.f32.mrb[0].mxu0
  %v314 = vadd.f32 %v72, %v313
  %v315 = vpop.f32.mrb[0].mxu0
  %v316 = vpop.f32.mrb[0].mxu0
  %v317 = vadd.f32 %v72, %v316
  %v318 = vpop.f32.mrb[0].mxu0
  %319 = vmatprep.mubr.bf16.mxu0 0
  %320 = vmatmul.mubr.bf16.gmra.mrb[0].mxu0 %v211
  %v321 = vpop.f32.mrb[0].mxu0
  %v322 = vadd.f32 %v72, %v321
  %v323 = vpop.f32.mrb[0].mxu0
  %v324 = vpop.f32.mrb[0].mxu0
  %v325 = vadd.f32 %v72, %v324
  %v326 = vpop.f32.mrb[0].mxu0
  %327 = vmatprep.mubr.bf16.mxu0 0
  %328 = vmatmul.mubr.bf16.gmra.mrb[0].mxu0 %v214
  %v329 = vpop.f32.mrb[0].mxu0
  %v330 = vadd.f32 %v72, %v329
  %v331 = vpop.f32.mrb[0].mxu0
  %v332 = vpop.f32.mrb[0].mxu0
  %v333 = vadd.f32 %v72, %v332
  %v334 = vpop.f32.mrb[0].mxu0
  %335 = vmatprep.mubr.bf16.mxu0 0
  %336 = vmatmul.mubr.bf16.gmra.mrb[0].mxu0 %v217
  %v337 = vpop.f32.mrb[0].mxu0
  %v338 = vadd.f32 %v72, %v337
  %v339 = vpop.f32.mrb[0].mxu0
  %v340 = vpop.f32.mrb[0].mxu0
  %v341 = vadd.f32 %v72, %v340
  %v342 = vpop.f32.mrb[0].mxu0
  %343 = vmatprep.mubr.bf16.mxu0 0
  %344 = vmatmul.mubr.bf16.gmra.mrb[0].mxu0 %v220
  %v345 = vpop.f32.mrb[0].mxu0
  %v346 = vadd.f32 %v72, %v345
  %v347 = vpop.f32.mrb[0].mxu0
  %v348 = vpop.f32.mrb[0].mxu0
  %v349 = vadd.f32 %v72, %v348
  %v350 = vpop.f32.mrb[0].mxu0
  %351 = vmatprep.mubr.bf16.mxu0 0
  %352 = vmatmul.mubr.bf16.gmra.mrb[0].mxu0 %v223
  %v353 = vpop.f32.mrb[0].mxu0
  %v354 = vadd.f32 %v72, %v353
  %v355 = vpop.f32.mrb[0].mxu0
  %v356 = vpop.f32.mrb[0].mxu0
  %v357 = vadd.f32 %v72, %v356
  %v358 = vpop.f32.mrb[0].mxu0
  %359 = vmatprep.mubr.bf16.mxu0 0
  %360 = vmatmul.mubr.bf16.gmra.mrb[0].mxu0 %v226
  %v361 = vpop.f32.mrb[0].mxu0
  %v362 = vadd.f32 %v72, %v361
  %v363 = vpop.f32.mrb[0].mxu0
  %v364 = vpop.f32.mrb[0].mxu0
  %v365 = vadd.f32 %v72, %v364
  %v366 = vpop.f32.mrb[0].mxu0
  %367 = vmatprep.mubr.bf16.mxu0 0
  %368 = vmatmul.mubr.bf16.gmra.mrb[0].mxu0 %v229
  %v369 = vpop.f32.mrb[0].mxu0
  %v370 = vadd.f32 %v72, %v369
  %v371 = vpop.f32.mrb[0].mxu0
  %v372 = vpop.f32.mrb[0].mxu0
  %v373 = vadd.f32 %v72, %v372
  %v374 = vpop.f32.mrb[0].mxu0
  %375 = vmatprep.mubr.bf16.mxu0 0
  %376 = vmatmul.mubr.bf16.gmra.mrb[0].mxu0 %v232
  %v377 = vpop.f32.mrb[0].mxu0
  %v378 = vadd.f32 %v72, %v377
  %v379 = vpop.f32.mrb[0].mxu0
  %v380 = vpop.f32.mrb[0].mxu0
  %v381 = vadd.f32 %v72, %v380
  %v382 = vpop.f32.mrb[0].mxu0
  %383 = vmatprep.mubr.bf16.mxu0 0
  %384 = vmatmul.mubr.bf16.gmra.mrb[0].mxu0 %v235
  %v385 = vpop.f32.mrb[0].mxu0
  %v386 = vadd.f32 %v72, %v385
  %v387 = vpop.f32.mrb[0].mxu0
  %v388 = vpop.f32.mrb[0].mxu0
  %v389 = vadd.f32 %v72, %v388
  %v390 = vpop.f32.mrb[0].mxu0
  %391 = vmatprep.mubr.bf16.mxu0 0
  %392 = vmatmul.mubr.bf16.gmra.mrb[0].mxu0 %v238
  %v393 = vpop.f32.mrb[0].mxu0
  %v394 = vadd.f32 %v72, %v393
  %v395 = vpop.f32.mrb[0].mxu0
  %v396 = vpop.f32.mrb[0].mxu0
  %v397 = vadd.f32 %v72, %v396
  %v398 = vpop.f32.mrb[0].mxu0
  %399 = vmatprep.mubr.bf16.mxu0 0
  %400 = vmatmul.mubr.bf16.gmra.mrb[0].mxu0 %v241
  %v401 = vpop.f32.mrb[0].mxu0
  %v402 = vadd.f32 %v72, %v401
  %v403 = vpop.f32.mrb[0].mxu0
  %v404 = vpop.f32.mrb[0].mxu0
  %v405 = vadd.f32 %v72, %v404
  %v406 = vpop.f32.mrb[0].mxu0
  %407 = vmatprep.mubr.bf16.mxu0 0
  %408 = vmatmul.mubr.bf16.gmra.mrb[0].mxu0 %v244
  %v409 = vpop.f32.mrb[0].mxu0
  %v410 = vadd.f32 %v72, %v409
  %v411 = vpop.f32.mrb[0].mxu0
  %v412 = vpop.f32.mrb[0].mxu0
  %v413 = vadd.f32 %v72, %v412
  %v414 = vpop.f32.mrb[0].mxu0
  %415 = vmatprep.mubr.bf16.mxu0 0
  %416 = vmatmul.mubr.bf16.gmra.mrb[0].mxu0 %v247
  %v417 = vpop.f32.mrb[0].mxu0
  %v418 = vadd.f32 %v72, %v417
  %v419 = vpop.f32.mrb[0].mxu0
  %v420 = vpop.f32.mrb[0].mxu0
  %v421 = vadd.f32 %v72, %v420
  %v422 = vpop.f32.mrb[0].mxu0
  %423 = vmatprep.mubr.bf16.mxu0 0
  %424 = vmatmul.mubr.bf16.gmra.mrb[0].mxu0 %v250
  %v425 = vpop.f32.mrb[0].mxu0
  %v426 = vadd.f32 %v72, %v425
  %v427 = vpop.f32.mrb[0].mxu0
  %v428 = vpop.f32.mrb[0].mxu0
  %v429 = vadd.f32 %v72, %v428
  %v430 = vpop.f32.mrb[0].mxu0
  %431 = vmatprep.mubr.bf16.mxu0 0
  %432 = vmatmul.mubr.bf16.gmra.mrb[0].mxu0 %v253
  %v433 = vpop.f32.mrb[0].mxu0
  %v434 = vadd.f32 %v72, %v433
  %v435 = vpop.f32.mrb[0].mxu0
  %v436 = vpop.f32.mrb[0].mxu0
  %v437 = vadd.f32 %v72, %v436
  %v438 = vpop.f32.mrb[0].mxu0
  %439 = vmatprep.mubr.bf16.mxu0 0
  %440 = vmatmul.mubr.bf16.gmra.mrb[0].mxu0 %v256
  %v441 = vpop.f32.mrb[0].mxu0
  %v442 = vadd.f32 %v72, %v441
  %v443 = vpop.f32.mrb[0].mxu0
  %v444 = vpop.f32.mrb[0].mxu0
  %v445 = vadd.f32 %v72, %v444
  %v446 = vpop.f32.mrb[0].mxu0
  %447 = vmatprep.mubr.bf16.mxu0 0
  %448 = vmatmul.mubr.bf16.gmra.mrb[0].mxu0 %v259
  %v449 = vpop.f32.mrb[0].mxu0
  %v450 = vadd.f32 %v72, %v449
  %v451 = vpop.f32.mrb[0].mxu0
  %v452 = vpop.f32.mrb[0].mxu0
  %v453 = vadd.f32 %v72, %v452
  %v454 = vpop.f32.mrb[0].mxu0
  %455 = vmatprep.mubr.bf16.mxu0 0
  %456 = vmatmul.mubr.bf16.gmra.mrb[0].mxu0 %v262
  %v457 = vpop.f32.mrb[0].mxu0
  %v458 = vadd.f32 %v72, %v457
  %v459 = vpop.f32.mrb[0].mxu0
  %v460 = vpop.f32.mrb[0].mxu0
  %v461 = vadd.f32 %v72, %v460
  %v462 = vpop.f32.mrb[0].mxu0
  %463 = vmatprep.mubr.bf16.mxu0 0
  %464 = vmatmul.mubr.bf16.gmra.mrb[0].mxu0 %v265
  %v465 = vpop.f32.mrb[0].mxu0
  %v466 = vadd.f32 %v72, %v465
  %v467 = vpop.f32.mrb[0].mxu0
  %v468 = vpop.f32.mrb[0].mxu0
  %v469 = vadd.f32 %v72, %v468
  %v470 = vpop.f32.mrb[0].mxu0
  %471 = vmatprep.mubr.bf16.mxu0 0
  %472 = vmatmul.mubr.bf16.gmra.mrb[0].mxu0 %v268
  %v473 = vpop.f32.mrb[0].mxu0
  %v474 = vadd.f32 %v72, %v473
  %v475 = vpop.f32.mrb[0].mxu0
  %v476 = vpop.f32.mrb[0].mxu0
  %v477 = vadd.f32 %v72, %v476
  %v478 = vpop.f32.mrb[0].mxu0
  %479 = vmatprep.mubr.bf16.mxu0 0
  %480 = vmatmul.mubr.bf16.gmra.mrb[0].mxu0 %v271
  %v481 = vpop.f32.mrb[0].mxu0
  %v482 = vadd.f32 %v72, %v481
  %v483 = vpop.f32.mrb[0].mxu0
  %v484 = vpop.f32.mrb[0].mxu0
  %v485 = vadd.f32 %v72, %v484
  %v486 = vpop.f32.mrb[0].mxu0
  %487 = vmatprep.mubr.bf16.mxu0 0
  %488 = vmatmul.mubr.bf16.gmra.mrb[0].mxu0 %v274
  %v489 = vpop.f32.mrb[0].mxu0
  %v490 = vadd.f32 %v72, %v489
  %v491 = vpop.f32.mrb[0].mxu0
  %v492 = vpop.f32.mrb[0].mxu0
  %v493 = vadd.f32 %v72, %v492
  %v494 = vpop.f32.mrb[0].mxu0
  %495 = vmatprep.mubr.bf16.mxu0 0
  %496 = vmatmul.mubr.bf16.gmra.mrb[0].mxu0 %v277
  %v497 = vpop.f32.mrb[0].mxu0
  %v498 = vadd.f32 %v72, %v497
  %v499 = vpop.f32.mrb[0].mxu0
  %v500 = vpop.f32.mrb[0].mxu0
  %v501 = vadd.f32 %v72, %v500
  %v502 = vpop.f32.mrb[0].mxu0
  %503 = vdwg.mxu0
  %v504 = vmax.f32 %v314, 0.0
  %v505 = vmax.f32 %v317, 0.0
  %v506 = vmax.f32 %v322, 0.0
  %v507 = vmax.f32 %v325, 0.0
  %v508 = vmax.f32 %v330, 0.0
  %v509 = vmax.f32 %v333, 0.0
  %v510 = vmax.f32 %v338, 0.0
  %v511 = vmax.f32 %v341, 0.0
  %v512 = vmax.f32 %v346, 0.0
  %v513 = vmax.f32 %v349, 0.0
  %v514 = vmax.f32 %v354, 0.0
  %v515 = vmax.f32 %v357, 0.0
  %v516 = vmax.f32 %v362, 0.0
  %v517 = vmax.f32 %v365, 0.0
  %v518 = vmax.f32 %v370, 0.0
  %v519 = vmax.f32 %v373, 0.0
  %v520 = vmax.f32 %v378, 0.0
  %v521 = vmax.f32 %v381, 0.0
  %v522 = vmax.f32 %v386, 0.0
  %v523 = vmax.f32 %v389, 0.0
  %v524 = vmax.f32 %v394, 0.0
  %v525 = vmax.f32 %v397, 0.0
  %v526 = vmax.f32 %v402, 0.0
  %v527 = vmax.f32 %v405, 0.0
  %v528 = vmax.f32 %v410, 0.0
  %v529 = vmax.f32 %v413, 0.0
  %v530 = vmax.f32 %v418, 0.0
  %v531 = vmax.f32 %v421, 0.0
  %v532 = vmax.f32 %v426, 0.0
  %v533 = vmax.f32 %v429, 0.0
  %v534 = vmax.f32 %v434, 0.0
  %v535 = vmax.f32 %v437, 0.0
  %v536 = vmax.f32 %v442, 0.0
  %v537 = vmax.f32 %v445, 0.0
  %v538 = vmax.f32 %v450, 0.0
  %v539 = vmax.f32 %v453, 0.0
  %v540 = vmax.f32 %v458, 0.0
  %v541 = vmax.f32 %v461, 0.0
  %v542 = vmax.f32 %v466, 0.0
  %v543 = vmax.f32 %v469, 0.0
  %v544 = vmax.f32 %v474, 0.0
  %v545 = vmax.f32 %v477, 0.0
  %v546 = vmax.f32 %v482, 0.0
  %v547 = vmax.f32 %v485, 0.0
  %v548 = vmax.f32 %v490, 0.0
  %v549 = vmax.f32 %v493, 0.0
  %v550 = vmax.f32 %v498, 0.0
  %v551 = vmax.f32 %v501, 0.0
  %v552 = vpack.c.bf16 %v505, %v504
  %v553 = vpack.c.bf16 %v507, %v506
  %v554 = vpack.c.bf16 %v509, %v508
  %v555 = vpack.c.bf16 %v511, %v510
  %v556 = vpack.c.bf16 %v513, %v512
  %v557 = vpack.c.bf16 %v515, %v514
  %v558 = vpack.c.bf16 %v517, %v516
  %v559 = vpack.c.bf16 %v519, %v518
  %v560 = vpack.c.bf16 %v521, %v520
  %v561 = vpack.c.bf16 %v523, %v522
  %v562 = vpack.c.bf16 %v525, %v524
  %v563 = vpack.c.bf16 %v527, %v526
  %v564 = vpack.c.bf16 %v529, %v528
  %v565 = vpack.c.bf16 %v531, %v530
  %v566 = vpack.c.bf16 %v533, %v532
  %v567 = vpack.c.bf16 %v535, %v534
  %v568 = vpack.c.bf16 %v537, %v536
  %v569 = vpack.c.bf16 %v539, %v538
  %v570 = vpack.c.bf16 %v541, %v540
  %v571 = vpack.c.bf16 %v543, %v542
  %v572 = vpack.c.bf16 %v545, %v544
  %v573 = vpack.c.bf16 %v547, %v546
  %v574 = vpack.c.bf16 %v549, %v548
  %v575 = vpack.c.bf16 %v551, %v550
  %v600 = vunpack.c.l.b16 %v552
  %v601 = vunpack.c.h.b16 %v552
  %v602 = vunpack.c.l.b16 %v553
  %v603 = vunpack.c.h.b16 %v553
  %v604 = vunpack.c.l.b16 %v554
  %v605 = vunpack.c.h.b16 %v554
  %v606 = vunpack.c.l.b16 %v555
  %v607 = vunpack.c.h.b16 %v555
  %v608 = vunpack.c.l.b16 %v556
  %v609 = vunpack.c.h.b16 %v556
  %v610 = vunpack.c.l.b16 %v557
  %v611 = vunpack.c.h.b16 %v557
  %v612 = vunpack.c.l.b16 %v558
  %v613 = vunpack.c.h.b16 %v558
  %v614 = vunpack.c.l.b16 %v559
  %v615 = vunpack.c.h.b16 %v559
  %v616 = vunpack.c.l.b16 %v560
  %v617 = vunpack.c.h.b16 %v560
  %v618 = vunpack.c.l.b16 %v561
  %v619 = vunpack.c.h.b16 %v561
  %v620 = vunpack.c.l.b16 %v562
  %v621 = vunpack.c.h.b16 %v562
  %v622 = vunpack.c.l.b16 %v563
  %v623 = vunpack.c.h.b16 %v563
  %v624 = vunpack.c.l.b16 %v564
  %v625 = vunpack.c.h.b16 %v564
  %v626 = vunpack.c.l.b16 %v565
  %v627 = vunpack.c.h.b16 %v565
  %v628 = vunpack.c.l.b16 %v566
  %v629 = vunpack.c.h.b16 %v566
  %v630 = vunpack.c.l.b16 %v567
  %v631 = vunpack.c.h.b16 %v567
  %v632 = vunpack.c.l.b16 %v568
  %v633 = vunpack.c.h.b16 %v568
  %v634 = vunpack.c.l.b16 %v569
  %v635 = vunpack.c.h.b16 %v569
  %v636 = vunpack.c.l.b16 %v570
  %v637 = vunpack.c.h.b16 %v570
  %v638 = vunpack.c.l.b16 %v571
  %v639 = vunpack.c.h.b16 %v571
  %v640 = vunpack.c.l.b16 %v572
  %v641 = vunpack.c.h.b16 %v572
  %v642 = vunpack.c.l.b16 %v573
  %v643 = vunpack.c.h.b16 %v573
  %v644 = vunpack.c.l.b16 %v574
  %v645 = vunpack.c.h.b16 %v574
  %v646 = vunpack.c.l.b16 %v575
  %v647 = vunpack.c.h.b16 %v575
  %v648 = vpack.c.b16 %v600, %v600
  %v649 = vpack.c.b16 %v601, %v601
  %v650 = vpack.c.b16 %v602, %v602
  %v651 = vpack.c.b16 %v603, %v603
  %v652 = vpack.c.b16 %v604, %v604
  %v653 = vpack.c.b16 %v605, %v605
  %v654 = vpack.c.b16 %v606, %v606
  %v655 = vpack.c.b16 %v607, %v607
  %v656 = vpack.c.b16 %v608, %v608
  %v657 = vpack.c.b16 %v609, %v609
  %v658 = vpack.c.b16 %v610, %v610
  %v659 = vpack.c.b16 %v611, %v611
  %v660 = vpack.c.b16 %v612, %v612
  %v661 = vpack.c.b16 %v613, %v613
  %v662 = vpack.c.b16 %v614, %v614
  %v663 = vpack.c.b16 %v615, %v615
  %v664 = vpack.c.b16 %v616, %v616
  %v665 = vpack.c.b16 %v617, %v617
  %v666 = vpack.c.b16 %v618, %v618
  %v667 = vpack.c.b16 %v619, %v619
  %v668 = vpack.c.b16 %v620, %v620
  %v669 = vpack.c.b16 %v621, %v621
  %v670 = vpack.c.b16 %v622, %v622
  %v671 = vpack.c.b16 %v623, %v623
  %v672 = vpack.c.b16 %v624, %v624
  %v673 = vpack.c.b16 %v625, %v625
  %v674 = vpack.c.b16 %v626, %v626
  %v675 = vpack.c.b16 %v627, %v627
  %v676 = vpack.c.b16 %v628, %v628
  %v677 = vpack.c.b16 %v629, %v629
  %v678 = vpack.c.b16 %v630, %v630
  %v679 = vpack.c.b16 %v631, %v631
  %v680 = vpack.c.b16 %v632, %v632
  %v681 = vpack.c.b16 %v633, %v633
  %v682 = vpack.c.b16 %v634, %v634
  %v683 = vpack.c.b16 %v635, %v635
  %v684 = vpack.c.b16 %v636, %v636
  %v685 = vpack.c.b16 %v637, %v637
  %v686 = vpack.c.b16 %v638, %v638
  %v687 = vpack.c.b16 %v639, %v639
  %v688 = vpack.c.b16 %v640, %v640
  %v689 = vpack.c.b16 %v641, %v641
  %v690 = vpack.c.b16 %v642, %v642
  %v691 = vpack.c.b16 %v643, %v643
  %v692 = vpack.c.b16 %v644, %v644
  %v693 = vpack.c.b16 %v645, %v645
  %v694 = vpack.c.b16 %v646, %v646
  %v695 = vpack.c.b16 %v647, %v647
  %vm744 = vcmask 257024
  %745 = vst.msk [vmem:[%s3] sm:$0xf] %vm744, %v648
  %746 = vst.msk [vmem:[%s3 + $0x4] sm:$0xf] %vm744, %v649
  %747 = vst.msk [vmem:[%s3 + $0x8] sm:$0xf] %vm744, %v650
  %748 = vst.msk [vmem:[%s3 + $0xc] sm:$0xf] %vm744, %v651
  %749 = vst.msk [vmem:[%s3 + $0x10] sm:$0xf] %vm744, %v652
  %750 = vst.msk [vmem:[%s3 + $0x14] sm:$0xf] %vm744, %v653
  %751 = vst.msk [vmem:[%s3 + $0x18] sm:$0xf] %vm744, %v654
  %752 = vst.msk [vmem:[%s3 + $0x1c] sm:$0xf] %vm744, %v655
  %753 = vst.msk [vmem:[%s3 + $0x20] sm:$0xf] %vm744, %v656
  %754 = vst.msk [vmem:[%s3 + $0x24] sm:$0xf] %vm744, %v657
  %755 = vst.msk [vmem:[%s3 + $0x28] sm:$0xf] %vm744, %v658
  %756 = vst.msk [vmem:[%s3 + $0x2c] sm:$0xf] %vm744, %v659
  %757 = vst.msk [vmem:[%s3 + $0x30] sm:$0xf] %vm744, %v660
  %758 = vst.msk [vmem:[%s3 + $0x34] sm:$0xf] %vm744, %v661
  %759 = vst.msk [vmem:[%s3 + $0x38] sm:$0xf] %vm744, %v662
  %760 = vst.msk [vmem:[%s3 + $0x3c] sm:$0xf] %vm744, %v663
  %761 = vst.msk [vmem:[%s3 + $0x40] sm:$0xf] %vm744, %v664
  %762 = vst.msk [vmem:[%s3 + $0x44] sm:$0xf] %vm744, %v665
  %763 = vst.msk [vmem:[%s3 + $0x48] sm:$0xf] %vm744, %v666
  %764 = vst.msk [vmem:[%s3 + $0x4c] sm:$0xf] %vm744, %v667
  %765 = vst.msk [vmem:[%s3 + $0x50] sm:$0xf] %vm744, %v668
  %766 = vst.msk [vmem:[%s3 + $0x54] sm:$0xf] %vm744, %v669
  %767 = vst.msk [vmem:[%s3 + $0x58] sm:$0xf] %vm744, %v670
  %768 = vst.msk [vmem:[%s3 + $0x5c] sm:$0xf] %vm744, %v671
  %769 = vst.msk [vmem:[%s3 + $0x60] sm:$0xf] %vm744, %v672
  %770 = vst.msk [vmem:[%s3 + $0x64] sm:$0xf] %vm744, %v673
  %771 = vst.msk [vmem:[%s3 + $0x68] sm:$0xf] %vm744, %v674
  %772 = vst.msk [vmem:[%s3 + $0x6c] sm:$0xf] %vm744, %v675
  %773 = vst.msk [vmem:[%s3 + $0x70] sm:$0xf] %vm744, %v676
  %774 = vst.msk [vmem:[%s3 + $0x74] sm:$0xf] %vm744, %v677
  %775 = vst.msk [vmem:[%s3 + $0x78] sm:$0xf] %vm744, %v678
  %776 = vst.msk [vmem:[%s3 + $0x7c] sm:$0xf] %vm744, %v679
  %777 = vst.msk [vmem:[%s3 + $0x80] sm:$0xf] %vm744, %v680
  %778 = vst.msk [vmem:[%s3 + $0x84] sm:$0xf] %vm744, %v681
  %779 = vst.msk [vmem:[%s3 + $0x88] sm:$0xf] %vm744, %v682
  %780 = vst.msk [vmem:[%s3 + $0x8c] sm:$0xf] %vm744, %v683
  %781 = vst.msk [vmem:[%s3 + $0x90] sm:$0xf] %vm744, %v684
  %782 = vst.msk [vmem:[%s3 + $0x94] sm:$0xf] %vm744, %v685
  %783 = vst.msk [vmem:[%s3 + $0x98] sm:$0xf] %vm744, %v686
  %784 = vst.msk [vmem:[%s3 + $0x9c] sm:$0xf] %vm744, %v687
  %785 = vst.msk [vmem:[%s3 + $0xa0] sm:$0xf] %vm744, %v688
  %786 = vst.msk [vmem:[%s3 + $0xa4] sm:$0xf] %vm744, %v689
  %787 = vst.msk [vmem:[%s3 + $0xa8] sm:$0xf] %vm744, %v690
  %788 = vst.msk [vmem:[%s3 + $0xac] sm:$0xf] %vm744, %v691
  %789 = vst.msk [vmem:[%s3 + $0xb0] sm:$0xf] %vm744, %v692
  %790 = vst.msk [vmem:[%s3 + $0xb4] sm:$0xf] %vm744, %v693
  %791 = vst.msk [vmem:[%s3 + $0xb8] sm:$0xf] %vm744, %v694
  %792 = vst.msk [vmem:[%s3 + $0xbc] sm:$0xf] %vm744, %v695
  // Predicated region
  $region14: #{forward.5} parent=0 // pred_check
    _
  $region15: #{forward.5} parent=0 // pred_check_branch
    %794 = sbr.rel (0) target = $region17
  $region16: #{forward.5} parent=0 // pred_region
    _
  $region17: #{forward.5} parent=0 // pred_fallthru
    _
  // Predicated region
  $region18: #{forward.5} parent=0 // pred_check
    _
  $region19: #{forward.5} parent=0 // pred_check_branch
    %796 = sbr.rel (0) target = $region21
  $region20: #{forward.5} parent=0 // pred_region
    _
  $region21: #{forward.5} parent=0 // pred_fallthru
    _

// kernel: forward.6
$region0: #{forward.6}
  #allocation0 [shape = 'u32[]', space=smem, size = 0x4, offset = 0x4, fixed_abs, tag = 'smem constant byte address 0x4 - core index']
  #allocation1 [shape = 'u32[144,128]{1,0:T(1,128)}', space=vmem, size = 0x12000, scoped, tag = 'internal scratch']
  %s0 = inlined_call_operand.vmem [shape: bf16[96,32], index: 0, kind: input, shape index: {}]
  %s1 = inlined_call_operand.vmem [shape: bf16[32,32], index: 1, kind: input, shape index: {}]
  %s2 = inlined_call_operand.vmem [shape: f32[1,32], index: 2, kind: input, shape index: {}]
  %s3 = inlined_call_operand.vmem [shape: bf16[96,32], index: 3, kind: output, shape index: {}]
  %s4 = sld [smem:[#allocation0]]
  $region22: #{forward.6} parent=0
    _
  %s6 = ssub.s32 1, %s4
  %s7 = scalar_select 0, %s6, %s4
  // Predicated region
  $region2: #{forward.6} parent=0 // pred_check
    _
  $region3: #{forward.6} parent=0 // pred_check_branch
    %9 = sbr.rel (0) target = $region5
  $region4: #{forward.6} parent=0 // pred_region
    _
  $region5: #{forward.6} parent=0 // pred_fallthru
    _
  // Predicated region
  $region6: #{forward.6} parent=0 // pred_check
    _
  $region7: #{forward.6} parent=0 // pred_check_branch
    %11 = sbr.rel (0) target = $region9
  $region8: #{forward.6} parent=0 // pred_region
    _
  $region9: #{forward.6} parent=0 // pred_fallthru
    _
  // Predicated region
  $region10: #{forward.6} parent=0 // pred_check
    _
  $region11: #{forward.6} parent=0 // pred_check_branch
    %13 = sbr.rel (0) target = $region13
  $region12: #{forward.6} parent=0 // pred_region
    _
  $region13: #{forward.6} parent=0 // pred_fallthru
    _
  %v15 = vld [vmem:[%s0] sm:$0xf]
  %v16 = vld [vmem:[%s0 + $0x4] sm:$0xf]
  %v17 = vld [vmem:[%s0 + $0x8] sm:$0xf]
  %v18 = vld [vmem:[%s0 + $0xc] sm:$0xf]
  %v19 = vld [vmem:[%s0 + $0x10] sm:$0xf]
  %v20 = vld [vmem:[%s0 + $0x14] sm:$0xf]
  %v21 = vld [vmem:[%s0 + $0x18] sm:$0xf]
  %v22 = vld [vmem:[%s0 + $0x1c] sm:$0xf]
  %v23 = vld [vmem:[%s0 + $0x20] sm:$0xf]
  %v24 = vld [vmem:[%s0 + $0x24] sm:$0xf]
  %v25 = vld [vmem:[%s0 + $0x28] sm:$0xf]
  %v26 = vld [vmem:[%s0 + $0x2c] sm:$0xf]
  %v27 = vld [vmem:[%s1] sm:$0xf]
  %v28 = vld [vmem:[%s1 + $0x4] sm:$0xf]
  %v29 = vld [vmem:[%s1 + $0x8] sm:$0xf]
  %v30 = vld [vmem:[%s1 + $0xc] sm:$0xf]
  %v31 = vld [vmem:[%s2] sm:$0x1]
  %v33 = vlaneseq
  %v34 = vshrl.u32 %v33, 7
  %v35 = vsub.s32 0, %v34
  %v36 = vrot.slane %v31, %v35
  %v50 = vunpack.c.l.b16 %v15
  %v51 = vunpack.c.l.b16 %v16
  %v52 = vunpack.c.l.b16 %v17
  %v53 = vunpack.c.l.b16 %v18
  %v54 = vunpack.c.l.b16 %v19
  %v55 = vunpack.c.l.b16 %v20
  %v56 = vunpack.c.l.b16 %v21
  %v57 = vunpack.c.l.b16 %v22
  %v58 = vunpack.c.l.b16 %v23
  %v59 = vunpack.c.l.b16 %v24
  %v60 = vunpack.c.l.b16 %v25
  %v61 = vunpack.c.l.b16 %v26
  %v62 = vpack.c.b16 %v51, %v50
  %v63 = vpack.c.b16 %v53, %v52
  %v64 = vpack.c.b16 %v55, %v54
  %v65 = vpack.c.b16 %v57, %v56
  %v66 = vpack.c.b16 %v59, %v58
  %v67 = vpack.c.b16 %v61, %v60
  %v72 = vunpack.c.l.b16 %v27
  %v73 = vunpack.c.l.b16 %v28
  %v74 = vunpack.c.l.b16 %v29
  %v75 = vunpack.c.l.b16 %v30
  %v76 = vpack.c.b16 %v73, %v72
  %v77 = vpack.c.b16 %v75, %v74
  %vm80 = vcmask 261120
  %v82 = vsel %vm80, %v62, 0
  %v85 = vsel %vm80, %v63, 0
  %v88 = vsel %vm80, %v64, 0
  %v91 = vsel %vm80, %v65, 0
  %v94 = vsel %vm80, %v66, 0
  %v97 = vsel %vm80, %v67, 0
  %99 = vmatprep.subr.bf16.mxu0 0
  %100 = vmatpush1.bf16.msra.mxu0 %v76
  %101 = vmatprep.subr.bf16.mxu0 0
  %102 = vmatpush1.bf16.msra.mxu0 %v77
  %103 = vmatprep.subr.bf16.mxu0 0
  %104 = vmatpush1.bf16.msra.mxu0 0
  %105 = vmatprep.subr.bf16.mxu0 0
  %106 = vmatpush1.bf16.msra.mxu0 0
  %107 = vmatprep.subr.bf16.mxu0 0
  %108 = vmatpush1.bf16.msra.mxu0 0
  %109 = vmatprep.subr.bf16.mxu0 0
  %110 = vmatpush1.bf16.msra.mxu0 0
  %111 = vmatprep.subr.bf16.mxu0 0
  %112 = vmatpush1.bf16.msra.mxu0 0
  %113 = vmatprep.subr.bf16.mxu0 0
  %114 = vmatpush1.bf16.msra.mxu0 0
  %115 = vmatprep.subr.bf16.mxu0 0
  %116 = vmatpush1.bf16.msra.mxu0 0
  %117 = vmatprep.subr.bf16.mxu0 0
  %118 = vmatpush1.bf16.msra.mxu0 0
  %119 = vmatprep.subr.bf16.mxu0 0
  %120 = vmatpush1.bf16.msra.mxu0 0
  %121 = vmatprep.subr.bf16.mxu0 0
  %122 = vmatpush1.bf16.msra.mxu0 0
  %123 = vmatprep.subr.bf16.mxu0 0
  %124 = vmatpush1.bf16.msra.mxu0 0
  %125 = vmatprep.subr.bf16.mxu0 0
  %126 = vmatpush1.bf16.msra.mxu0 0
  %127 = vmatprep.subr.bf16.mxu0 0
  %128 = vmatpush1.bf16.msra.mxu0 0
  %129 = vmatprep.subr.bf16.mxu0 0
  %130 = vmatpush1.bf16.msra.mxu0 0
  %131 = vmatprep.mubr.bf16.mxu0 0
  %132 = vmatmul.mubr.bf16.gmra.mrb[0].mxu0 %v82
  %v133 = vpop.f32.mrb[0].mxu0
  %v134 = vadd.f32 %v36, %v133
  %v135 = vpop.f32.mrb[0].mxu0
  %v136 = vpop.f32.mrb[0].mxu0
  %v137 = vadd.f32 %v36, %v136
  %v138 = vpop.f32.mrb[0].mxu0
  %139 = vmatprep.mubr.bf16.mxu0 0
  %140 = vmatmul.mubr.bf16.gmra.mrb[0].mxu0 %v85
  %v141 = vpop.f32.mrb[0].mxu0
  %v142 = vadd.f32 %v36, %v141
  %v143 = vpop.f32.mrb[0].mxu0
  %v144 = vpop.f32.mrb[0].mxu0
  %v145 = vadd.f32 %v36, %v144
  %v146 = vpop.f32.mrb[0].mxu0
  %147 = vmatprep.mubr.bf16.mxu0 0
  %148 = vmatmul.mubr.bf16.gmra.mrb[0].mxu0 %v88
  %v149 = vpop.f32.mrb[0].mxu0
  %v150 = vadd.f32 %v36, %v149
  %v151 = vpop.f32.mrb[0].mxu0
  %v152 = vpop.f32.mrb[0].mxu0
  %v153 = vadd.f32 %v36, %v152
  %v154 = vpop.f32.mrb[0].mxu0
  %155 = vmatprep.mubr.bf16.mxu0 0
  %156 = vmatmul.mubr.bf16.gmra.mrb[0].mxu0 %v91
  %v157 = vpop.f32.mrb[0].mxu0
  %v158 = vadd.f32 %v36, %v157
  %v159 = vpop.f32.mrb[0].mxu0
  %v160 = vpop.f32.mrb[0].mxu0
  %v161 = vadd.f32 %v36, %v160
  %v162 = vpop.f32.mrb[0].mxu0
  %163 = vmatprep.mubr.bf16.mxu0 0
  %164 = vmatmul.mubr.bf16.gmra.mrb[0].mxu0 %v94
  %v165 = vpop.f32.mrb[0].mxu0
  %v166 = vadd.f32 %v36, %v165
  %v167 = vpop.f32.mrb[0].mxu0
  %v168 = vpop.f32.mrb[0].mxu0
  %v169 = vadd.f32 %v36, %v168
  %v170 = vpop.f32.mrb[0].mxu0
  %171 = vmatprep.mubr.bf16.mxu0 0
  %172 = vmatmul.mubr.bf16.gmra.mrb[0].mxu0 %v97
  %v173 = vpop.f32.mrb[0].mxu0
  %v174 = vadd.f32 %v36, %v173
  %v175 = vpop.f32.mrb[0].mxu0
  %v176 = vpop.f32.mrb[0].mxu0
  %v177 = vadd.f32 %v36, %v176
  %v178 = vpop.f32.mrb[0].mxu0
  %179 = vdwg.mxu0
  %v180 = vmax.f32 %v134, 0.0
  %v181 = vmax.f32 %v137, 0.0
  %v182 = vmax.f32 %v142, 0.0
  %v183 = vmax.f32 %v145, 0.0
  %v184 = vmax.f32 %v150, 0.0
  %v185 = vmax.f32 %v153, 0.0
  %v186 = vmax.f32 %v158, 0.0
  %v187 = vmax.f32 %v161, 0.0
  %v188 = vmax.f32 %v166, 0.0
  %v189 = vmax.f32 %v169, 0.0
  %v190 = vmax.f32 %v174, 0.0
  %v191 = vmax.f32 %v177, 0.0
  %v192 = vpack.c.bf16 %v181, %v180
  %v193 = vpack.c.bf16 %v183, %v182
  %v194 = vpack.c.bf16 %v185, %v184
  %v195 = vpack.c.bf16 %v187, %v186
  %v196 = vpack.c.bf16 %v189, %v188
  %v197 = vpack.c.bf16 %v191, %v190
  %v204 = vunpack.c.l.b16 %v192
  %v205 = vunpack.c.h.b16 %v192
  %v206 = vunpack.c.l.b16 %v193
  %v207 = vunpack.c.h.b16 %v193
  %v208 = vunpack.c.l.b16 %v194
  %v209 = vunpack.c.h.b16 %v194
  %v210 = vunpack.c.l.b16 %v195
  %v211 = vunpack.c.h.b16 %v195
  %v212 = vunpack.c.l.b16 %v196
  %v213 = vunpack.c.h.b16 %v196
  %v214 = vunpack.c.l.b16 %v197
  %v215 = vunpack.c.h.b16 %v197
  %v216 = vpack.c.b16 %v204, %v204
  %v217 = vpack.c.b16 %v205, %v205
  %v218 = vpack.c.b16 %v206, %v206
  %v219 = vpack.c.b16 %v207, %v207
  %v220 = vpack.c.b16 %v208, %v208
  %v221 = vpack.c.b16 %v209, %v209
  %v222 = vpack.c.b16 %v210, %v210
  %v223 = vpack.c.b16 %v211, %v211
  %v224 = vpack.c.b16 %v212, %v212
  %v225 = vpack.c.b16 %v213, %v213
  %v226 = vpack.c.b16 %v214, %v214
  %v227 = vpack.c.b16 %v215, %v215
  %vm240 = vcmask 257024
  %241 = vst.msk [vmem:[%s3] sm:$0xf] %vm240, %v216
  %242 = vst.msk [vmem:[%s3 + $0x4] sm:$0xf] %vm240, %v217
  %243 = vst.msk [vmem:[%s3 + $0x8] sm:$0xf] %vm240, %v218
  %244 = vst.msk [vmem:[%s3 + $0xc] sm:$0xf] %vm240, %v219
  %245 = vst.msk [vmem:[%s3 + $0x10] sm:$0xf] %vm240, %v220
  %246 = vst.msk [vmem:[%s3 + $0x14] sm:$0xf] %vm240, %v221
  %247 = vst.msk [vmem:[%s3 + $0x18] sm:$0xf] %vm240, %v222
  %248 = vst.msk [vmem:[%s3 + $0x1c] sm:$0xf] %vm240, %v223
  %249 = vst.msk [vmem:[%s3 + $0x20] sm:$0xf] %vm240, %v224
  %250 = vst.msk [vmem:[%s3 + $0x24] sm:$0xf] %vm240, %v225
  %251 = vst.msk [vmem:[%s3 + $0x28] sm:$0xf] %vm240, %v226
  %252 = vst.msk [vmem:[%s3 + $0x2c] sm:$0xf] %vm240, %v227
  // Predicated region
  $region14: #{forward.6} parent=0 // pred_check
    _
  $region15: #{forward.6} parent=0 // pred_check_branch
    %254 = sbr.rel (0) target = $region17
  $region16: #{forward.6} parent=0 // pred_region
    _
  $region17: #{forward.6} parent=0 // pred_fallthru
    _
  // Predicated region
  $region18: #{forward.6} parent=0 // pred_check
    _
  $region19: #{forward.6} parent=0 // pred_check_branch
    %256 = sbr.rel (0) target = $region21
  $region20: #{forward.6} parent=0 // pred_region
    _
  $region21: #{forward.6} parent=0 // pred_fallthru
    _

// kernel: forward.7
$region0: #{forward.7}
  #allocation0 [shape = 'u32[]', space=smem, size = 0x4, offset = 0x4, fixed_abs, tag = 'smem constant byte address 0x4 - core index']
  #allocation1 [shape = 'u32[144,128]{1,0:T(1,128)}', space=vmem, size = 0x12000, scoped, tag = 'internal scratch']
  %s0 = inlined_call_operand.vmem [shape: bf16[160,32], index: 0, kind: input, shape index: {}]
  %s1 = inlined_call_operand.vmem [shape: bf16[160,32], index: 1, kind: input, shape index: {}]
  %s2 = inlined_call_operand.vmem [shape: bf16[160,32], index: 2, kind: input, shape index: {}]
  %s3 = inlined_call_operand.vmem [shape: bf16[32,32], index: 3, kind: input, shape index: {}]
  %s4 = inlined_call_operand.vmem [shape: f32[1,32], index: 4, kind: input, shape index: {}]
  %s5 = inlined_call_operand.vmem [shape: bf16[32,32], index: 5, kind: input, shape index: {}]
  %s6 = inlined_call_operand.vmem [shape: bf16[32,32], index: 6, kind: input, shape index: {}]
  %s7 = inlined_call_operand.vmem [shape: f32[1,32], index: 7, kind: input, shape index: {}]
  %s8 = inlined_call_operand.vmem [shape: bf16[32,64], index: 8, kind: input, shape index: {}]
  %s9 = inlined_call_operand.vmem [shape: f32[1,64], index: 9, kind: input, shape index: {}]
  %s10 = inlined_call_operand.vmem [shape: bf16[32,64], index: 10, kind: input, shape index: {}]
  %s11 = inlined_call_operand.vmem [shape: f32[1,64], index: 11, kind: input, shape index: {}]
  %s12 = inlined_call_operand.vmem [shape: bf16[64,128], index: 12, kind: input, shape index: {}]
  %s13 = inlined_call_operand.vmem [shape: bf16[64,128], index: 13, kind: input, shape index: {}]
  %s14 = inlined_call_operand.vmem [shape: f32[1,128], index: 14, kind: input, shape index: {}]
  %s15 = inlined_call_operand.vmem [shape: bf16[160,128], index: 15, kind: output, shape index: {}]
  %s16 = sld [smem:[#allocation0]]
  $region70: #{forward.7} parent=0
    _
  %s18 = ssub.s32 1, %s16
  %s19 = scalar_select 0, %s18, %s16
  // Predicated region
  $region2: #{forward.7} parent=0 // pred_check
    _
  $region3: #{forward.7} parent=0 // pred_check_branch
    %21 = sbr.rel (0) target = $region5
  $region4: #{forward.7} parent=0 // pred_region
    _
  $region5: #{forward.7} parent=0 // pred_fallthru
    _
  // Predicated region
  $region6: #{forward.7} parent=0 // pred_check
    _
  $region7: #{forward.7} parent=0 // pred_check_branch
    %23 = sbr.rel (0) target = $region9
  $region8: #{forward.7} parent=0 // pred_region
    _
  $region9: #{forward.7} parent=0 // pred_fallthru
    _
  // Predicated region
  $region10: #{forward.7} parent=0 // pred_check
    _
  $region11: #{forward.7} parent=0 // pred_check_branch
    %25 = sbr.rel (0) target = $region13
  $region12: #{forward.7} parent=0 // pred_region
    _
  $region13: #{forward.7} parent=0 // pred_fallthru
    _
  // Predicated region
  $region14: #{forward.7} parent=0 // pred_check
    _
  $region15: #{forward.7} parent=0 // pred_check_branch
    %27 = sbr.rel (0) target = $region17
  $region16: #{forward.7} parent=0 // pred_region
    _
  $region17: #{forward.7} parent=0 // pred_fallthru
    _
  // Predicated region
  $region18: #{forward.7} parent=0 // pred_check
    _
  $region19: #{forward.7} parent=0 // pred_check_branch
    %29 = sbr.rel (0) target = $region21
  $region20: #{forward.7} parent=0 // pred_region
    _
  $region21: #{forward.7} parent=0 // pred_fallthru
    _
  // Predicated region
  $region22: #{forward.7} parent=0 // pred_check
    _
  $region23: #{forward.7} parent=0 // pred_check_branch
    %31 = sbr.rel (0) target = $region25
  $region24: #{forward.7} parent=0 // pred_region
    _
  $region25: #{forward.7} parent=0 // pred_fallthru
    _
  // Predicated region
  $region26: #{forward.7} parent=0 // pred_check
    _
  $region27: #{forward.7} parent=0 // pred_check_branch
    %33 = sbr.rel (0) target = $region29
  $region28: #{forward.7} parent=0 // pred_region
    _
  $region29: #{forward.7} parent=0 // pred_fallthru
    _
  // Predicated region
  $region30: #{forward.7} parent=0 // pred_check
    _
  $region31: #{forward.7} parent=0 // pred_check_branch
    %35 = sbr.rel (0) target = $region33
  $region32: #{forward.7} parent=0 // pred_region
    _
  $region33: #{forward.7} parent=0 // pred_fallthru
    _
  // Predicated region
  $region34: #{forward.7} parent=0 // pred_check
    _
  $region35: #{forward.7} parent=0 // pred_check_branch
    %37 = sbr.rel (0) target = $region37
  $region36: #{forward.7} parent=0 // pred_region
    _
  $region37: #{forward.7} parent=0 // pred_fallthru
    _
  // Predicated region
  $region38: #{forward.7} parent=0 // pred_check
    _
  $region39: #{forward.7} parent=0 // pred_check_branch
    %39 = sbr.rel (0) target = $region41
  $region40: #{forward.7} parent=0 // pred_region
    _
  $region41: #{forward.7} parent=0 // pred_fallthru
    _
  // Predicated region
  $region42: #{forward.7} parent=0 // pred_check
    _
  $region43: #{forward.7} parent=0 // pred_check_branch
    %41 = sbr.rel (0) target = $region45
  $region44: #{forward.7} parent=0 // pred_region
    _
  $region45: #{forward.7} parent=0 // pred_fallthru
    _
  // Predicated region
  $region46: #{forward.7} parent=0 // pred_check
    _
  $region47: #{forward.7} parent=0 // pred_check_branch
    %43 = sbr.rel (0) target = $region49
  $region48: #{forward.7} parent=0 // pred_region
    _
  $region49: #{forward.7} parent=0 // pred_fallthru
    _
  // Predicated region
  $region50: #{forward.7} parent=0 // pred_check
    _
  $region51: #{forward.7} parent=0 // pred_check_branch
    %45 = sbr.rel (0) target = $region53
  $region52: #{forward.7} parent=0 // pred_region
    _
  $region53: #{forward.7} parent=0 // pred_fallthru
    _
  // Predicated region
  $region54: #{forward.7} parent=0 // pred_check
    _
  $region55: #{forward.7} parent=0 // pred_check_branch
    %47 = sbr.rel (0) target = $region57
  $region56: #{forward.7} parent=0 // pred_region
    _
  $region57: #{forward.7} parent=0 // pred_fallthru
    _
  // Predicated region
  $region58: #{forward.7} parent=0 // pred_check
    _
  $region59: #{forward.7} parent=0 // pred_check_branch
    %49 = sbr.rel (0) target = $region61
  $region60: #{forward.7} parent=0 // pred_region
    _
  $region61: #{forward.7} parent=0 // pred_fallthru
    _
  %v51 = vld [vmem:[%s0] sm:$0xf]
  %v52 = vld [vmem:[%s0 + $0x4] sm:$0xf]
  %v53 = vld [vmem:[%s0 + $0x8] sm:$0xf]
  %v54 = vld [vmem:[%s0 + $0xc] sm:$0xf]
  %v55 = vld [vmem:[%s0 + $0x10] sm:$0xf]
  %v56 = vld [vmem:[%s0 + $0x14] sm:$0xf]
  %v57 = vld [vmem:[%s0 + $0x18] sm:$0xf]
  %v58 = vld [vmem:[%s0 + $0x1c] sm:$0xf]
  %v59 = vld [vmem:[%s0 + $0x20] sm:$0xf]
  %v60 = vld [vmem:[%s0 + $0x24] sm:$0xf]
  %v61 = vld [vmem:[%s0 + $0x28] sm:$0xf]
  %v62 = vld [vmem:[%s0 + $0x2c] sm:$0xf]
  %v63 = vld [vmem:[%s0 + $0x30] sm:$0xf]
  %v64 = vld [vmem:[%s0 + $0x34] sm:$0xf]
  %v65 = vld [vmem:[%s0 + $0x38] sm:$0xf]
  %v66 = vld [vmem:[%s0 + $0x3c] sm:$0xf]
  %v67 = vld [vmem:[%s0 + $0x40] sm:$0xf]
  %v68 = vld [vmem:[%s0 + $0x44] sm:$0xf]
  %v69 = vld [vmem:[%s0 + $0x48] sm:$0xf]
  %v70 = vld [vmem:[%s0 + $0x4c] sm:$0xf]
  %v71 = vunpack.c.l.bf16 %v51
  %v72 = vunpack.c.l.bf16 %v52
  %v73 = vunpack.c.l.bf16 %v53
  %v74 = vunpack.c.l.bf16 %v54
  %v75 = vunpack.c.l.bf16 %v55
  %v76 = vunpack.c.l.bf16 %v56
  %v77 = vunpack.c.l.bf16 %v57
  %v78 = vunpack.c.l.bf16 %v58
  %v79 = vunpack.c.l.bf16 %v59
  %v80 = vunpack.c.l.bf16 %v60
  %v81 = vunpack.c.l.bf16 %v61
  %v82 = vunpack.c.l.bf16 %v62
  %v83 = vunpack.c.l.bf16 %v63
  %v84 = vunpack.c.l.bf16 %v64
  %v85 = vunpack.c.l.bf16 %v65
  %v86 = vunpack.c.l.bf16 %v66
  %v87 = vunpack.c.l.bf16 %v67
  %v88 = vunpack.c.l.bf16 %v68
  %v89 = vunpack.c.l.bf16 %v69
  %v90 = vunpack.c.l.bf16 %v70
  %v91 = vld [vmem:[%s1] sm:$0xf]
  %v92 = vld [vmem:[%s1 + $0x4] sm:$0xf]
  %v93 = vld [vmem:[%s1 + $0x8] sm:$0xf]
  %v94 = vld [vmem:[%s1 + $0xc] sm:$0xf]
  %v95 = vld [vmem:[%s1 + $0x10] sm:$0xf]
  %v96 = vld [vmem:[%s1 + $0x14] sm:$0xf]
  %v97 = vld [vmem:[%s1 + $0x18] sm:$0xf]
  %v98 = vld [vmem:[%s1 + $0x1c] sm:$0xf]
  %v99 = vld [vmem:[%s1 + $0x20] sm:$0xf]
  %v100 = vld [vmem:[%s1 + $0x24] sm:$0xf]
  %v101 = vld [vmem:[%s1 + $0x28] sm:$0xf]
  %v102 = vld [vmem:[%s1 + $0x2c] sm:$0xf]
  %v103 = vld [vmem:[%s1 + $0x30] sm:$0xf]
  %v104 = vld [vmem:[%s1 + $0x34] sm:$0xf]
  %v105 = vld [vmem:[%s1 + $0x38] sm:$0xf]
  %v106 = vld [vmem:[%s1 + $0x3c] sm:$0xf]
  %v107 = vld [vmem:[%s1 + $0x40] sm:$0xf]
  %v108 = vld [vmem:[%s1 + $0x44] sm:$0xf]
  %v109 = vld [vmem:[%s1 + $0x48] sm:$0xf]
  %v110 = vld [vmem:[%s1 + $0x4c] sm:$0xf]
  %v111 = vunpack.c.l.bf16 %v91
  %v112 = vunpack.c.l.bf16 %v92
  %v113 = vunpack.c.l.bf16 %v93
  %v114 = vunpack.c.l.bf16 %v94
  %v115 = vunpack.c.l.bf16 %v95
  %v116 = vunpack.c.l.bf16 %v96
  %v117 = vunpack.c.l.bf16 %v97
  %v118 = vunpack.c.l.bf16 %v98
  %v119 = vunpack.c.l.bf16 %v99
  %v120 = vunpack.c.l.bf16 %v100
  %v121 = vunpack.c.l.bf16 %v101
  %v122 = vunpack.c.l.bf16 %v102
  %v123 = vunpack.c.l.bf16 %v103
  %v124 = vunpack.c.l.bf16 %v104
  %v125 = vunpack.c.l.bf16 %v105
  %v126 = vunpack.c.l.bf16 %v106
  %v127 = vunpack.c.l.bf16 %v107
  %v128 = vunpack.c.l.bf16 %v108
  %v129 = vunpack.c.l.bf16 %v109
  %v130 = vunpack.c.l.bf16 %v110
  %v131 = vld [vmem:[%s2] sm:$0xf]
  %v132 = vld [vmem:[%s2 + $0x4] sm:$0xf]
  %v133 = vld [vmem:[%s2 + $0x8] sm:$0xf]
  %v134 = vld [vmem:[%s2 + $0xc] sm:$0xf]
  %v135 = vld [vmem:[%s2 + $0x10] sm:$0xf]
  %v136 = vld [vmem:[%s2 + $0x14] sm:$0xf]
  %v137 = vld [vmem:[%s2 + $0x18] sm:$0xf]
  %v138 = vld [vmem:[%s2 + $0x1c] sm:$0xf]
  %v139 = vld [vmem:[%s2 + $0x20] sm:$0xf]
  %v140 = vld [vmem:[%s2 + $0x24] sm:$0xf]
  %v141 = vld [vmem:[%s2 + $0x28] sm:$0xf]
  %v142 = vld [vmem:[%s2 + $0x2c] sm:$0xf]
  %v143 = vld [vmem:[%s2 + $0x30] sm:$0xf]
  %v144 = vld [vmem:[%s2 + $0x34] sm:$0xf]
  %v145 = vld [vmem:[%s2 + $0x38] sm:$0xf]
  %v146 = vld [vmem:[%s2 + $0x3c] sm:$0xf]
  %v147 = vld [vmem:[%s2 + $0x40] sm:$0xf]
  %v148 = vld [vmem:[%s2 + $0x44] sm:$0xf]
  %v149 = vld [vmem:[%s2 + $0x48] sm:$0xf]
  %v150 = vld [vmem:[%s2 + $0x4c] sm:$0xf]
  %v151 = vunpack.c.l.bf16 %v131
  %v152 = vunpack.c.l.bf16 %v132
  %v153 = vunpack.c.l.bf16 %v133
  %v154 = vunpack.c.l.bf16 %v134
  %v155 = vunpack.c.l.bf16 %v135
  %v156 = vunpack.c.l.bf16 %v136
  %v157 = vunpack.c.l.bf16 %v137
  %v158 = vunpack.c.l.bf16 %v138
  %v159 = vunpack.c.l.bf16 %v139
  %v160 = vunpack.c.l.bf16 %v140
  %v161 = vunpack.c.l.bf16 %v141
  %v162 = vunpack.c.l.bf16 %v142
  %v163 = vunpack.c.l.bf16 %v143
  %v164 = vunpack.c.l.bf16 %v144
  %v165 = vunpack.c.l.bf16 %v145
  %v166 = vunpack.c.l.bf16 %v146
  %v167 = vunpack.c.l.bf16 %v147
  %v168 = vunpack.c.l.bf16 %v148
  %v169 = vunpack.c.l.bf16 %v149
  %v170 = vunpack.c.l.bf16 %v150
  %v171 = vadd.f32 %v111, %v151
  %v172 = vadd.f32 %v112, %v152
  %v173 = vadd.f32 %v113, %v153
  %v174 = vadd.f32 %v114, %v154
  %v175 = vadd.f32 %v115, %v155
  %v176 = vadd.f32 %v116, %v156
  %v177 = vadd.f32 %v117, %v157
  %v178 = vadd.f32 %v118, %v158
  %v179 = vadd.f32 %v119, %v159
  %v180 = vadd.f32 %v120, %v160
  %v181 = vadd.f32 %v121, %v161
  %v182 = vadd.f32 %v122, %v162
  %v183 = vadd.f32 %v123, %v163
  %v184 = vadd.f32 %v124, %v164
  %v185 = vadd.f32 %v125, %v165
  %v186 = vadd.f32 %v126, %v166
  %v187 = vadd.f32 %v127, %v167
  %v188 = vadd.f32 %v128, %v168
  %v189 = vadd.f32 %v129, %v169
  %v190 = vadd.f32 %v130, %v170
  %v191 = vmul.f32 %v171, 0.5
  %v192 = vmul.f32 %v172, 0.5
  %v193 = vmul.f32 %v173, 0.5
  %v194 = vmul.f32 %v174, 0.5
  %v195 = vmul.f32 %v175, 0.5
  %v196 = vmul.f32 %v176, 0.5
  %v197 = vmul.f32 %v177, 0.5
  %v198 = vmul.f32 %v178, 0.5
  %v199 = vmul.f32 %v179, 0.5
  %v200 = vmul.f32 %v180, 0.5
  %v201 = vmul.f32 %v181, 0.5
  %v202 = vmul.f32 %v182, 0.5
  %v203 = vmul.f32 %v183, 0.5
  %v204 = vmul.f32 %v184, 0.5
  %v205 = vmul.f32 %v185, 0.5
  %v206 = vmul.f32 %v186, 0.5
  %v207 = vmul.f32 %v187, 0.5
  %v208 = vmul.f32 %v188, 0.5
  %v209 = vmul.f32 %v189, 0.5
  %v210 = vmul.f32 %v190, 0.5
  %v211 = vpack.c.bf16 %v192, %v191
  %v212 = vpack.c.bf16 %v194, %v193
  %v213 = vpack.c.bf16 %v196, %v195
  %v214 = vpack.c.bf16 %v198, %v197
  %v215 = vpack.c.bf16 %v200, %v199
  %v216 = vpack.c.bf16 %v202, %v201
  %v217 = vpack.c.bf16 %v204, %v203
  %v218 = vpack.c.bf16 %v206, %v205
  %v219 = vpack.c.bf16 %v208, %v207
  %v220 = vpack.c.bf16 %v210, %v209
  %v221 = vld [vmem:[%s3] sm:$0xf]
  %v222 = vld [vmem:[%s3 + $0x4] sm:$0xf]
  %v223 = vld [vmem:[%s3 + $0x8] sm:$0xf]
  %v224 = vld [vmem:[%s3 + $0xc] sm:$0xf]
  %v225 = vld [vmem:[%s4] sm:$0x1]
  %v227 = vlaneseq
  %v228 = vshrl.u32 %v227, 7
  %v229 = vsub.s32 0, %v228
  %v230 = vrot.slane %v225, %v229
  %v236 = vunpack.c.l.b16 %v221
  %v237 = vunpack.c.l.b16 %v222
  %v238 = vunpack.c.l.b16 %v223
  %v239 = vunpack.c.l.b16 %v224
  %v240 = vpack.c.b16 %v237, %v236
  %v241 = vpack.c.b16 %v239, %v238
  %vm244 = vcmask 261120
  %v246 = vsel %vm244, %v211, 0
  %v249 = vsel %vm244, %v212, 0
  %v252 = vsel %vm244, %v213, 0
  %v255 = vsel %vm244, %v214, 0
  %v258 = vsel %vm244, %v215, 0
  %v261 = vsel %vm244, %v216, 0
  %v264 = vsel %vm244, %v217, 0
  %v267 = vsel %vm244, %v218, 0
  %v270 = vsel %vm244, %v219, 0
  %v273 = vsel %vm244, %v220, 0
  %275 = vmatprep.subr.bf16.mxu0 0
  %276 = vmatpush1.bf16.msra.mxu0 %v240
  %277 = vmatprep.subr.bf16.mxu0 0
  %278 = vmatpush1.bf16.msra.mxu0 %v241
  %279 = vmatprep.subr.bf16.mxu0 0
  %280 = vmatpush1.bf16.msra.mxu0 0
  %281 = vmatprep.subr.bf16.mxu0 0
  %282 = vmatpush1.bf16.msra.mxu0 0
  %283 = vmatprep.subr.bf16.mxu0 0
  %284 = vmatpush1.bf16.msra.mxu0 0
  %285 = vmatprep.subr.bf16.mxu0 0
  %286 = vmatpush1.bf16.msra.mxu0 0
  %287 = vmatprep.subr.bf16.mxu0 0
  %288 = vmatpush1.bf16.msra.mxu0 0
  %289 = vmatprep.subr.bf16.mxu0 0
  %290 = vmatpush1.bf16.msra.mxu0 0
  %291 = vmatprep.subr.bf16.mxu0 0
  %292 = vmatpush1.bf16.msra.mxu0 0
  %293 = vmatprep.subr.bf16.mxu0 0
  %294 = vmatpush1.bf16.msra.mxu0 0
  %295 = vmatprep.subr.bf16.mxu0 0
  %296 = vmatpush1.bf16.msra.mxu0 0
  %297 = vmatprep.subr.bf16.mxu0 0
  %298 = vmatpush1.bf16.msra.mxu0 0
  %299 = vmatprep.subr.bf16.mxu0 0
  %300 = vmatpush1.bf16.msra.mxu0 0
  %301 = vmatprep.subr.bf16.mxu0 0
  %302 = vmatpush1.bf16.msra.mxu0 0
  %303 = vmatprep.subr.bf16.mxu0 0
  %304 = vmatpush1.bf16.msra.mxu0 0
  %305 = vmatprep.subr.bf16.mxu0 0
  %306 = vmatpush1.bf16.msra.mxu0 0
  %307 = vmatprep.mubr.bf16.mxu0 0
  %308 = vmatmul.mubr.bf16.gmra.mrb[0].mxu0 %v246
  %v309 = vpop.f32.mrb[0].mxu0
  %v310 = vadd.f32 %v230, %v309
  %v311 = vpop.f32.mrb[0].mxu0
  %v312 = vpop.f32.mrb[0].mxu0
  %v313 = vadd.f32 %v230, %v312
  %v314 = vpop.f32.mrb[0].mxu0
  %315 = vmatprep.mubr.bf16.mxu0 0
  %316 = vmatmul.mubr.bf16.gmra.mrb[0].mxu0 %v249
  %v317 = vpop.f32.mrb[0].mxu0
  %v318 = vadd.f32 %v230, %v317
  %v319 = vpop.f32.mrb[0].mxu0
  %v320 = vpop.f32.mrb[0].mxu0
  %v321 = vadd.f32 %v230, %v320
  %v322 = vpop.f32.mrb[0].mxu0
  %323 = vmatprep.mubr.bf16.mxu0 0
  %324 = vmatmul.mubr.bf16.gmra.mrb[0].mxu0 %v252
  %v325 = vpop.f32.mrb[0].mxu0
  %v326 = vadd.f32 %v230, %v325
  %v327 = vpop.f32.mrb[0].mxu0
  %v328 = vpop.f32.mrb[0].mxu0
  %v329 = vadd.f32 %v230, %v328
  %v330 = vpop.f32.mrb[0].mxu0
  %331 = vmatprep.mubr.bf16.mxu0 0
  %332 = vmatmul.mubr.bf16.gmra.mrb[0].mxu0 %v255
  %v333 = vpop.f32.mrb[0].mxu0
  %v334 = vadd.f32 %v230, %v333
  %v335 = vpop.f32.mrb[0].mxu0
  %v336 = vpop.f32.mrb[0].mxu0
  %v337 = vadd.f32 %v230, %v336
  %v338 = vpop.f32.mrb[0].mxu0
  %339 = vmatprep.mubr.bf16.mxu0 0
  %340 = vmatmul.mubr.bf16.gmra.mrb[0].mxu0 %v258
  %v341 = vpop.f32.mrb[0].mxu0
  %v342 = vadd.f32 %v230, %v341
  %v343 = vpop.f32.mrb[0].mxu0
  %v344 = vpop.f32.mrb[0].mxu0
  %v345 = vadd.f32 %v230, %v344
  %v346 = vpop.f32.mrb[0].mxu0
  %347 = vmatprep.mubr.bf16.mxu0 0
  %348 = vmatmul.mubr.bf16.gmra.mrb[0].mxu0 %v261
  %v349 = vpop.f32.mrb[0].mxu0
  %v350 = vadd.f32 %v230, %v349
  %v351 = vpop.f32.mrb[0].mxu0
  %v352 = vpop.f32.mrb[0].mxu0
  %v353 = vadd.f32 %v230, %v352
  %v354 = vpop.f32.mrb[0].mxu0
  %355 = vmatprep.mubr.bf16.mxu0 0
  %356 = vmatmul.mubr.bf16.gmra.mrb[0].mxu0 %v264
  %v357 = vpop.f32.mrb[0].mxu0
  %v358 = vadd.f32 %v230, %v357
  %v359 = vpop.f32.mrb[0].mxu0
  %v360 = vpop.f32.mrb[0].mxu0
  %v361 = vadd.f32 %v230, %v360
  %v362 = vpop.f32.mrb[0].mxu0
  %363 = vmatprep.mubr.bf16.mxu0 0
  %364 = vmatmul.mubr.bf16.gmra.mrb[0].mxu0 %v267
  %v365 = vpop.f32.mrb[0].mxu0
  %v366 = vadd.f32 %v230, %v365
  %v367 = vpop.f32.mrb[0].mxu0
  %v368 = vpop.f32.mrb[0].mxu0
  %v369 = vadd.f32 %v230, %v368
  %v370 = vpop.f32.mrb[0].mxu0
  %371 = vmatprep.mubr.bf16.mxu0 0
  %372 = vmatmul.mubr.bf16.gmra.mrb[0].mxu0 %v270
  %v373 = vpop.f32.mrb[0].mxu0
  %v374 = vadd.f32 %v230, %v373
  %v375 = vpop.f32.mrb[0].mxu0
  %v376 = vpop.f32.mrb[0].mxu0
  %v377 = vadd.f32 %v230, %v376
  %v378 = vpop.f32.mrb[0].mxu0
  %379 = vmatprep.mubr.bf16.mxu0 0
  %380 = vmatmul.mubr.bf16.gmra.mrb[0].mxu0 %v273
  %v381 = vpop.f32.mrb[0].mxu0
  %v382 = vadd.f32 %v230, %v381
  %v383 = vpop.f32.mrb[0].mxu0
  %v384 = vpop.f32.mrb[0].mxu0
  %v385 = vadd.f32 %v230, %v384
  %v386 = vpop.f32.mrb[0].mxu0
  %387 = vdwg.mxu0
  %v388 = vmax.f32 %v310, 0.0
  %v389 = vmax.f32 %v313, 0.0
  %v390 = vmax.f32 %v318, 0.0
  %v391 = vmax.f32 %v321, 0.0
  %v392 = vmax.f32 %v326, 0.0
  %v393 = vmax.f32 %v329, 0.0
  %v394 = vmax.f32 %v334, 0.0
  %v395 = vmax.f32 %v337, 0.0
  %v396 = vmax.f32 %v342, 0.0
  %v397 = vmax.f32 %v345, 0.0
  %v398 = vmax.f32 %v350, 0.0
  %v399 = vmax.f32 %v353, 0.0
  %v400 = vmax.f32 %v358, 0.0
  %v401 = vmax.f32 %v361, 0.0
  %v402 = vmax.f32 %v366, 0.0
  %v403 = vmax.f32 %v369, 0.0
  %v404 = vmax.f32 %v374, 0.0
  %v405 = vmax.f32 %v377, 0.0
  %v406 = vmax.f32 %v382, 0.0
  %v407 = vmax.f32 %v385, 0.0
  %v408 = vpack.c.bf16 %v389, %v388
  %v409 = vpack.c.bf16 %v391, %v390
  %v410 = vpack.c.bf16 %v393, %v392
  %v411 = vpack.c.bf16 %v395, %v394
  %v412 = vpack.c.bf16 %v397, %v396
  %v413 = vpack.c.bf16 %v399, %v398
  %v414 = vpack.c.bf16 %v401, %v400
  %v415 = vpack.c.bf16 %v403, %v402
  %v416 = vpack.c.bf16 %v405, %v404
  %v417 = vpack.c.bf16 %v407, %v406
  %v418 = vld [vmem:[%s5] sm:$0xf]
  %v419 = vld [vmem:[%s5 + $0x4] sm:$0xf]
  %v420 = vld [vmem:[%s5 + $0x8] sm:$0xf]
  %v421 = vld [vmem:[%s5 + $0xc] sm:$0xf]
  %v422 = vld [vmem:[%s6] sm:$0xf]
  %v423 = vld [vmem:[%s6 + $0x4] sm:$0xf]
  %v424 = vld [vmem:[%s6 + $0x8] sm:$0xf]
  %v425 = vld [vmem:[%s6 + $0xc] sm:$0xf]
  %v430 = vunpack.c.l.b16 %v422
  %v431 = vunpack.c.l.b16 %v423
  %v432 = vunpack.c.l.b16 %v424
  %v433 = vunpack.c.l.b16 %v425
  %v434 = vpack.c.b16 %v431, %v430
  %v435 = vpack.c.b16 %v433, %v432
  %v439 = vsel %vm244, %v408, 0
  %v442 = vsel %vm244, %v409, 0
  %v445 = vsel %vm244, %v410, 0
  %v448 = vsel %vm244, %v411, 0
  %v451 = vsel %vm244, %v412, 0
  %v454 = vsel %vm244, %v413, 0
  %v457 = vsel %vm244, %v414, 0
  %v460 = vsel %vm244, %v415, 0
  %v463 = vsel %vm244, %v416, 0
  %v466 = vsel %vm244, %v417, 0
  %468 = vmatprep.subr.bf16.mxu0 0
  %469 = vmatpush1.bf16.msra.mxu0 %v434
  %470 = vmatprep.subr.bf16.mxu0 0
  %471 = vmatpush1.bf16.msra.mxu0 %v435
  %472 = vmatprep.subr.bf16.mxu0 0
  %473 = vmatpush1.bf16.msra.mxu0 0
  %474 = vmatprep.subr.bf16.mxu0 0
  %475 = vmatpush1.bf16.msra.mxu0 0
  %476 = vmatprep.subr.bf16.mxu0 0
  %477 = vmatpush1.bf16.msra.mxu0 0
  %478 = vmatprep.subr.bf16.mxu0 0
  %479 = vmatpush1.bf16.msra.mxu0 0
  %480 = vmatprep.subr.bf16.mxu0 0
  %481 = vmatpush1.bf16.msra.mxu0 0
  %482 = vmatprep.subr.bf16.mxu0 0
  %483 = vmatpush1.bf16.msra.mxu0 0
  %484 = vmatprep.subr.bf16.mxu0 0
  %485 = vmatpush1.bf16.msra.mxu0 0
  %486 = vmatprep.subr.bf16.mxu0 0
  %487 = vmatpush1.bf16.msra.mxu0 0
  %488 = vmatprep.subr.bf16.mxu0 0
  %489 = vmatpush1.bf16.msra.mxu0 0
  %490 = vmatprep.subr.bf16.mxu0 0
  %491 = vmatpush1.bf16.msra.mxu0 0
  %492 = vmatprep.subr.bf16.mxu0 0
  %493 = vmatpush1.bf16.msra.mxu0 0
  %494 = vmatprep.subr.bf16.mxu0 0
  %495 = vmatpush1.bf16.msra.mxu0 0
  %496 = vmatprep.subr.bf16.mxu0 0
  %497 = vmatpush1.bf16.msra.mxu0 0
  %498 = vmatprep.subr.bf16.mxu0 0
  %499 = vmatpush1.bf16.msra.mxu0 0
  %500 = vmatprep.mubr.bf16.mxu0 0
  %501 = vmatmul.mubr.bf16.gmra.mrb[0].mxu0 %v439
  %v502 = vpop.f32.mrb[0].mxu0
  %v503 = vadd.f32 0.0, %v502
  %v504 = vpop.f32.mrb[0].mxu0
  %v505 = vpop.f32.mrb[0].mxu0
  %v506 = vadd.f32 0.0, %v505
  %v507 = vpop.f32.mrb[0].mxu0
  %508 = vmatprep.mubr.bf16.mxu0 0
  %509 = vmatmul.mubr.bf16.gmra.mrb[0].mxu0 %v442
  %v510 = vpop.f32.mrb[0].mxu0
  %v511 = vadd.f32 0.0, %v510
  %v512 = vpop.f32.mrb[0].mxu0
  %v513 = vpop.f32.mrb[0].mxu0
  %v514 = vadd.f32 0.0, %v513
  %v515 = vpop.f32.mrb[0].mxu0
  %516 = vmatprep.mubr.bf16.mxu0 0
  %517 = vmatmul.mubr.bf16.gmra.mrb[0].mxu0 %v445
  %v518 = vpop.f32.mrb[0].mxu0
  %v519 = vadd.f32 0.0, %v518
  %v520 = vpop.f32.mrb[0].mxu0
  %v521 = vpop.f32.mrb[0].mxu0
  %v522 = vadd.f32 0.0, %v521
  %v523 = vpop.f32.mrb[0].mxu0
  %524 = vmatprep.mubr.bf16.mxu0 0
  %525 = vmatmul.mubr.bf16.gmra.mrb[0].mxu0 %v448
  %v526 = vpop.f32.mrb[0].mxu0
  %v527 = vadd.f32 0.0, %v526
  %v528 = vpop.f32.mrb[0].mxu0
  %v529 = vpop.f32.mrb[0].mxu0
  %v530 = vadd.f32 0.0, %v529
  %v531 = vpop.f32.mrb[0].mxu0
  %532 = vmatprep.mubr.bf16.mxu0 0
  %533 = vmatmul.mubr.bf16.gmra.mrb[0].mxu0 %v451
  %v534 = vpop.f32.mrb[0].mxu0
  %v535 = vadd.f32 0.0, %v534
  %v536 = vpop.f32.mrb[0].mxu0
  %v537 = vpop.f32.mrb[0].mxu0
  %v538 = vadd.f32 0.0, %v537
  %v539 = vpop.f32.mrb[0].mxu0
  %540 = vmatprep.mubr.bf16.mxu0 0
  %541 = vmatmul.mubr.bf16.gmra.mrb[0].mxu0 %v454
  %v542 = vpop.f32.mrb[0].mxu0
  %v543 = vadd.f32 0.0, %v542
  %v544 = vpop.f32.mrb[0].mxu0
  %v545 = vpop.f32.mrb[0].mxu0
  %v546 = vadd.f32 0.0, %v545
  %v547 = vpop.f32.mrb[0].mxu0
  %548 = vmatprep.mubr.bf16.mxu0 0
  %549 = vmatmul.mubr.bf16.gmra.mrb[0].mxu0 %v457
  %v550 = vpop.f32.mrb[0].mxu0
  %v551 = vadd.f32 0.0, %v550
  %v552 = vpop.f32.mrb[0].mxu0
  %v553 = vpop.f32.mrb[0].mxu0
  %v554 = vadd.f32 0.0, %v553
  %v555 = vpop.f32.mrb[0].mxu0
  %556 = vmatprep.mubr.bf16.mxu0 0
  %557 = vmatmul.mubr.bf16.gmra.mrb[0].mxu0 %v460
  %v558 = vpop.f32.mrb[0].mxu0
  %v559 = vadd.f32 0.0, %v558
  %v560 = vpop.f32.mrb[0].mxu0
  %v561 = vpop.f32.mrb[0].mxu0
  %v562 = vadd.f32 0.0, %v561
  %v563 = vpop.f32.mrb[0].mxu0
  %564 = vmatprep.mubr.bf16.mxu0 0
  %565 = vmatmul.mubr.bf16.gmra.mrb[0].mxu0 %v463
  %v566 = vpop.f32.mrb[0].mxu0
  %v567 = vadd.f32 0.0, %v566
  %v568 = vpop.f32.mrb[0].mxu0
  %v569 = vpop.f32.mrb[0].mxu0
  %v570 = vadd.f32 0.0, %v569
  %v571 = vpop.f32.mrb[0].mxu0
  %572 = vmatprep.mubr.bf16.mxu0 0
  %573 = vmatmul.mubr.bf16.gmra.mrb[0].mxu0 %v466
  %v574 = vpop.f32.mrb[0].mxu0
  %v575 = vadd.f32 0.0, %v574
  %v576 = vpop.f32.mrb[0].mxu0
  %v577 = vpop.f32.mrb[0].mxu0
  %v578 = vadd.f32 0.0, %v577
  %v579 = vpop.f32.mrb[0].mxu0
  %580 = vdwg.mxu0
  %v601 = vunpack.c.l.b16 %v51
  %v602 = vunpack.c.l.b16 %v52
  %v603 = vunpack.c.l.b16 %v53
  %v604 = vunpack.c.l.b16 %v54
  %v605 = vunpack.c.l.b16 %v55
  %v606 = vunpack.c.l.b16 %v56
  %v607 = vunpack.c.l.b16 %v57
  %v608 = vunpack.c.l.b16 %v58
  %v609 = vunpack.c.l.b16 %v59
  %v610 = vunpack.c.l.b16 %v60
  %v611 = vunpack.c.l.b16 %v61
  %v612 = vunpack.c.l.b16 %v62
  %v613 = vunpack.c.l.b16 %v63
  %v614 = vunpack.c.l.b16 %v64
  %v615 = vunpack.c.l.b16 %v65
  %v616 = vunpack.c.l.b16 %v66
  %v617 = vunpack.c.l.b16 %v67
  %v618 = vunpack.c.l.b16 %v68
  %v619 = vunpack.c.l.b16 %v69
  %v620 = vunpack.c.l.b16 %v70
  %v621 = vpack.c.b16 %v602, %v601
  %v622 = vpack.c.b16 %v604, %v603
  %v623 = vpack.c.b16 %v606, %v605
  %v624 = vpack.c.b16 %v608, %v607
  %v625 = vpack.c.b16 %v610, %v609
  %v626 = vpack.c.b16 %v612, %v611
  %v627 = vpack.c.b16 %v614, %v613
  %v628 = vpack.c.b16 %v616, %v615
  %v629 = vpack.c.b16 %v618, %v617
  %v630 = vpack.c.b16 %v620, %v619
  %v635 = vunpack.c.l.b16 %v418
  %v636 = vunpack.c.l.b16 %v419
  %v637 = vunpack.c.l.b16 %v420
  %v638 = vunpack.c.l.b16 %v421
  %v639 = vpack.c.b16 %v636, %v635
  %v640 = vpack.c.b16 %v638, %v637
  %v644 = vsel %vm244, %v621, 0
  %v647 = vsel %vm244, %v622, 0
  %v650 = vsel %vm244, %v623, 0
  %v653 = vsel %vm244, %v624, 0
  %v656 = vsel %vm244, %v625, 0
  %v659 = vsel %vm244, %v626, 0
  %v662 = vsel %vm244, %v627, 0
  %v665 = vsel %vm244, %v628, 0
  %v668 = vsel %vm244, %v629, 0
  %v671 = vsel %vm244, %v630, 0
  %673 = vmatprep.subr.bf16.mxu0 0
  %674 = vmatpush1.bf16.msra.mxu0 %v639
  %675 = vmatprep.subr.bf16.mxu0 0
  %676 = vmatpush1.bf16.msra.mxu0 %v640
  %677 = vmatprep.subr.bf16.mxu0 0
  %678 = vmatpush1.bf16.msra.mxu0 0
  %679 = vmatprep.subr.bf16.mxu0 0
  %680 = vmatpush1.bf16.msra.mxu0 0
  %681 = vmatprep.subr.bf16.mxu0 0
  %682 = vmatpush1.bf16.msra.mxu0 0
  %683 = vmatprep.subr.bf16.mxu0 0
  %684 = vmatpush1.bf16.msra.mxu0 0
  %685 = vmatprep.subr.bf16.mxu0 0
  %686 = vmatpush1.bf16.msra.mxu0 0
  %687 = vmatprep.subr.bf16.mxu0 0
  %688 = vmatpush1.bf16.msra.mxu0 0
  %689 = vmatprep.subr.bf16.mxu0 0
  %690 = vmatpush1.bf16.msra.mxu0 0
  %691 = vmatprep.subr.bf16.mxu0 0
  %692 = vmatpush1.bf16.msra.mxu0 0
  %693 = vmatprep.subr.bf16.mxu0 0
  %694 = vmatpush1.bf16.msra.mxu0 0
  %695 = vmatprep.subr.bf16.mxu0 0
  %696 = vmatpush1.bf16.msra.mxu0 0
  %697 = vmatprep.subr.bf16.mxu0 0
  %698 = vmatpush1.bf16.msra.mxu0 0
  %699 = vmatprep.subr.bf16.mxu0 0
  %700 = vmatpush1.bf16.msra.mxu0 0
  %701 = vmatprep.subr.bf16.mxu0 0
  %702 = vmatpush1.bf16.msra.mxu0 0
  %703 = vmatprep.subr.bf16.mxu0 0
  %704 = vmatpush1.bf16.msra.mxu0 0
  %705 = vmatprep.mubr.bf16.mxu0 0
  %706 = vmatmul.mubr.bf16.gmra.mrb[0].mxu0 %v644
  %v707 = vpop.f32.mrb[0].mxu0
  %v708 = vadd.f32 %v503, %v707
  %v709 = vpop.f32.mrb[0].mxu0
  %v710 = vpop.f32.mrb[0].mxu0
  %v711 = vadd.f32 %v506, %v710
  %v712 = vpop.f32.mrb[0].mxu0
  %713 = vmatprep.mubr.bf16.mxu0 0
  %714 = vmatmul.mubr.bf16.gmra.mrb[0].mxu0 %v647
  %v715 = vpop.f32.mrb[0].mxu0
  %v716 = vadd.f32 %v511, %v715
  %v717 = vpop.f32.mrb[0].mxu0
  %v718 = vpop.f32.mrb[0].mxu0
  %v719 = vadd.f32 %v514, %v718
  %v720 = vpop.f32.mrb[0].mxu0
  %721 = vmatprep.mubr.bf16.mxu0 0
  %722 = vmatmul.mubr.bf16.gmra.mrb[0].mxu0 %v650
  %v723 = vpop.f32.mrb[0].mxu0
  %v724 = vadd.f32 %v519, %v723
  %v725 = vpop.f32.mrb[0].mxu0
  %v726 = vpop.f32.mrb[0].mxu0
  %v727 = vadd.f32 %v522, %v726
  %v728 = vpop.f32.mrb[0].mxu0
  %729 = vmatprep.mubr.bf16.mxu0 0
  %730 = vmatmul.mubr.bf16.gmra.mrb[0].mxu0 %v653
  %v731 = vpop.f32.mrb[0].mxu0
  %v732 = vadd.f32 %v527, %v731
  %v733 = vpop.f32.mrb[0].mxu0
  %v734 = vpop.f32.mrb[0].mxu0
  %v735 = vadd.f32 %v530, %v734
  %v736 = vpop.f32.mrb[0].mxu0
  %737 = vmatprep.mubr.bf16.mxu0 0
  %738 = vmatmul.mubr.bf16.gmra.mrb[0].mxu0 %v656
  %v739 = vpop.f32.mrb[0].mxu0
  %v740 = vadd.f32 %v535, %v739
  %v741 = vpop.f32.mrb[0].mxu0
  %v742 = vpop.f32.mrb[0].mxu0
  %v743 = vadd.f32 %v538, %v742
  %v744 = vpop.f32.mrb[0].mxu0
  %745 = vmatprep.mubr.bf16.mxu0 0
  %746 = vmatmul.mubr.bf16.gmra.mrb[0].mxu0 %v659
  %v747 = vpop.f32.mrb[0].mxu0
  %v748 = vadd.f32 %v543, %v747
  %v749 = vpop.f32.mrb[0].mxu0
  %v750 = vpop.f32.mrb[0].mxu0
  %v751 = vadd.f32 %v546, %v750
  %v752 = vpop.f32.mrb[0].mxu0
  %753 = vmatprep.mubr.bf16.mxu0 0
  %754 = vmatmul.mubr.bf16.gmra.mrb[0].mxu0 %v662
  %v755 = vpop.f32.mrb[0].mxu0
  %v756 = vadd.f32 %v551, %v755
  %v757 = vpop.f32.mrb[0].mxu0
  %v758 = vpop.f32.mrb[0].mxu0
  %v759 = vadd.f32 %v554, %v758
  %v760 = vpop.f32.mrb[0].mxu0
  %761 = vmatprep.mubr.bf16.mxu0 0
  %762 = vmatmul.mubr.bf16.gmra.mrb[0].mxu0 %v665
  %v763 = vpop.f32.mrb[0].mxu0
  %v764 = vadd.f32 %v559, %v763
  %v765 = vpop.f32.mrb[0].mxu0
  %v766 = vpop.f32.mrb[0].mxu0
  %v767 = vadd.f32 %v562, %v766
  %v768 = vpop.f32.mrb[0].mxu0
  %769 = vmatprep.mubr.bf16.mxu0 0
  %770 = vmatmul.mubr.bf16.gmra.mrb[0].mxu0 %v668
  %v771 = vpop.f32.mrb[0].mxu0
  %v772 = vadd.f32 %v567, %v771
  %v773 = vpop.f32.mrb[0].mxu0
  %v774 = vpop.f32.mrb[0].mxu0
  %v775 = vadd.f32 %v570, %v774
  %v776 = vpop.f32.mrb[0].mxu0
  %777 = vmatprep.mubr.bf16.mxu0 0
  %778 = vmatmul.mubr.bf16.gmra.mrb[0].mxu0 %v671
  %v779 = vpop.f32.mrb[0].mxu0
  %v780 = vadd.f32 %v575, %v779
  %v781 = vpop.f32.mrb[0].mxu0
  %v782 = vpop.f32.mrb[0].mxu0
  %v783 = vadd.f32 %v578, %v782
  %v784 = vpop.f32.mrb[0].mxu0
  %785 = vdwg.mxu0
  %v786 = vld [vmem:[%s7] sm:$0x1]
  %v788 = vlaneseq
  %v789 = vshrl.u32 %v788, 7
  %v790 = vsub.s32 0, %v789
  %v791 = vrot.slane %v786, %v790
  %v793 = vadd.f32 %v708, %v791
  %v794 = vadd.f32 %v711, %v791
  %v795 = vadd.f32 %v716, %v791
  %v796 = vadd.f32 %v719, %v791
  %v797 = vadd.f32 %v724, %v791
  %v798 = vadd.f32 %v727, %v791
  %v799 = vadd.f32 %v732, %v791
  %v800 = vadd.f32 %v735, %v791
  %v801 = vadd.f32 %v740, %v791
  %v802 = vadd.f32 %v743, %v791
  %v803 = vadd.f32 %v748, %v791
  %v804 = vadd.f32 %v751, %v791
  %v805 = vadd.f32 %v756, %v791
  %v806 = vadd.f32 %v759, %v791
  %v807 = vadd.f32 %v764, %v791
  %v808 = vadd.f32 %v767, %v791
  %v809 = vadd.f32 %v772, %v791
  %v810 = vadd.f32 %v775, %v791
  %v811 = vadd.f32 %v780, %v791
  %v812 = vadd.f32 %v783, %v791
  %v813 = vxor.u32 %v793, 2147483648
  %v814 = vxor.u32 %v794, 2147483648
  %v815 = vxor.u32 %v795, 2147483648
  %v816 = vxor.u32 %v796, 2147483648
  %v817 = vxor.u32 %v797, 2147483648
  %v818 = vxor.u32 %v798, 2147483648
  %v819 = vxor.u32 %v799, 2147483648
  %v820 = vxor.u32 %v800, 2147483648
  %v821 = vxor.u32 %v801, 2147483648
  %v822 = vxor.u32 %v802, 2147483648
  %v823 = vxor.u32 %v803, 2147483648
  %v824 = vxor.u32 %v804, 2147483648
  %v825 = vxor.u32 %v805, 2147483648
  %v826 = vxor.u32 %v806, 2147483648
  %v827 = vxor.u32 %v807, 2147483648
  %v828 = vxor.u32 %v808, 2147483648
  %v829 = vxor.u32 %v809, 2147483648
  %v830 = vxor.u32 %v810, 2147483648
  %v831 = vxor.u32 %v811, 2147483648
  %v832 = vxor.u32 %v812, 2147483648
  %v833 = vmul.f32 %v813, 1.442695
  %v834 = vpow.pop %v833
  %v835 = vmul.f32 %v814, 1.442695
  %v836 = vpow.pop %v835
  %v837 = vmul.f32 %v815, 1.442695
  %v838 = vpow.pop %v837
  %v839 = vmul.f32 %v816, 1.442695
  %v840 = vpow.pop %v839
  %v841 = vmul.f32 %v817, 1.442695
  %v842 = vpow.pop %v841
  %v843 = vmul.f32 %v818, 1.442695
  %v844 = vpow.pop %v843
  %v845 = vmul.f32 %v819, 1.442695
  %v846 = vpow.pop %v845
  %v847 = vmul.f32 %v820, 1.442695
  %v848 = vpow.pop %v847
  %v849 = vmul.f32 %v821, 1.442695
  %v850 = vpow.pop %v849
  %v851 = vmul.f32 %v822, 1.442695
  %v852 = vpow.pop %v851
  %v853 = vmul.f32 %v823, 1.442695
  %v854 = vpow.pop %v853
  %v855 = vmul.f32 %v824, 1.442695
  %v856 = vpow.pop %v855
  %v857 = vmul.f32 %v825, 1.442695
  %v858 = vpow.pop %v857
  %v859 = vmul.f32 %v826, 1.442695
  %v860 = vpow.pop %v859
  %v861 = vmul.f32 %v827, 1.442695
  %v862 = vpow.pop %v861
  %v863 = vmul.f32 %v828, 1.442695
  %v864 = vpow.pop %v863
  %v865 = vmul.f32 %v829, 1.442695
  %v866 = vpow.pop %v865
  %v867 = vmul.f32 %v830, 1.442695
  %v868 = vpow.pop %v867
  %v869 = vmul.f32 %v831, 1.442695
  %v870 = vpow.pop %v869
  %v871 = vmul.f32 %v832, 1.442695
  %v872 = vpow.pop %v871
  %v873 = vadd.f32 %v834, 1.0
  %v874 = vadd.f32 %v836, 1.0
  %v875 = vadd.f32 %v838, 1.0
  %v876 = vadd.f32 %v840, 1.0
  %v877 = vadd.f32 %v842, 1.0
  %v878 = vadd.f32 %v844, 1.0
  %v879 = vadd.f32 %v846, 1.0
  %v880 = vadd.f32 %v848, 1.0
  %v881 = vadd.f32 %v850, 1.0
  %v882 = vadd.f32 %v852, 1.0
  %v883 = vadd.f32 %v854, 1.0
  %v884 = vadd.f32 %v856, 1.0
  %v885 = vadd.f32 %v858, 1.0
  %v886 = vadd.f32 %v860, 1.0
  %v887 = vadd.f32 %v862, 1.0
  %v888 = vadd.f32 %v864, 1.0
  %v889 = vadd.f32 %v866, 1.0
  %v890 = vadd.f32 %v868, 1.0
  %v891 = vadd.f32 %v870, 1.0
  %v892 = vadd.f32 %v872, 1.0
  %v893 = vrcp.pop %v873
  %v894 = vmul.f32 1.0, %v893
  %v895 = vrcp.pop %v874
  %v896 = vmul.f32 1.0, %v895
  %v897 = vrcp.pop %v875
  %v898 = vmul.f32 1.0, %v897
  %v899 = vrcp.pop %v876
  %v900 = vmul.f32 1.0, %v899
  %v901 = vrcp.pop %v877
  %v902 = vmul.f32 1.0, %v901
  %v903 = vrcp.pop %v878
  %v904 = vmul.f32 1.0, %v903
  %v905 = vrcp.pop %v879
  %v906 = vmul.f32 1.0, %v905
  %v907 = vrcp.pop %v880
  %v908 = vmul.f32 1.0, %v907
  %v909 = vrcp.pop %v881
  %v910 = vmul.f32 1.0, %v909
  %v911 = vrcp.pop %v882
  %v912 = vmul.f32 1.0, %v911
  %v913 = vrcp.pop %v883
  %v914 = vmul.f32 1.0, %v913
  %v915 = vrcp.pop %v884
  %v916 = vmul.f32 1.0, %v915
  %v917 = vrcp.pop %v885
  %v918 = vmul.f32 1.0, %v917
  %v919 = vrcp.pop %v886
  %v920 = vmul.f32 1.0, %v919
  %v921 = vrcp.pop %v887
  %v922 = vmul.f32 1.0, %v921
  %v923 = vrcp.pop %v888
  %v924 = vmul.f32 1.0, %v923
  %v925 = vrcp.pop %v889
  %v926 = vmul.f32 1.0, %v925
  %v927 = vrcp.pop %v890
  %v928 = vmul.f32 1.0, %v927
  %v929 = vrcp.pop %v891
  %v930 = vmul.f32 1.0, %v929
  %v931 = vrcp.pop %v892
  %v932 = vmul.f32 1.0, %v931
  %v933 = vmul.f32 %v894, %v71
  %v934 = vmul.f32 %v896, %v72
  %v935 = vmul.f32 %v898, %v73
  %v936 = vmul.f32 %v900, %v74
  %v937 = vmul.f32 %v902, %v75
  %v938 = vmul.f32 %v904, %v76
  %v939 = vmul.f32 %v906, %v77
  %v940 = vmul.f32 %v908, %v78
  %v941 = vmul.f32 %v910, %v79
  %v942 = vmul.f32 %v912, %v80
  %v943 = vmul.f32 %v914, %v81
  %v944 = vmul.f32 %v916, %v82
  %v945 = vmul.f32 %v918, %v83
  %v946 = vmul.f32 %v920, %v84
  %v947 = vmul.f32 %v922, %v85
  %v948 = vmul.f32 %v924, %v86
  %v949 = vmul.f32 %v926, %v87
  %v950 = vmul.f32 %v928, %v88
  %v951 = vmul.f32 %v930, %v89
  %v952 = vmul.f32 %v932, %v90
  %v953 = vsub.f32 1.0, %v894
  %v954 = vsub.f32 1.0, %v896
  %v955 = vsub.f32 1.0, %v898
  %v956 = vsub.f32 1.0, %v900
  %v957 = vsub.f32 1.0, %v902
  %v958 = vsub.f32 1.0, %v904
  %v959 = vsub.f32 1.0, %v906
  %v960 = vsub.f32 1.0, %v908
  %v961 = vsub.f32 1.0, %v910
  %v962 = vsub.f32 1.0, %v912
  %v963 = vsub.f32 1.0, %v914
  %v964 = vsub.f32 1.0, %v916
  %v965 = vsub.f32 1.0, %v918
  %v966 = vsub.f32 1.0, %v920
  %v967 = vsub.f32 1.0, %v922
  %v968 = vsub.f32 1.0, %v924
  %v969 = vsub.f32 1.0, %v926
  %v970 = vsub.f32 1.0, %v928
  %v971 = vsub.f32 1.0, %v930
  %v972 = vsub.f32 1.0, %v932
  %v973 = vmul.f32 %v953, %v388
  %v974 = vmul.f32 %v954, %v389
  %v975 = vmul.f32 %v955, %v390
  %v976 = vmul.f32 %v956, %v391
  %v977 = vmul.f32 %v957, %v392
  %v978 = vmul.f32 %v958, %v393
  %v979 = vmul.f32 %v959, %v394
  %v980 = vmul.f32 %v960, %v395
  %v981 = vmul.f32 %v961, %v396
  %v982 = vmul.f32 %v962, %v397
  %v983 = vmul.f32 %v963, %v398
  %v984 = vmul.f32 %v964, %v399
  %v985 = vmul.f32 %v965, %v400
  %v986 = vmul.f32 %v966, %v401
  %v987 = vmul.f32 %v967, %v402
  %v988 = vmul.f32 %v968, %v403
  %v989 = vmul.f32 %v969, %v404
  %v990 = vmul.f32 %v970, %v405
  %v991 = vmul.f32 %v971, %v406
  %v992 = vmul.f32 %v972, %v407
  %v993 = vadd.f32 %v933, %v973
  %v994 = vadd.f32 %v934, %v974
  %v995 = vadd.f32 %v935, %v975
  %v996 = vadd.f32 %v936, %v976
  %v997 = vadd.f32 %v937, %v977
  %v998 = vadd.f32 %v938, %v978
  %v999 = vadd.f32 %v939, %v979
  %v1000 = vadd.f32 %v940, %v980
  %v1001 = vadd.f32 %v941, %v981
  %v1002 = vadd.f32 %v942, %v982
  %v1003 = vadd.f32 %v943, %v983
  %v1004 = vadd.f32 %v944, %v984
  %v1005 = vadd.f32 %v945, %v985
  %v1006 = vadd.f32 %v946, %v986
  %v1007 = vadd.f32 %v947, %v987
  %v1008 = vadd.f32 %v948, %v988
  %v1009 = vadd.f32 %v949, %v989
  %v1010 = vadd.f32 %v950, %v990
  %v1011 = vadd.f32 %v951, %v991
  %v1012 = vadd.f32 %v952, %v992
  %v1013 = vpack.c.bf16 %v994, %v993
  %v1014 = vpack.c.bf16 %v996, %v995
  %v1015 = vpack.c.bf16 %v998, %v997
  %v1016 = vpack.c.bf16 %v1000, %v999
  %v1017 = vpack.c.bf16 %v1002, %v1001
  %v1018 = vpack.c.bf16 %v1004, %v1003
  %v1019 = vpack.c.bf16 %v1006, %v1005
  %v1020 = vpack.c.bf16 %v1008, %v1007
  %v1021 = vpack.c.bf16 %v1010, %v1009
  %v1022 = vpack.c.bf16 %v1012, %v1011
  %v1023 = vld [vmem:[%s8] sm:$0xf]
  %v1024 = vld [vmem:[%s8 + $0x4] sm:$0xf]
  %v1025 = vld [vmem:[%s8 + $0x8] sm:$0xf]
  %v1026 = vld [vmem:[%s8 + $0xc] sm:$0xf]
  %v1027 = vld [vmem:[%s9] sm:$0x1]
  %v1029 = vlaneseq
  %v1030 = vshrl.u32 %v1029, 7
  %v1031 = vsub.s32 0, %v1030
  %v1032 = vrot.slane %v1027, %v1031
  %v1038 = vunpack.c.l.b16 %v1023
  %v1039 = vunpack.c.l.b16 %v1024
  %v1040 = vunpack.c.l.b16 %v1025
  %v1041 = vunpack.c.l.b16 %v1026
  %v1042 = vpack.c.b16 %v1039, %v1038
  %v1043 = vpack.c.b16 %v1041, %v1040
  %v1047 = vsel %vm244, %v1013, 0
  %v1050 = vsel %vm244, %v1014, 0
  %v1053 = vsel %vm244, %v1015, 0
  %v1056 = vsel %vm244, %v1016, 0
  %v1059 = vsel %vm244, %v1017, 0
  %v1062 = vsel %vm244, %v1018, 0
  %v1065 = vsel %vm244, %v1019, 0
  %v1068 = vsel %vm244, %v1020, 0
  %v1071 = vsel %vm244, %v1021, 0
  %v1074 = vsel %vm244, %v1022, 0
  %1076 = vmatprep.subr.bf16.mxu0 0
  %1077 = vmatpush1.bf16.msra.mxu0 %v1042
  %1078 = vmatprep.subr.bf16.mxu0 0
  %1079 = vmatpush1.bf16.msra.mxu0 %v1043
  %1080 = vmatprep.subr.bf16.mxu0 0
  %1081 = vmatpush1.bf16.msra.mxu0 0
  %1082 = vmatprep.subr.bf16.mxu0 0
  %1083 = vmatpush1.bf16.msra.mxu0 0
  %1084 = vmatprep.subr.bf16.mxu0 0
  %1085 = vmatpush1.bf16.msra.mxu0 0
  %1086 = vmatprep.subr.bf16.mxu0 0
  %1087 = vmatpush1.bf16.msra.mxu0 0
  %1088 = vmatprep.subr.bf16.mxu0 0
  %1089 = vmatpush1.bf16.msra.mxu0 0
  %1090 = vmatprep.subr.bf16.mxu0 0
  %1091 = vmatpush1.bf16.msra.mxu0 0
  %1092 = vmatprep.subr.bf16.mxu0 0
  %1093 = vmatpush1.bf16.msra.mxu0 0
  %1094 = vmatprep.subr.bf16.mxu0 0
  %1095 = vmatpush1.bf16.msra.mxu0 0
  %1096 = vmatprep.subr.bf16.mxu0 0
  %1097 = vmatpush1.bf16.msra.mxu0 0
  %1098 = vmatprep.subr.bf16.mxu0 0
  %1099 = vmatpush1.bf16.msra.mxu0 0
  %1100 = vmatprep.subr.bf16.mxu0 0
  %1101 = vmatpush1.bf16.msra.mxu0 0
  %1102 = vmatprep.subr.bf16.mxu0 0
  %1103 = vmatpush1.bf16.msra.mxu0 0
  %1104 = vmatprep.subr.bf16.mxu0 0
  %1105 = vmatpush1.bf16.msra.mxu0 0
  %1106 = vmatprep.subr.bf16.mxu0 0
  %1107 = vmatpush1.bf16.msra.mxu0 0
  %1108 = vmatprep.mubr.bf16.mxu0 0
  %1109 = vmatmul.mubr.bf16.gmra.mrb[0].mxu0 %v1047
  %v1110 = vpop.f32.mrb[0].mxu0
  %v1111 = vadd.f32 %v1032, %v1110
  %v1112 = vpop.f32.mrb[0].mxu0
  %v1113 = vpop.f32.mrb[0].mxu0
  %v1114 = vadd.f32 %v1032, %v1113
  %v1115 = vpop.f32.mrb[0].mxu0
  %1116 = vmatprep.mubr.bf16.mxu0 0
  %1117 = vmatmul.mubr.bf16.gmra.mrb[0].mxu0 %v1050
  %v1118 = vpop.f32.mrb[0].mxu0
  %v1119 = vadd.f32 %v1032, %v1118
  %v1120 = vpop.f32.mrb[0].mxu0
  %v1121 = vpop.f32.mrb[0].mxu0
  %v1122 = vadd.f32 %v1032, %v1121
  %v1123 = vpop.f32.mrb[0].mxu0
  %1124 = vmatprep.mubr.bf16.mxu0 0
  %1125 = vmatmul.mubr.bf16.gmra.mrb[0].mxu0 %v1053
  %v1126 = vpop.f32.mrb[0].mxu0
  %v1127 = vadd.f32 %v1032, %v1126
  %v1128 = vpop.f32.mrb[0].mxu0
  %v1129 = vpop.f32.mrb[0].mxu0
  %v1130 = vadd.f32 %v1032, %v1129
  %v1131 = vpop.f32.mrb[0].mxu0
  %1132 = vmatprep.mubr.bf16.mxu0 0
  %1133 = vmatmul.mubr.bf16.gmra.mrb[0].mxu0 %v1056
  %v1134 = vpop.f32.mrb[0].mxu0
  %v1135 = vadd.f32 %v1032, %v1134
  %v1136 = vpop.f32.mrb[0].mxu0
  %v1137 = vpop.f32.mrb[0].mxu0
  %v1138 = vadd.f32 %v1032, %v1137
  %v1139 = vpop.f32.mrb[0].mxu0
  %1140 = vmatprep.mubr.bf16.mxu0 0
  %1141 = vmatmul.mubr.bf16.gmra.mrb[0].mxu0 %v1059
  %v1142 = vpop.f32.mrb[0].mxu0
  %v1143 = vadd.f32 %v1032, %v1142
  %v1144 = vpop.f32.mrb[0].mxu0
  %v1145 = vpop.f32.mrb[0].mxu0
  %v1146 = vadd.f32 %v1032, %v1145
  %v1147 = vpop.f32.mrb[0].mxu0
  %1148 = vmatprep.mubr.bf16.mxu0 0
  %1149 = vmatmul.mubr.bf16.gmra.mrb[0].mxu0 %v1062
  %v1150 = vpop.f32.mrb[0].mxu0
  %v1151 = vadd.f32 %v1032, %v1150
  %v1152 = vpop.f32.mrb[0].mxu0
  %v1153 = vpop.f32.mrb[0].mxu0
  %v1154 = vadd.f32 %v1032, %v1153
  %v1155 = vpop.f32.mrb[0].mxu0
  %1156 = vmatprep.mubr.bf16.mxu0 0
  %1157 = vmatmul.mubr.bf16.gmra.mrb[0].mxu0 %v1065
  %v1158 = vpop.f32.mrb[0].mxu0
  %v1159 = vadd.f32 %v1032, %v1158
  %v1160 = vpop.f32.mrb[0].mxu0
  %v1161 = vpop.f32.mrb[0].mxu0
  %v1162 = vadd.f32 %v1032, %v1161
  %v1163 = vpop.f32.mrb[0].mxu0
  %1164 = vmatprep.mubr.bf16.mxu0 0
  %1165 = vmatmul.mubr.bf16.gmra.mrb[0].mxu0 %v1068
  %v1166 = vpop.f32.mrb[0].mxu0
  %v1167 = vadd.f32 %v1032, %v1166
  %v1168 = vpop.f32.mrb[0].mxu0
  %v1169 = vpop.f32.mrb[0].mxu0
  %v1170 = vadd.f32 %v1032, %v1169
  %v1171 = vpop.f32.mrb[0].mxu0
  %1172 = vmatprep.mubr.bf16.mxu0 0
  %1173 = vmatmul.mubr.bf16.gmra.mrb[0].mxu0 %v1071
  %v1174 = vpop.f32.mrb[0].mxu0
  %v1175 = vadd.f32 %v1032, %v1174
  %v1176 = vpop.f32.mrb[0].mxu0
  %v1177 = vpop.f32.mrb[0].mxu0
  %v1178 = vadd.f32 %v1032, %v1177
  %v1179 = vpop.f32.mrb[0].mxu0
  %1180 = vmatprep.mubr.bf16.mxu0 0
  %1181 = vmatmul.mubr.bf16.gmra.mrb[0].mxu0 %v1074
  %v1182 = vpop.f32.mrb[0].mxu0
  %v1183 = vadd.f32 %v1032, %v1182
  %v1184 = vpop.f32.mrb[0].mxu0
  %v1185 = vpop.f32.mrb[0].mxu0
  %v1186 = vadd.f32 %v1032, %v1185
  %v1187 = vpop.f32.mrb[0].mxu0
  %1188 = vdwg.mxu0
  %v1189 = vmax.f32 %v1111, 0.0
  %v1190 = vmax.f32 %v1114, 0.0
  %v1191 = vmax.f32 %v1119, 0.0
  %v1192 = vmax.f32 %v1122, 0.0
  %v1193 = vmax.f32 %v1127, 0.0
  %v1194 = vmax.f32 %v1130, 0.0
  %v1195 = vmax.f32 %v1135, 0.0
  %v1196 = vmax.f32 %v1138, 0.0
  %v1197 = vmax.f32 %v1143, 0.0
  %v1198 = vmax.f32 %v1146, 0.0
  %v1199 = vmax.f32 %v1151, 0.0
  %v1200 = vmax.f32 %v1154, 0.0
  %v1201 = vmax.f32 %v1159, 0.0
  %v1202 = vmax.f32 %v1162, 0.0
  %v1203 = vmax.f32 %v1167, 0.0
  %v1204 = vmax.f32 %v1170, 0.0
  %v1205 = vmax.f32 %v1175, 0.0
  %v1206 = vmax.f32 %v1178, 0.0
  %v1207 = vmax.f32 %v1183, 0.0
  %v1208 = vmax.f32 %v1186, 0.0
  %v1209 = vpack.c.bf16 %v1190, %v1189
  %v1210 = vpack.c.bf16 %v1192, %v1191
  %v1211 = vpack.c.bf16 %v1194, %v1193
  %v1212 = vpack.c.bf16 %v1196, %v1195
  %v1213 = vpack.c.bf16 %v1198, %v1197
  %v1214 = vpack.c.bf16 %v1200, %v1199
  %v1215 = vpack.c.bf16 %v1202, %v1201
  %v1216 = vpack.c.bf16 %v1204, %v1203
  %v1217 = vpack.c.bf16 %v1206, %v1205
  %v1218 = vpack.c.bf16 %v1208, %v1207
  %v1219 = vld [vmem:[%s10] sm:$0xf]
  %v1220 = vld [vmem:[%s10 + $0x4] sm:$0xf]
  %v1221 = vld [vmem:[%s10 + $0x8] sm:$0xf]
  %v1222 = vld [vmem:[%s10 + $0xc] sm:$0xf]
  %v1223 = vld [vmem:[%s11] sm:$0x1]
  %v1225 = vlaneseq
  %v1226 = vshrl.u32 %v1225, 7
  %v1227 = vsub.s32 0, %v1226
  %v1228 = vrot.slane %v1223, %v1227
  %v1234 = vunpack.c.l.b16 %v1219
  %v1235 = vunpack.c.l.b16 %v1220
  %v1236 = vunpack.c.l.b16 %v1221
  %v1237 = vunpack.c.l.b16 %v1222
  %v1238 = vpack.c.b16 %v1235, %v1234
  %v1239 = vpack.c.b16 %v1237, %v1236
  %1242 = vmatprep.subr.bf16.mxu0 0
  %1243 = vmatpush1.bf16.msra.mxu0 %v1238
  %1244 = vmatprep.subr.bf16.mxu0 0
  %1245 = vmatpush1.bf16.msra.mxu0 %v1239
  %1246 = vmatprep.subr.bf16.mxu0 0
  %1247 = vmatpush1.bf16.msra.mxu0 0
  %1248 = vmatprep.subr.bf16.mxu0 0
  %1249 = vmatpush1.bf16.msra.mxu0 0
  %1250 = vmatprep.subr.bf16.mxu0 0
  %1251 = vmatpush1.bf16.msra.mxu0 0
  %1252 = vmatprep.subr.bf16.mxu0 0
  %1253 = vmatpush1.bf16.msra.mxu0 0
  %1254 = vmatprep.subr.bf16.mxu0 0
  %1255 = vmatpush1.bf16.msra.mxu0 0
  %1256 = vmatprep.subr.bf16.mxu0 0
  %1257 = vmatpush1.bf16.msra.mxu0 0
  %1258 = vmatprep.subr.bf16.mxu0 0
  %1259 = vmatpush1.bf16.msra.mxu0 0
  %1260 = vmatprep.subr.bf16.mxu0 0
  %1261 = vmatpush1.bf16.msra.mxu0 0
  %1262 = vmatprep.subr.bf16.mxu0 0
  %1263 = vmatpush1.bf16.msra.mxu0 0
  %1264 = vmatprep.subr.bf16.mxu0 0
  %1265 = vmatpush1.bf16.msra.mxu0 0
  %1266 = vmatprep.subr.bf16.mxu0 0
  %1267 = vmatpush1.bf16.msra.mxu0 0
  %1268 = vmatprep.subr.bf16.mxu0 0
  %1269 = vmatpush1.bf16.msra.mxu0 0
  %1270 = vmatprep.subr.bf16.mxu0 0
  %1271 = vmatpush1.bf16.msra.mxu0 0
  %1272 = vmatprep.subr.bf16.mxu0 0
  %1273 = vmatpush1.bf16.msra.mxu0 0
  %1274 = vmatprep.mubr.bf16.mxu0 0
  %1275 = vmatmul.mubr.bf16.gmra.mrb[0].mxu0 %v439
  %v1276 = vpop.f32.mrb[0].mxu0
  %v1277 = vadd.f32 %v1228, %v1276
  %v1278 = vpop.f32.mrb[0].mxu0
  %v1279 = vpop.f32.mrb[0].mxu0
  %v1280 = vadd.f32 %v1228, %v1279
  %v1281 = vpop.f32.mrb[0].mxu0
  %1282 = vmatprep.mubr.bf16.mxu0 0
  %1283 = vmatmul.mubr.bf16.gmra.mrb[0].mxu0 %v442
  %v1284 = vpop.f32.mrb[0].mxu0
  %v1285 = vadd.f32 %v1228, %v1284
  %v1286 = vpop.f32.mrb[0].mxu0
  %v1287 = vpop.f32.mrb[0].mxu0
  %v1288 = vadd.f32 %v1228, %v1287
  %v1289 = vpop.f32.mrb[0].mxu0
  %1290 = vmatprep.mubr.bf16.mxu0 0
  %1291 = vmatmul.mubr.bf16.gmra.mrb[0].mxu0 %v445
  %v1292 = vpop.f32.mrb[0].mxu0
  %v1293 = vadd.f32 %v1228, %v1292
  %v1294 = vpop.f32.mrb[0].mxu0
  %v1295 = vpop.f32.mrb[0].mxu0
  %v1296 = vadd.f32 %v1228, %v1295
  %v1297 = vpop.f32.mrb[0].mxu0
  %1298 = vmatprep.mubr.bf16.mxu0 0
  %1299 = vmatmul.mubr.bf16.gmra.mrb[0].mxu0 %v448
  %v1300 = vpop.f32.mrb[0].mxu0
  %v1301 = vadd.f32 %v1228, %v1300
  %v1302 = vpop.f32.mrb[0].mxu0
  %v1303 = vpop.f32.mrb[0].mxu0
  %v1304 = vadd.f32 %v1228, %v1303
  %v1305 = vpop.f32.mrb[0].mxu0
  %1306 = vmatprep.mubr.bf16.mxu0 0
  %1307 = vmatmul.mubr.bf16.gmra.mrb[0].mxu0 %v451
  %v1308 = vpop.f32.mrb[0].mxu0
  %v1309 = vadd.f32 %v1228, %v1308
  %v1310 = vpop.f32.mrb[0].mxu0
  %v1311 = vpop.f32.mrb[0].mxu0
  %v1312 = vadd.f32 %v1228, %v1311
  %v1313 = vpop.f32.mrb[0].mxu0
  %1314 = vmatprep.mubr.bf16.mxu0 0
  %1315 = vmatmul.mubr.bf16.gmra.mrb[0].mxu0 %v454
  %v1316 = vpop.f32.mrb[0].mxu0
  %v1317 = vadd.f32 %v1228, %v1316
  %v1318 = vpop.f32.mrb[0].mxu0
  %v1319 = vpop.f32.mrb[0].mxu0
  %v1320 = vadd.f32 %v1228, %v1319
  %v1321 = vpop.f32.mrb[0].mxu0
  %1322 = vmatprep.mubr.bf16.mxu0 0
  %1323 = vmatmul.mubr.bf16.gmra.mrb[0].mxu0 %v457
  %v1324 = vpop.f32.mrb[0].mxu0
  %v1325 = vadd.f32 %v1228, %v1324
  %v1326 = vpop.f32.mrb[0].mxu0
  %v1327 = vpop.f32.mrb[0].mxu0
  %v1328 = vadd.f32 %v1228, %v1327
  %v1329 = vpop.f32.mrb[0].mxu0
  %1330 = vmatprep.mubr.bf16.mxu0 0
  %1331 = vmatmul.mubr.bf16.gmra.mrb[0].mxu0 %v460
  %v1332 = vpop.f32.mrb[0].mxu0
  %v1333 = vadd.f32 %v1228, %v1332
  %v1334 = vpop.f32.mrb[0].mxu0
  %v1335 = vpop.f32.mrb[0].mxu0
  %v1336 = vadd.f32 %v1228, %v1335
  %v1337 = vpop.f32.mrb[0].mxu0
  %1338 = vmatprep.mubr.bf16.mxu0 0
  %1339 = vmatmul.mubr.bf16.gmra.mrb[0].mxu0 %v463
  %v1340 = vpop.f32.mrb[0].mxu0
  %v1341 = vadd.f32 %v1228, %v1340
  %v1342 = vpop.f32.mrb[0].mxu0
  %v1343 = vpop.f32.mrb[0].mxu0
  %v1344 = vadd.f32 %v1228, %v1343
  %v1345 = vpop.f32.mrb[0].mxu0
  %1346 = vmatprep.mubr.bf16.mxu0 0
  %1347 = vmatmul.mubr.bf16.gmra.mrb[0].mxu0 %v466
  %v1348 = vpop.f32.mrb[0].mxu0
  %v1349 = vadd.f32 %v1228, %v1348
  %v1350 = vpop.f32.mrb[0].mxu0
  %v1351 = vpop.f32.mrb[0].mxu0
  %v1352 = vadd.f32 %v1228, %v1351
  %v1353 = vpop.f32.mrb[0].mxu0
  %1354 = vdwg.mxu0
  %v1355 = vmax.f32 %v1277, 0.0
  %v1356 = vmax.f32 %v1280, 0.0
  %v1357 = vmax.f32 %v1285, 0.0
  %v1358 = vmax.f32 %v1288, 0.0
  %v1359 = vmax.f32 %v1293, 0.0
  %v1360 = vmax.f32 %v1296, 0.0
  %v1361 = vmax.f32 %v1301, 0.0
  %v1362 = vmax.f32 %v1304, 0.0
  %v1363 = vmax.f32 %v1309, 0.0
  %v1364 = vmax.f32 %v1312, 0.0
  %v1365 = vmax.f32 %v1317, 0.0
  %v1366 = vmax.f32 %v1320, 0.0
  %v1367 = vmax.f32 %v1325, 0.0
  %v1368 = vmax.f32 %v1328, 0.0
  %v1369 = vmax.f32 %v1333, 0.0
  %v1370 = vmax.f32 %v1336, 0.0
  %v1371 = vmax.f32 %v1341, 0.0
  %v1372 = vmax.f32 %v1344, 0.0
  %v1373 = vmax.f32 %v1349, 0.0
  %v1374 = vmax.f32 %v1352, 0.0
  %v1375 = vpack.c.bf16 %v1356, %v1355
  %v1376 = vpack.c.bf16 %v1358, %v1357
  %v1377 = vpack.c.bf16 %v1360, %v1359
  %v1378 = vpack.c.bf16 %v1362, %v1361
  %v1379 = vpack.c.bf16 %v1364, %v1363
  %v1380 = vpack.c.bf16 %v1366, %v1365
  %v1381 = vpack.c.bf16 %v1368, %v1367
  %v1382 = vpack.c.bf16 %v1370, %v1369
  %v1383 = vpack.c.bf16 %v1372, %v1371
  %v1384 = vpack.c.bf16 %v1374, %v1373
  %v1385 = vld [vmem:[%s12] sm:$0xf]
  %v1386 = vld [vmem:[%s12 + $0x4] sm:$0xf]
  %v1387 = vld [vmem:[%s12 + $0x8] sm:$0xf]
  %v1388 = vld [vmem:[%s12 + $0xc] sm:$0xf]
  %v1389 = vld [vmem:[%s12 + $0x10] sm:$0xf]
  %v1390 = vld [vmem:[%s12 + $0x14] sm:$0xf]
  %v1391 = vld [vmem:[%s12 + $0x18] sm:$0xf]
  %v1392 = vld [vmem:[%s12 + $0x1c] sm:$0xf]
  %v1393 = vld [vmem:[%s13] sm:$0xf]
  %v1394 = vld [vmem:[%s13 + $0x4] sm:$0xf]
  %v1395 = vld [vmem:[%s13 + $0x8] sm:$0xf]
  %v1396 = vld [vmem:[%s13 + $0xc] sm:$0xf]
  %v1397 = vld [vmem:[%s13 + $0x10] sm:$0xf]
  %v1398 = vld [vmem:[%s13 + $0x14] sm:$0xf]
  %v1399 = vld [vmem:[%s13 + $0x18] sm:$0xf]
  %v1400 = vld [vmem:[%s13 + $0x1c] sm:$0xf]
  %v1409 = vunpack.c.l.b16 %v1393
  %v1410 = vunpack.c.l.b16 %v1394
  %v1411 = vunpack.c.l.b16 %v1395
  %v1412 = vunpack.c.l.b16 %v1396
  %v1413 = vunpack.c.l.b16 %v1397
  %v1414 = vunpack.c.l.b16 %v1398
  %v1415 = vunpack.c.l.b16 %v1399
  %v1416 = vunpack.c.l.b16 %v1400
  %v1417 = vpack.c.b16 %v1410, %v1409
  %v1418 = vpack.c.b16 %v1412, %v1411
  %v1419 = vpack.c.b16 %v1414, %v1413
  %v1420 = vpack.c.b16 %v1416, %v1415
  %vm1425 = vcmask 523264
  %v1427 = vsel %vm1425, %v1375, 0
  %v1430 = vsel %vm1425, %v1376, 0
  %v1433 = vsel %vm1425, %v1377, 0
  %v1436 = vsel %vm1425, %v1378, 0
  %v1439 = vsel %vm1425, %v1379, 0
  %v1442 = vsel %vm1425, %v1380, 0
  %v1445 = vsel %vm1425, %v1381, 0
  %v1448 = vsel %vm1425, %v1382, 0
  %v1451 = vsel %vm1425, %v1383, 0
  %v1454 = vsel %vm1425, %v1384, 0
  %1456 = vmatprep.subr.bf16.mxu0 0
  %1457 = vmatpush1.bf16.msra.mxu0 %v1417
  %1458 = vmatprep.subr.bf16.mxu0 0
  %1459 = vmatpush1.bf16.msra.mxu0 %v1418
  %1460 = vmatprep.subr.bf16.mxu0 0
  %1461 = vmatpush1.bf16.msra.mxu0 %v1419
  %1462 = vmatprep.subr.bf16.mxu0 0
  %1463 = vmatpush1.bf16.msra.mxu0 %v1420
  %1464 = vmatprep.subr.bf16.mxu0 0
  %1465 = vmatpush1.bf16.msra.mxu0 0
  %1466 = vmatprep.subr.bf16.mxu0 0
  %1467 = vmatpush1.bf16.msra.mxu0 0
  %1468 = vmatprep.subr.bf16.mxu0 0
  %1469 = vmatpush1.bf16.msra.mxu0 0
  %1470 = vmatprep.subr.bf16.mxu0 0
  %1471 = vmatpush1.bf16.msra.mxu0 0
  %1472 = vmatprep.subr.bf16.mxu0 0
  %1473 = vmatpush1.bf16.msra.mxu0 0
  %1474 = vmatprep.subr.bf16.mxu0 0
  %1475 = vmatpush1.bf16.msra.mxu0 0
  %1476 = vmatprep.subr.bf16.mxu0 0
  %1477 = vmatpush1.bf16.msra.mxu0 0
  %1478 = vmatprep.subr.bf16.mxu0 0
  %1479 = vmatpush1.bf16.msra.mxu0 0
  %1480 = vmatprep.subr.bf16.mxu0 0
  %1481 = vmatpush1.bf16.msra.mxu0 0
  %1482 = vmatprep.subr.bf16.mxu0 0
  %1483 = vmatpush1.bf16.msra.mxu0 0
  %1484 = vmatprep.subr.bf16.mxu0 0
  %1485 = vmatpush1.bf16.msra.mxu0 0
  %1486 = vmatprep.subr.bf16.mxu0 0
  %1487 = vmatpush1.bf16.msra.mxu0 0
  %1488 = vmatprep.mubr.bf16.mxu0 0
  %1489 = vmatmul.mubr.bf16.gmra.mrb[0].mxu0 %v1427
  %v1490 = vpop.f32.mrb[0].mxu0
  %v1491 = vadd.f32 0.0, %v1490
  %v1492 = vpop.f32.mrb[0].mxu0
  %v1493 = vpop.f32.mrb[0].mxu0
  %v1494 = vadd.f32 0.0, %v1493
  %v1495 = vpop.f32.mrb[0].mxu0
  %1496 = vmatprep.mubr.bf16.mxu0 0
  %1497 = vmatmul.mubr.bf16.gmra.mrb[0].mxu0 %v1430
  %v1498 = vpop.f32.mrb[0].mxu0
  %v1499 = vadd.f32 0.0, %v1498
  %v1500 = vpop.f32.mrb[0].mxu0
  %v1501 = vpop.f32.mrb[0].mxu0
  %v1502 = vadd.f32 0.0, %v1501
  %v1503 = vpop.f32.mrb[0].mxu0
  %1504 = vmatprep.mubr.bf16.mxu0 0
  %1505 = vmatmul.mubr.bf16.gmra.mrb[0].mxu0 %v1433
  %v1506 = vpop.f32.mrb[0].mxu0
  %v1507 = vadd.f32 0.0, %v1506
  %v1508 = vpop.f32.mrb[0].mxu0
  %v1509 = vpop.f32.mrb[0].mxu0
  %v1510 = vadd.f32 0.0, %v1509
  %v1511 = vpop.f32.mrb[0].mxu0
  %1512 = vmatprep.mubr.bf16.mxu0 0
  %1513 = vmatmul.mubr.bf16.gmra.mrb[0].mxu0 %v1436
  %v1514 = vpop.f32.mrb[0].mxu0
  %v1515 = vadd.f32 0.0, %v1514
  %v1516 = vpop.f32.mrb[0].mxu0
  %v1517 = vpop.f32.mrb[0].mxu0
  %v1518 = vadd.f32 0.0, %v1517
  %v1519 = vpop.f32.mrb[0].mxu0
  %1520 = vmatprep.mubr.bf16.mxu0 0
  %1521 = vmatmul.mubr.bf16.gmra.mrb[0].mxu0 %v1439
  %v1522 = vpop.f32.mrb[0].mxu0
  %v1523 = vadd.f32 0.0, %v1522
  %v1524 = vpop.f32.mrb[0].mxu0
  %v1525 = vpop.f32.mrb[0].mxu0
  %v1526 = vadd.f32 0.0, %v1525
  %v1527 = vpop.f32.mrb[0].mxu0
  %1528 = vmatprep.mubr.bf16.mxu0 0
  %1529 = vmatmul.mubr.bf16.gmra.mrb[0].mxu0 %v1442
  %v1530 = vpop.f32.mrb[0].mxu0
  %v1531 = vadd.f32 0.0, %v1530
  %v1532 = vpop.f32.mrb[0].mxu0
  %v1533 = vpop.f32.mrb[0].mxu0
  %v1534 = vadd.f32 0.0, %v1533
  %v1535 = vpop.f32.mrb[0].mxu0
  %1536 = vmatprep.mubr.bf16.mxu0 0
  %1537 = vmatmul.mubr.bf16.gmra.mrb[0].mxu0 %v1445
  %v1538 = vpop.f32.mrb[0].mxu0
  %v1539 = vadd.f32 0.0, %v1538
  %v1540 = vpop.f32.mrb[0].mxu0
  %v1541 = vpop.f32.mrb[0].mxu0
  %v1542 = vadd.f32 0.0, %v1541
  %v1543 = vpop.f32.mrb[0].mxu0
  %1544 = vmatprep.mubr.bf16.mxu0 0
  %1545 = vmatmul.mubr.bf16.gmra.mrb[0].mxu0 %v1448
  %v1546 = vpop.f32.mrb[0].mxu0
  %v1547 = vadd.f32 0.0, %v1546
  %v1548 = vpop.f32.mrb[0].mxu0
  %v1549 = vpop.f32.mrb[0].mxu0
  %v1550 = vadd.f32 0.0, %v1549
  %v1551 = vpop.f32.mrb[0].mxu0
  %1552 = vmatprep.mubr.bf16.mxu0 0
  %1553 = vmatmul.mubr.bf16.gmra.mrb[0].mxu0 %v1451
  %v1554 = vpop.f32.mrb[0].mxu0
  %v1555 = vadd.f32 0.0, %v1554
  %v1556 = vpop.f32.mrb[0].mxu0
  %v1557 = vpop.f32.mrb[0].mxu0
  %v1558 = vadd.f32 0.0, %v1557
  %v1559 = vpop.f32.mrb[0].mxu0
  %1560 = vmatprep.mubr.bf16.mxu0 0
  %1561 = vmatmul.mubr.bf16.gmra.mrb[0].mxu0 %v1454
  %v1562 = vpop.f32.mrb[0].mxu0
  %v1563 = vadd.f32 0.0, %v1562
  %v1564 = vpop.f32.mrb[0].mxu0
  %v1565 = vpop.f32.mrb[0].mxu0
  %v1566 = vadd.f32 0.0, %v1565
  %v1567 = vpop.f32.mrb[0].mxu0
  %1568 = vdwg.mxu0
  %v1577 = vunpack.c.l.b16 %v1385
  %v1578 = vunpack.c.l.b16 %v1386
  %v1579 = vunpack.c.l.b16 %v1387
  %v1580 = vunpack.c.l.b16 %v1388
  %v1581 = vunpack.c.l.b16 %v1389
  %v1582 = vunpack.c.l.b16 %v1390
  %v1583 = vunpack.c.l.b16 %v1391
  %v1584 = vunpack.c.l.b16 %v1392
  %v1585 = vpack.c.b16 %v1578, %v1577
  %v1586 = vpack.c.b16 %v1580, %v1579
  %v1587 = vpack.c.b16 %v1582, %v1581
  %v1588 = vpack.c.b16 %v1584, %v1583
  %v1594 = vsel %vm1425, %v1209, 0
  %v1597 = vsel %vm1425, %v1210, 0
  %v1600 = vsel %vm1425, %v1211, 0
  %v1603 = vsel %vm1425, %v1212, 0
  %v1606 = vsel %vm1425, %v1213, 0
  %v1609 = vsel %vm1425, %v1214, 0
  %v1612 = vsel %vm1425, %v1215, 0
  %v1615 = vsel %vm1425, %v1216, 0
  %v1618 = vsel %vm1425, %v1217, 0
  %v1621 = vsel %vm1425, %v1218, 0
  %1623 = vmatprep.subr.bf16.mxu0 0
  %1624 = vmatpush1.bf16.msra.mxu0 %v1585
  %1625 = vmatprep.subr.bf16.mxu0 0
  %1626 = vmatpush1.bf16.msra.mxu0 %v1586
  %1627 = vmatprep.subr.bf16.mxu0 0
  %1628 = vmatpush1.bf16.msra.mxu0 %v1587
  %1629 = vmatprep.subr.bf16.mxu0 0
  %1630 = vmatpush1.bf16.msra.mxu0 %v1588
  %1631 = vmatprep.subr.bf16.mxu0 0
  %1632 = vmatpush1.bf16.msra.mxu0 0
  %1633 = vmatprep.subr.bf16.mxu0 0
  %1634 = vmatpush1.bf16.msra.mxu0 0
  %1635 = vmatprep.subr.bf16.mxu0 0
  %1636 = vmatpush1.bf16.msra.mxu0 0
  %1637 = vmatprep.subr.bf16.mxu0 0
  %1638 = vmatpush1.bf16.msra.mxu0 0
  %1639 = vmatprep.subr.bf16.mxu0 0
  %1640 = vmatpush1.bf16.msra.mxu0 0
  %1641 = vmatprep.subr.bf16.mxu0 0
  %1642 = vmatpush1.bf16.msra.mxu0 0
  %1643 = vmatprep.subr.bf16.mxu0 0
  %1644 = vmatpush1.bf16.msra.mxu0 0
  %1645 = vmatprep.subr.bf16.mxu0 0
  %1646 = vmatpush1.bf16.msra.mxu0 0
  %1647 = vmatprep.subr.bf16.mxu0 0
  %1648 = vmatpush1.bf16.msra.mxu0 0
  %1649 = vmatprep.subr.bf16.mxu0 0
  %1650 = vmatpush1.bf16.msra.mxu0 0
  %1651 = vmatprep.subr.bf16.mxu0 0
  %1652 = vmatpush1.bf16.msra.mxu0 0
  %1653 = vmatprep.subr.bf16.mxu0 0
  %1654 = vmatpush1.bf16.msra.mxu0 0
  %1655 = vmatprep.mubr.bf16.mxu0 0
  %1656 = vmatmul.mubr.bf16.gmra.mrb[0].mxu0 %v1594
  %v1657 = vpop.f32.mrb[0].mxu0
  %v1658 = vadd.f32 %v1491, %v1657
  %v1659 = vpop.f32.mrb[0].mxu0
  %v1660 = vpop.f32.mrb[0].mxu0
  %v1661 = vadd.f32 %v1494, %v1660
  %v1662 = vpop.f32.mrb[0].mxu0
  %1663 = vmatprep.mubr.bf16.mxu0 0
  %1664 = vmatmul.mubr.bf16.gmra.mrb[0].mxu0 %v1597
  %v1665 = vpop.f32.mrb[0].mxu0
  %v1666 = vadd.f32 %v1499, %v1665
  %v1667 = vpop.f32.mrb[0].mxu0
  %v1668 = vpop.f32.mrb[0].mxu0
  %v1669 = vadd.f32 %v1502, %v1668
  %v1670 = vpop.f32.mrb[0].mxu0
  %1671 = vmatprep.mubr.bf16.mxu0 0
  %1672 = vmatmul.mubr.bf16.gmra.mrb[0].mxu0 %v1600
  %v1673 = vpop.f32.mrb[0].mxu0
  %v1674 = vadd.f32 %v1507, %v1673
  %v1675 = vpop.f32.mrb[0].mxu0
  %v1676 = vpop.f32.mrb[0].mxu0
  %v1677 = vadd.f32 %v1510, %v1676
  %v1678 = vpop.f32.mrb[0].mxu0
  %1679 = vmatprep.mubr.bf16.mxu0 0
  %1680 = vmatmul.mubr.bf16.gmra.mrb[0].mxu0 %v1603
  %v1681 = vpop.f32.mrb[0].mxu0
  %v1682 = vadd.f32 %v1515, %v1681
  %v1683 = vpop.f32.mrb[0].mxu0
  %v1684 = vpop.f32.mrb[0].mxu0
  %v1685 = vadd.f32 %v1518, %v1684
  %v1686 = vpop.f32.mrb[0].mxu0
  %1687 = vmatprep.mubr.bf16.mxu0 0
  %1688 = vmatmul.mubr.bf16.gmra.mrb[0].mxu0 %v1606
  %v1689 = vpop.f32.mrb[0].mxu0
  %v1690 = vadd.f32 %v1523, %v1689
  %v1691 = vpop.f32.mrb[0].mxu0
  %v1692 = vpop.f32.mrb[0].mxu0
  %v1693 = vadd.f32 %v1526, %v1692
  %v1694 = vpop.f32.mrb[0].mxu0
  %1695 = vmatprep.mubr.bf16.mxu0 0
  %1696 = vmatmul.mubr.bf16.gmra.mrb[0].mxu0 %v1609
  %v1697 = vpop.f32.mrb[0].mxu0
  %v1698 = vadd.f32 %v1531, %v1697
  %v1699 = vpop.f32.mrb[0].mxu0
  %v1700 = vpop.f32.mrb[0].mxu0
  %v1701 = vadd.f32 %v1534, %v1700
  %v1702 = vpop.f32.mrb[0].mxu0
  %1703 = vmatprep.mubr.bf16.mxu0 0
  %1704 = vmatmul.mubr.bf16.gmra.mrb[0].mxu0 %v1612
  %v1705 = vpop.f32.mrb[0].mxu0
  %v1706 = vadd.f32 %v1539, %v1705
  %v1707 = vpop.f32.mrb[0].mxu0
  %v1708 = vpop.f32.mrb[0].mxu0
  %v1709 = vadd.f32 %v1542, %v1708
  %v1710 = vpop.f32.mrb[0].mxu0
  %1711 = vmatprep.mubr.bf16.mxu0 0
  %1712 = vmatmul.mubr.bf16.gmra.mrb[0].mxu0 %v1615
  %v1713 = vpop.f32.mrb[0].mxu0
  %v1714 = vadd.f32 %v1547, %v1713
  %v1715 = vpop.f32.mrb[0].mxu0
  %v1716 = vpop.f32.mrb[0].mxu0
  %v1717 = vadd.f32 %v1550, %v1716
  %v1718 = vpop.f32.mrb[0].mxu0
  %1719 = vmatprep.mubr.bf16.mxu0 0
  %1720 = vmatmul.mubr.bf16.gmra.mrb[0].mxu0 %v1618
  %v1721 = vpop.f32.mrb[0].mxu0
  %v1722 = vadd.f32 %v1555, %v1721
  %v1723 = vpop.f32.mrb[0].mxu0
  %v1724 = vpop.f32.mrb[0].mxu0
  %v1725 = vadd.f32 %v1558, %v1724
  %v1726 = vpop.f32.mrb[0].mxu0
  %1727 = vmatprep.mubr.bf16.mxu0 0
  %1728 = vmatmul.mubr.bf16.gmra.mrb[0].mxu0 %v1621
  %v1729 = vpop.f32.mrb[0].mxu0
  %v1730 = vadd.f32 %v1563, %v1729
  %v1731 = vpop.f32.mrb[0].mxu0
  %v1732 = vpop.f32.mrb[0].mxu0
  %v1733 = vadd.f32 %v1566, %v1732
  %v1734 = vpop.f32.mrb[0].mxu0
  %1735 = vdwg.mxu0
  %v1736 = vld [vmem:[%s14] sm:$0x1]
  %v1738 = vlaneseq
  %v1739 = vshrl.u32 %v1738, 7
  %v1740 = vsub.s32 0, %v1739
  %v1741 = vrot.slane %v1736, %v1740
  %v1743 = vadd.f32 %v1658, %v1741
  %v1744 = vadd.f32 %v1661, %v1741
  %v1745 = vadd.f32 %v1666, %v1741
  %v1746 = vadd.f32 %v1669, %v1741
  %v1747 = vadd.f32 %v1674, %v1741
  %v1748 = vadd.f32 %v1677, %v1741
  %v1749 = vadd.f32 %v1682, %v1741
  %v1750 = vadd.f32 %v1685, %v1741
  %v1751 = vadd.f32 %v1690, %v1741
  %v1752 = vadd.f32 %v1693, %v1741
  %v1753 = vadd.f32 %v1698, %v1741
  %v1754 = vadd.f32 %v1701, %v1741
  %v1755 = vadd.f32 %v1706, %v1741
  %v1756 = vadd.f32 %v1709, %v1741
  %v1757 = vadd.f32 %v1714, %v1741
  %v1758 = vadd.f32 %v1717, %v1741
  %v1759 = vadd.f32 %v1722, %v1741
  %v1760 = vadd.f32 %v1725, %v1741
  %v1761 = vadd.f32 %v1730, %v1741
  %v1762 = vadd.f32 %v1733, %v1741
  %v1763 = vlaneseq
  %v1764 = vand.u32 %v1763, 127
  %vm1765 = vcmp.ge.s32.totalorder %v1764, 5
  %vm1766 = vcmp.lt.s32.totalorder %v1764, 9
  %vm1767 = vmand %vm1765, %vm1766
  %vm1768 = vcmp.ge.s32.totalorder %v1764, 27
  %vm1769 = vcmp.lt.s32.totalorder %v1764, 31
  %vm1770 = vmand %vm1768, %vm1769
  %vm1771 = vmor %vm1767, %vm1770
  %v1772 = vmax.f32 %v1743, 0.0
  %v1773 = vmax.f32 %v1744, 0.0
  %v1774 = vmax.f32 %v1745, 0.0
  %v1775 = vmax.f32 %v1746, 0.0
  %v1776 = vmax.f32 %v1747, 0.0
  %v1777 = vmax.f32 %v1748, 0.0
  %v1778 = vmax.f32 %v1749, 0.0
  %v1779 = vmax.f32 %v1750, 0.0
  %v1780 = vmax.f32 %v1751, 0.0
  %v1781 = vmax.f32 %v1752, 0.0
  %v1782 = vmax.f32 %v1753, 0.0
  %v1783 = vmax.f32 %v1754, 0.0
  %v1784 = vmax.f32 %v1755, 0.0
  %v1785 = vmax.f32 %v1756, 0.0
  %v1786 = vmax.f32 %v1757, 0.0
  %v1787 = vmax.f32 %v1758, 0.0
  %v1788 = vmax.f32 %v1759, 0.0
  %v1789 = vmax.f32 %v1760, 0.0
  %v1790 = vmax.f32 %v1761, 0.0
  %v1791 = vmax.f32 %v1762, 0.0
  %v1792 = vsel %vm1771, 1, 0
  %vm1793 = vcmp.eq.s32.totalorder %v1792, 1
  %v1794 = vsel %vm1793, %v1772, %v1743
  %v1795 = vsel %vm1793, %v1773, %v1744
  %v1796 = vsel %vm1793, %v1774, %v1745
  %v1797 = vsel %vm1793, %v1775, %v1746
  %v1798 = vsel %vm1793, %v1776, %v1747
  %v1799 = vsel %vm1793, %v1777, %v1748
  %v1800 = vsel %vm1793, %v1778, %v1749
  %v1801 = vsel %vm1793, %v1779, %v1750
  %v1802 = vsel %vm1793, %v1780, %v1751
  %v1803 = vsel %vm1793, %v1781, %v1752
  %v1804 = vsel %vm1793, %v1782, %v1753
  %v1805 = vsel %vm1793, %v1783, %v1754
  %v1806 = vsel %vm1793, %v1784, %v1755
  %v1807 = vsel %vm1793, %v1785, %v1756
  %v1808 = vsel %vm1793, %v1786, %v1757
  %v1809 = vsel %vm1793, %v1787, %v1758
  %v1810 = vsel %vm1793, %v1788, %v1759
  %v1811 = vsel %vm1793, %v1789, %v1760
  %v1812 = vsel %vm1793, %v1790, %v1761
  %v1813 = vsel %vm1793, %v1791, %v1762
  %vm1814 = vcmp.ge.s32.totalorder %v1764, 16
  %vm1815 = vcmp.lt.s32.totalorder %v1764, 17
  %vm1816 = vmand %vm1814, %vm1815
  %vm1817 = vcmp.ge.s32.totalorder %v1764, 21
  %vm1818 = vcmp.lt.s32.totalorder %v1764, 22
  %vm1819 = vmand %vm1817, %vm1818
  %vm1820 = vmor %vm1816, %vm1819
  %vm1821 = vcmp.ge.s32.totalorder %v1764, 38
  %vm1822 = vcmp.lt.s32.totalorder %v1764, 39
  %vm1823 = vmand %vm1821, %vm1822
  %vm1824 = vmor %vm1820, %vm1823
  %vm1825 = vcmp.ge.s32.totalorder %v1764, 43
  %vm1826 = vcmp.lt.s32.totalorder %v1764, 44
  %vm1827 = vmand %vm1825, %vm1826
  %vm1828 = vmor %vm1824, %vm1827
  %v1829 = vmul.f32 %v1794, 1.442695
  %v1830 = vpow.pop %v1829
  %v1831 = vmul.f32 %v1795, 1.442695
  %v1832 = vpow.pop %v1831
  %v1833 = vmul.f32 %v1796, 1.442695
  %v1834 = vpow.pop %v1833
  %v1835 = vmul.f32 %v1797, 1.442695
  %v1836 = vpow.pop %v1835
  %v1837 = vmul.f32 %v1798, 1.442695
  %v1838 = vpow.pop %v1837
  %v1839 = vmul.f32 %v1799, 1.442695
  %v1840 = vpow.pop %v1839
  %v1841 = vmul.f32 %v1800, 1.442695
  %v1842 = vpow.pop %v1841
  %v1843 = vmul.f32 %v1801, 1.442695
  %v1844 = vpow.pop %v1843
  %v1845 = vmul.f32 %v1802, 1.442695
  %v1846 = vpow.pop %v1845
  %v1847 = vmul.f32 %v1803, 1.442695
  %v1848 = vpow.pop %v1847
  %v1849 = vmul.f32 %v1804, 1.442695
  %v1850 = vpow.pop %v1849
  %v1851 = vmul.f32 %v1805, 1.442695
  %v1852 = vpow.pop %v1851
  %v1853 = vmul.f32 %v1806, 1.442695
  %v1854 = vpow.pop %v1853
  %v1855 = vmul.f32 %v1807, 1.442695
  %v1856 = vpow.pop %v1855
  %v1857 = vmul.f32 %v1808, 1.442695
  %v1858 = vpow.pop %v1857
  %v1859 = vmul.f32 %v1809, 1.442695
  %v1860 = vpow.pop %v1859
  %v1861 = vmul.f32 %v1810, 1.442695
  %v1862 = vpow.pop %v1861
  %v1863 = vmul.f32 %v1811, 1.442695
  %v1864 = vpow.pop %v1863
  %v1865 = vmul.f32 %v1812, 1.442695
  %v1866 = vpow.pop %v1865
  %v1867 = vmul.f32 %v1813, 1.442695
  %v1868 = vpow.pop %v1867
  %v1869 = vsel %vm1828, 1, 0
  %vm1870 = vcmp.eq.s32.totalorder %v1869, 1
  %v1871 = vsel %vm1870, %v1830, %v1794
  %v1872 = vsel %vm1870, %v1832, %v1795
  %v1873 = vsel %vm1870, %v1834, %v1796
  %v1874 = vsel %vm1870, %v1836, %v1797
  %v1875 = vsel %vm1870, %v1838, %v1798
  %v1876 = vsel %vm1870, %v1840, %v1799
  %v1877 = vsel %vm1870, %v1842, %v1800
  %v1878 = vsel %vm1870, %v1844, %v1801
  %v1879 = vsel %vm1870, %v1846, %v1802
  %v1880 = vsel %vm1870, %v1848, %v1803
  %v1881 = vsel %vm1870, %v1850, %v1804
  %v1882 = vsel %vm1870, %v1852, %v1805
  %v1883 = vsel %vm1870, %v1854, %v1806
  %v1884 = vsel %vm1870, %v1856, %v1807
  %v1885 = vsel %vm1870, %v1858, %v1808
  %v1886 = vsel %vm1870, %v1860, %v1809
  %v1887 = vsel %vm1870, %v1862, %v1810
  %v1888 = vsel %vm1870, %v1864, %v1811
  %v1889 = vsel %vm1870, %v1866, %v1812
  %v1890 = vsel %vm1870, %v1868, %v1813
  %v1891 = vpack.c.bf16 %v1872, %v1871
  %v1892 = vpack.c.bf16 %v1874, %v1873
  %v1893 = vpack.c.bf16 %v1876, %v1875
  %v1894 = vpack.c.bf16 %v1878, %v1877
  %v1895 = vpack.c.bf16 %v1880, %v1879
  %v1896 = vpack.c.bf16 %v1882, %v1881
  %v1897 = vpack.c.bf16 %v1884, %v1883
  %v1898 = vpack.c.bf16 %v1886, %v1885
  %v1899 = vpack.c.bf16 %v1888, %v1887
  %v1900 = vpack.c.bf16 %v1890, %v1889
  %v1911 = vunpack.c.l.b16 %v1891
  %v1912 = vunpack.c.h.b16 %v1891
  %v1913 = vunpack.c.l.b16 %v1892
  %v1914 = vunpack.c.h.b16 %v1892
  %v1915 = vunpack.c.l.b16 %v1893
  %v1916 = vunpack.c.h.b16 %v1893
  %v1917 = vunpack.c.l.b16 %v1894
  %v1918 = vunpack.c.h.b16 %v1894
  %v1919 = vunpack.c.l.b16 %v1895
  %v1920 = vunpack.c.h.b16 %v1895
  %v1921 = vunpack.c.l.b16 %v1896
  %v1922 = vunpack.c.h.b16 %v1896
  %v1923 = vunpack.c.l.b16 %v1897
  %v1924 = vunpack.c.h.b16 %v1897
  %v1925 = vunpack.c.l.b16 %v1898
  %v1926 = vunpack.c.h.b16 %v1898
  %v1927 = vunpack.c.l.b16 %v1899
  %v1928 = vunpack.c.h.b16 %v1899
  %v1929 = vunpack.c.l.b16 %v1900
  %v1930 = vunpack.c.h.b16 %v1900
  %v1931 = vpack.c.b16 %v1911, %v1911
  %v1932 = vpack.c.b16 %v1912, %v1912
  %v1933 = vpack.c.b16 %v1913, %v1913
  %v1934 = vpack.c.b16 %v1914, %v1914
  %v1935 = vpack.c.b16 %v1915, %v1915
  %v1936 = vpack.c.b16 %v1916, %v1916
  %v1937 = vpack.c.b16 %v1917, %v1917
  %v1938 = vpack.c.b16 %v1918, %v1918
  %v1939 = vpack.c.b16 %v1919, %v1919
  %v1940 = vpack.c.b16 %v1920, %v1920
  %v1941 = vpack.c.b16 %v1921, %v1921
  %v1942 = vpack.c.b16 %v1922, %v1922
  %v1943 = vpack.c.b16 %v1923, %v1923
  %v1944 = vpack.c.b16 %v1924, %v1924
  %v1945 = vpack.c.b16 %v1925, %v1925
  %v1946 = vpack.c.b16 %v1926, %v1926
  %v1947 = vpack.c.b16 %v1927, %v1927
  %v1948 = vpack.c.b16 %v1928, %v1928
  %v1949 = vpack.c.b16 %v1929, %v1929
  %v1950 = vpack.c.b16 %v1930, %v1930
  %1971 = vst [vmem:[%s15] sm:$0xf] %v1931
  %1972 = vst [vmem:[%s15 + $0x4] sm:$0xf] %v1932
  %1973 = vst [vmem:[%s15 + $0x8] sm:$0xf] %v1933
  %1974 = vst [vmem:[%s15 + $0xc] sm:$0xf] %v1934
  %1975 = vst [vmem:[%s15 + $0x10] sm:$0xf] %v1935
  %1976 = vst [vmem:[%s15 + $0x14] sm:$0xf] %v1936
  %1977 = vst [vmem:[%s15 + $0x18] sm:$0xf] %v1937
  %1978 = vst [vmem:[%s15 + $0x1c] sm:$0xf] %v1938
  %1979 = vst [vmem:[%s15 + $0x20] sm:$0xf] %v1939
  %1980 = vst [vmem:[%s15 + $0x24] sm:$0xf] %v1940
  %1981 = vst [vmem:[%s15 + $0x28] sm:$0xf] %v1941
  %1982 = vst [vmem:[%s15 + $0x2c] sm:$0xf] %v1942
  %1983 = vst [vmem:[%s15 + $0x30] sm:$0xf] %v1943
  %1984 = vst [vmem:[%s15 + $0x34] sm:$0xf] %v1944
  %1985 = vst [vmem:[%s15 + $0x38] sm:$0xf] %v1945
  %1986 = vst [vmem:[%s15 + $0x3c] sm:$0xf] %v1946
  %1987 = vst [vmem:[%s15 + $0x40] sm:$0xf] %v1947
  %1988 = vst [vmem:[%s15 + $0x44] sm:$0xf] %v1948
  %1989 = vst [vmem:[%s15 + $0x48] sm:$0xf] %v1949
  %1990 = vst [vmem:[%s15 + $0x4c] sm:$0xf] %v1950
  // Predicated region
  $region62: #{forward.7} parent=0 // pred_check
    _
  $region63: #{forward.7} parent=0 // pred_check_branch
    %1992 = sbr.rel (0) target = $region65
  $region64: #{forward.7} parent=0 // pred_region
    _
  $region65: #{forward.7} parent=0 // pred_fallthru
    _
  // Predicated region
  $region66: #{forward.7} parent=0 // pred_check
    _
  $region67: #{forward.7} parent=0 // pred_check_branch
    %1994 = sbr.rel (0) target = $region69
  $region68: #{forward.7} parent=0 // pred_region
    _
  $region69: #{forward.7} parent=0 // pred_fallthru
    _

</llo_original>
